<compile_context>
chip_gen: v7x
topology: tpu7x:2x2x1
jax: 0.10.0
libtpu: 0.0.40
codegen_flags: <defaults>
</compile_context>

<pallas_src>
import functools

import jax
import jax.numpy as jnp
from jax import lax
from jax.experimental import pallas as pl
from jax.experimental.pallas import tpu as pltpu

# bf16 inputs for the conv matmul (fast MXU path on v6e/v7x) and bf16 storage for the
# conv intermediate (halves the only remaining large HBM stream).  The upsample path
# stays f32 (compute-trivial, keeps accuracy, friendly to v5e).  f32 accumulation.
MM_DTYPE = jnp.bfloat16      # conv matmul input dtype
CONV_DTYPE = jnp.bfloat16    # HBM dtype of the conv intermediate


# ----------------------------------------------------------------------------
# Bilinear (align_corners=True) interpolation matrices
# ----------------------------------------------------------------------------
def _up_matrix(n_in, n_out):
    """M (n_out, n_in) so that  up = M @ x  along one axis (align_corners=True)."""
    idx = jnp.arange(n_out)
    src = idx.astype(jnp.float32) * (n_in - 1) / (n_out - 1)
    i0 = jnp.clip(jnp.floor(src).astype(jnp.int32), 0, n_in - 2)
    frac = src - i0.astype(jnp.float32)
    m = jnp.zeros((n_out, n_in), jnp.float32)
    m = m.at[idx, i0].add(1.0 - frac)
    m = m.at[idx, i0 + 1].add(frac)
    return m


def _up_matrix_padded(n_in, n_out):
    # Extra zero row top/bottom: the upsample matmuls then directly emit the
    # 1-pixel zero halo the 3x3 'SAME' conv needs (no separate pad pass).
    return jnp.pad(_up_matrix(n_in, n_out), ((1, 1), (0, 0)))


# ----------------------------------------------------------------------------
# Output-row tile selection (lane-dense, VMEM-bounded -- v7x has only 64 MiB VMEM)
# ----------------------------------------------------------------------------
def _pick_row_tile(Ho, Wo, Cin, Cout, *, max_pixels=4096, vmem_budget=8 << 20):
    """Largest TR dividing Ho whose per-step working set fits the budget,
    preferring lane-dense (TR*Wo % 128 == 0) conv tiles (unmasked vst)."""
    mm_b = jnp.dtype(MM_DTYPE).itemsize
    cv_b = jnp.dtype(CONV_DTYPE).itemsize

    def fits(tr):
        px = tr * Wo
        if px > max_pixels:
            return False
        approx = (Cin * (tr + 2) * (Wo + 2) * 4      # f32 upsampled slab
                  + 9 * Cin * px * mm_b              # patch tile
                  + Cout * px * 4                    # f32 accumulator
                  + 2 * Cout * px * cv_b)            # double-buffered conv out block
        return approx <= vmem_budget

    divisors = [tr for tr in range(1, Ho + 1) if Ho % tr == 0]
    lane_dense = [tr for tr in divisors if (tr * Wo) % 128 == 0 and fits(tr)]
    if lane_dense:
        return max(lane_dense)
    any_fit = [tr for tr in divisors if fits(tr)]
    return max(any_fit) if any_fit else 1


# ----------------------------------------------------------------------------
# Kernel 1 (fused): upsample + halo + im2col + 3x3 conv (+bias) + BN partial stats
# ----------------------------------------------------------------------------
def _up_conv_stats_kernel(uhp_ref, uwpt_ref, x_ref, w_ref, b_ref,
                          conv_ref, stats_ref, *, cin, h, w_in, tr, wo, mm_dtype):
    r = pl.program_id(1)
    wp = wo + 2

    # ---- bilinear 2x upsample (f32) of the haloed row slab ------------------
    x = x_ref[0]                                                 # (Cin, H, W) f32
    xf = x.reshape(cin * h, w_in)                                # (Cin*H, W)
    # width direction: one flat matmul for all channels/rows (halo cols included)
    t = jnp.dot(xf, uwpt_ref[...],
                preferred_element_type=jnp.float32)              # (Cin*H, Wp)
    # NOTE: clean split because H is a multiple of 8 (f32 sublanes); odd H would
    # only add a relayout copy, not change results.
    t3 = t.reshape(cin, h, wp)                                   # (Cin, H, Wp)

    # height direction: rows [r*TR, r*TR + TR + 2) of the padded row matrix.
    start = r * tr
    if tr % 8 == 0:
        start = pl.multiple_of(start, 8)
    uh = uhp_ref[pl.ds(start, tr + 2), :]                        # (TR+2, H)
    # TODO(synk): replace the broadcast + batched einsum with a single flat
    # (TR+2, H) @ (H, Cin*Wp) matmul when Wp is lane-aligned; the batched form is
    # kept because its lowering is known-good for arbitrary (non-128) widths.
    uh_b = jnp.broadcast_to(uh, (cin, tr + 2, h))                # (Cin, TR+2, H)
    up = jnp.einsum('cph,chw->cpw', uh_b, t3,
                    preferred_element_type=jnp.float32)          # (Cin, TR+2, Wp)

    # ---- in-VMEM im2col + 3x3 conv as one MXU matmul -------------------------
    up_mm = up.astype(mm_dtype)
    patches = jnp.concatenate(
        [up_mm[:, dy:dy + tr, dx:dx + wo] for dy in range(3) for dx in range(3)],
        axis=0)                                                  # (9*Cin, TR, Wo)
    patches = patches.reshape(9 * cin, tr * wo)                  # (9*Cin, TR*Wo)
    acc = jnp.dot(w_ref[...], patches,
                  preferred_element_type=jnp.float32)            # (Cout, TR*Wo) f32
    acc = acc + b_ref[...]                                       # conv bias

    conv_ref[0] = acc.astype(conv_ref.dtype)
    # per-tile BatchNorm partials (f32, from the un-rounded accumulator), packed
    # into a single small output to avoid two separate partial-store streams.
    s1 = jnp.sum(acc, axis=1, keepdims=True)                     # (Cout, 1)
    s2 = jnp.sum(acc * acc, axis=1, keepdims=True)               # (Cout, 1)
    stats_ref[0, 0, :, :] = jnp.concatenate([s1, s2], axis=1)    # (Cout, 2)


# ----------------------------------------------------------------------------
# Kernel 2: BatchNorm affine (precomputed scale/shift) + ReLU, lane-dense tiles
# ----------------------------------------------------------------------------
def _bn_relu_kernel(conv_ref, scale_ref, shift_ref, o_ref):
    x = conv_ref[0].astype(jnp.float32)
    o_ref[0] = jnp.maximum(x * scale_ref[...] + shift_ref[...], 0.0)


# ----------------------------------------------------------------------------
# Full module forward
# ----------------------------------------------------------------------------
def upsamping_forward(x_nchw, w_oihw, bias, gamma, beta, *, eps=1e-5):
    N, Cin, H, W = x_nchw.shape
    Cout = w_oihw.shape[0]
    Ho, Wo = 2 * H, 2 * W
    Hp, Wp = Ho + 2, Wo + 2
    HW = Ho * Wo
    M = N * HW

    TR = _pick_row_tile(Ho, Wo, Cin, Cout)
    nrt = Ho // TR                                       # row tiles per image

    uhp = _up_matrix_padded(H, Ho)                       # (Hp, H) f32
    uwpt = _up_matrix_padded(W, Wo).T                    # (W, Wp) f32
    # conv weight -> (Cout, K) with K ordered (dy, dx, c): matches the patch concat
    wmat = jnp.transpose(w_oihw, (0, 2, 3, 1)).reshape(Cout, 9 * Cin).astype(MM_DTYPE)
    b2 = bias.astype(jnp.float32).reshape(Cout, 1)

    kern = functools.partial(_up_conv_stats_kernel,
                             cin=Cin, h=H, w_in=W, tr=TR, wo=Wo, mm_dtype=MM_DTYPE)
    conv, stats = pl.pallas_call(
        kern,
        out_shape=(
            jax.ShapeDtypeStruct((N, Cout, HW), CONV_DTYPE),
            jax.ShapeDtypeStruct((N, nrt, Cout, 2), jnp.float32),
        ),
        grid=(N, nrt),
        in_specs=[
            pl.BlockSpec((Hp, H), lambda n, r: (0, 0)),
            pl.BlockSpec((W, Wp), lambda n, r: (0, 0)),
            # full image per step; block index is constant across the row tiles of
            # one image, so Pallas does not re-DMA it per tile.
            # TODO(synk): band the x block over input rows for very large Cin*H*W so
            #             the per-step VMEM stays bounded on v7x (64 MiB VMEM).
            pl.BlockSpec((1, Cin, H, W), lambda n, r: (n, 0, 0, 0)),
            pl.BlockSpec((Cout, 9 * Cin), lambda n, r: (0, 0)),
            pl.BlockSpec((Cout, 1), lambda n, r: (0, 0)),
        ],
        out_specs=(
            pl.BlockSpec((1, Cout, TR * Wo), lambda n, r: (n, 0, r)),
            pl.BlockSpec((1, 1, Cout, 2), lambda n, r: (n, r, 0, 0)),
        ),
        compiler_params=pltpu.CompilerParams(
            dimension_semantics=("parallel", "parallel"),
            vmem_limit_bytes=32 * 1024 * 1024),
    )(uhp, uwpt, x_nchw.astype(jnp.float32), wmat, b2)

    # BatchNorm batch statistics (training mode, biased variance) -- tiny, plain JAX.
    ssum = jnp.sum(stats[..., 0], axis=(0, 1))           # (Cout,)
    ssq = jnp.sum(stats[..., 1], axis=(0, 1))            # (Cout,)
    mean = ssum / M
    var = jnp.maximum(ssq / M - mean * mean, 0.0)
    scale = gamma.astype(jnp.float32) * lax.rsqrt(var + eps)
    shift = beta.astype(jnp.float32) - mean * scale

    # TODO(synk): input_output_aliases could reuse the conv buffer in place, but conv
    #             is stored bf16 while y is f32 (dtype mismatch), so it is skipped.
    y = pl.pallas_call(
        _bn_relu_kernel,
        out_shape=jax.ShapeDtypeStruct((N, Cout, HW), jnp.float32),
        grid=(N, nrt),
        in_specs=[
            pl.BlockSpec((1, Cout, TR * Wo), lambda n, r: (n, 0, r)),
            pl.BlockSpec((Cout, 1), lambda n, r: (0, 0)),
            pl.BlockSpec((Cout, 1), lambda n, r: (0, 0)),
        ],
        out_specs=pl.BlockSpec((1, Cout, TR * Wo), lambda n, r: (n, 0, r)),
        compiler_params=pltpu.CompilerParams(
            dimension_semantics=("parallel", "parallel"),
            vmem_limit_bytes=32 * 1024 * 1024),
    )(conv, scale.reshape(Cout, 1), shift.reshape(Cout, 1))

    return y.reshape(N, Cout, Ho, Wo)                    # free view -> NCHW


# ----------------------------------------------------------------------------
# Pure-JAX f32 reference (for correctness sanity check)
# ----------------------------------------------------------------------------
def _reference(x, w, bias, gamma, beta, eps=1e-5):
    N, C, H, W = x.shape
    Uh = _up_matrix(H, 2 * H)
    Uw = _up_matrix(W, 2 * W)
    up = jnp.einsum('oh,pw,nchw->ncop', Uh, Uw, x.astype(jnp.float32),
                    precision=lax.Precision.HIGHEST)
    conv = lax.conv_general_dilated(
        up, w.astype(jnp.float32), (1, 1), 'SAME',
        dimension_numbers=('NCHW', 'OIHW', 'NCHW'),
        precision=lax.Precision.HIGHEST) + bias[None, :, None, None]
    mean = conv.mean(axis=(0, 2, 3), keepdims=True)
    var = ((conv - mean) ** 2).mean(axis=(0, 2, 3), keepdims=True)
    y = (conv - mean) * lax.rsqrt(var + eps)
    y = y * gamma[None, :, None, None] + beta[None, :, None, None]
    return jnp.maximum(y, 0.0)


if __name__ == "__main__":
    # Small deterministic example: in_channels=4, out_channels=8
    N, Cin, H, W = 2, 4, 16, 16
    Cout = 8

    key = jax.random.PRNGKey(0)
    kx, kw, kb = jax.random.split(key, 3)
    x = jax.random.normal(kx, (N, Cin, H, W), dtype=jnp.float32)
    w = jax.random.normal(kw, (Cout, Cin, 3, 3), dtype=jnp.float32) * 0.1
    b = jax.random.normal(kb, (Cout,), dtype=jnp.float32) * 0.1
    gamma = jnp.ones((Cout,), jnp.float32)   # PyTorch BatchNorm default init
    beta = jnp.zeros((Cout,), jnp.float32)

    out = jax.jit(upsamping_forward)(x, w, b, gamma, beta)
    out = jax.block_until_ready(out)
    assert out.shape == (N, Cout, 2 * H, 2 * W), out.shape

    ref = _reference(x, w, b, gamma, beta)
    # Tolerance reflects bf16 conv-matmul inputs + bf16 conv storage; the upsample
    # path and all accumulations/statistics are f32.
    if not jnp.allclose(out, ref, atol=5e-2, rtol=5e-2):
        err = float(jnp.max(jnp.abs(out - ref)))
        raise AssertionError(
            f"Pallas kernel output mismatch vs JAX reference (max abs err {err})")

    print("KERNEL_OK")
</pallas_src>

<mosaic_0001>
module attributes {stable_mosaic.version = 11 : i64} {
  func.func private @main(%arg0: i32) attributes {dimension_semantics = [#tpu.dimension_semantics<core_parallel>], iteration_bounds = array<i64: 2>, tpu.core_type = #tpu.core_type<sc_scalar_subcore>, window_params = []} {
    return
  }
}

module attributes {stable_mosaic.version = 11 : i64} {
  func.func private @main(%arg0: i32) attributes {dimension_semantics = [#tpu.dimension_semantics<core_parallel>], iteration_bounds = array<i64: 2>, tpu.core_type = #tpu.core_type<sc_scalar_subcore>, window_params = []} {
    return
  }
}

module attributes {stable_mosaic.version = 11 : i64} {
  func.func @_bn_relu_kernel(%arg0: i32, %arg1: i32, %arg2: memref<1x8x1024xbf16, #tpu.memory_space<vmem>>, %arg3: memref<8x1xf32, #tpu.memory_space<vmem>>, %arg4: memref<8x1xf32, #tpu.memory_space<vmem>>, %arg5: memref<1x8x1024xf32, #tpu.memory_space<vmem>>) attributes {dimension_semantics = [#tpu.dimension_semantics<parallel>, #tpu.dimension_semantics<parallel>], iteration_bounds = array<i64: 2, 1>, scalar_prefetch = 0 : i64, scratch_operands = 0 : i64, tpu.core_type = #tpu.core_type<tc>, window_params = [{transform_indices = @transform_0, window_bounds = array<i64: 1, 8, 1024>}, {pipeline_mode = #tpu.pipeline_mode<synchronous>, transform_indices = @transform_1, window_bounds = array<i64: 8, 1>}, {pipeline_mode = #tpu.pipeline_mode<synchronous>, transform_indices = @transform_2, window_bounds = array<i64: 8, 1>}, {transform_indices = @transform_3, window_bounds = array<i64: 1, 8, 1024>}]} {
    %c0 = arith.constant 0 : index
    %c0_0 = arith.constant 0 : index
    %c0_1 = arith.constant 0 : index
    %0 = vector.load %arg2[%c0, %c0_0, %c0_1] : memref<1x8x1024xbf16, #tpu.memory_space<vmem>>, vector<1x8x1024xbf16>
    %1 = vector.shape_cast %0 : vector<1x8x1024xbf16> to vector<8x1024xbf16>
    %2 = arith.extf %1 : vector<8x1024xbf16> to vector<8x1024xf32>
    %c0_2 = arith.constant 0 : index
    %c0_3 = arith.constant 0 : index
    %3 = vector.load %arg3[%c0_2, %c0_3] : memref<8x1xf32, #tpu.memory_space<vmem>>, vector<8x1xf32>
    %4 = vector.broadcast %3 : vector<8x1xf32> to vector<8x1024xf32>
    %5 = arith.mulf %2, %4 : vector<8x1024xf32>
    %c0_4 = arith.constant 0 : index
    %c0_5 = arith.constant 0 : index
    %6 = vector.load %arg4[%c0_4, %c0_5] : memref<8x1xf32, #tpu.memory_space<vmem>>, vector<8x1xf32>
    %7 = vector.broadcast %6 : vector<8x1xf32> to vector<8x1024xf32>
    %8 = arith.addf %5, %7 : vector<8x1024xf32>
    %cst = arith.constant 0.000000e+00 : f32
    %9 = vector.broadcast %cst : f32 to vector<8x1024xf32>
    %10 = arith.maximumf %8, %9 : vector<8x1024xf32>
    %c0_6 = arith.constant 0 : index
    %c0_7 = arith.constant 0 : index
    %c0_8 = arith.constant 0 : index
    %11 = vector.load %arg5[%c0_6, %c0_7, %c0_8] : memref<1x8x1024xf32, #tpu.memory_space<vmem>>, vector<1x8x1024xf32>
    %12 = vector.shape_cast %11 : vector<1x8x1024xf32> to vector<8x1024xf32>
    %13 = vector.shape_cast %10 : vector<8x1024xf32> to vector<1x8x1024xf32>
    tpu.vector_store %arg5[%c0_6, %c0_7, %c0_8], %13 {strides = array<i32>} : memref<1x8x1024xf32, #tpu.memory_space<vmem>>, vector<1x8x1024xf32>,
    return
  }
  func.func @transform_0(%arg0: i32, %arg1: i32) -> (i32, i32, i32) {
    %c0_i32 = arith.constant 0 : i32
    %c0_i32_0 = arith.constant 0 : i32
    return %arg0, %c0_i32, %arg1 : i32, i32, i32
  }
  func.func @transform_1(%arg0: i32, %arg1: i32) -> (i32, i32) {
    %c0_i32 = arith.constant 0 : i32
    %c0_i32_0 = arith.constant 0 : i32
    %c0_i32_1 = arith.constant 0 : i32
    return %c0_i32, %c0_i32_0 : i32, i32
  }
  func.func @transform_2(%arg0: i32, %arg1: i32) -> (i32, i32) {
    %c0_i32 = arith.constant 0 : i32
    %c0_i32_0 = arith.constant 0 : i32
    %c0_i32_1 = arith.constant 0 : i32
    return %c0_i32, %c0_i32_0 : i32, i32
  }
  func.func @transform_3(%arg0: i32, %arg1: i32) -> (i32, i32, i32) {
    %c0_i32 = arith.constant 0 : i32
    %c0_i32_0 = arith.constant 0 : i32
    return %arg0, %c0_i32, %arg1 : i32, i32, i32
  }
}

module attributes {stable_mosaic.version = 11 : i64} {
  func.func @_up_conv_stats_kernel(%arg0: i32, %arg1: i32, %arg2: memref<34x16xf32, #tpu.memory_space<vmem>>, %arg3: memref<16x34xf32, #tpu.memory_space<vmem>>, %arg4: memref<1x4x16x16xf32, #tpu.memory_space<vmem>>, %arg5: memref<8x36xbf16, #tpu.memory_space<vmem>>, %arg6: memref<8x1xf32, #tpu.memory_space<vmem>>, %arg7: memref<1x8x1024xbf16, #tpu.memory_space<vmem>>, %arg8: memref<1x1x8x2xf32, #tpu.memory_space<vmem>>) attributes {dimension_semantics = [#tpu.dimension_semantics<parallel>, #tpu.dimension_semantics<parallel>], iteration_bounds = array<i64: 2, 1>, scalar_prefetch = 0 : i64, scratch_operands = 0 : i64, tpu.core_type = #tpu.core_type<tc>, window_params = [{pipeline_mode = #tpu.pipeline_mode<synchronous>, transform_indices = @transform_0, window_bounds = array<i64: 34, 16>}, {pipeline_mode = #tpu.pipeline_mode<synchronous>, transform_indices = @transform_1, window_bounds = array<i64: 16, 34>}, {transform_indices = @transform_2, window_bounds = array<i64: 1, 4, 16, 16>}, {pipeline_mode = #tpu.pipeline_mode<synchronous>, transform_indices = @transform_3, window_bounds = array<i64: 8, 36>}, {pipeline_mode = #tpu.pipeline_mode<synchronous>, transform_indices = @transform_4, window_bounds = array<i64: 8, 1>}, {transform_indices = @transform_5, window_bounds = array<i64: 1, 8, 1024>}, {transform_indices = @transform_6, window_bounds = array<i64: 1, 1, 8, 2>}]} {
    %c0 = arith.constant 0 : index
    %c0_0 = arith.constant 0 : index
    %c0_1 = arith.constant 0 : index
    %c0_2 = arith.constant 0 : index
    %0 = vector.load %arg4[%c0, %c0_0, %c0_1, %c0_2] : memref<1x4x16x16xf32, #tpu.memory_space<vmem>>, vector<1x4x16x16xf32>
    %1 = vector.shape_cast %0 : vector<1x4x16x16xf32> to vector<4x16x16xf32>
    %2 = vector.shape_cast %1 : vector<4x16x16xf32> to vector<64x16xf32>
    %c0_3 = arith.constant 0 : index
    %c0_4 = arith.constant 0 : index
    %3 = vector.load %arg3[%c0_3, %c0_4] : memref<16x34xf32, #tpu.memory_space<vmem>>, vector<16x34xf32>
    %cst = arith.constant dense<0.000000e+00> : vector<64x34xf32>
    %4 = tpu.matmul %2, %3, %cst {dimension_numbers = #tpu.dot_dimension_numbers<[1], [0], [0], [1], [0, 0, 1, 1], [], []>} : vector<64x16xf32>, vector<16x34xf32>, vector<64x34xf32> -> vector<64x34xf32>
    %5 = vector.shape_cast %4 : vector<64x34xf32> to vector<4x16x34xf32>
    %c32_i32 = arith.constant 32 : i32
    %6 = arith.muli %arg1, %c32_i32 : i32
    %7 = tpu.assume_multiple %6, 8 : i32
    %8 = arith.index_cast %7 : i32 to index
    %c0_5 = arith.constant 0 : index
    %9 = vector.load %arg2[%8, %c0_5] : memref<34x16xf32, #tpu.memory_space<vmem>>, vector<34x16xf32>
    %10 = vector.shape_cast %9 : vector<34x16xf32> to vector<1x34x16xf32>
    %11 = vector.broadcast %10 : vector<1x34x16xf32> to vector<4x34x16xf32>
    "tpu.trace_start"() <{level = 10 : i32, message = "cph,chw->cpw"}> : () -> ()
    %cst_6 = arith.constant dense<0.000000e+00> : vector<4x34x34xf32>
    %12 = tpu.matmul %11, %5, %cst_6 {dimension_numbers = #tpu.dot_dimension_numbers<[2], [1], [1], [2], [0, 0, 0, 1, 1, 2], [0], [0]>} : vector<4x34x16xf32>, vector<4x16x34xf32>, vector<4x34x34xf32> -> vector<4x34x34xf32>
    "tpu.trace_stop"() : () -> ()
    %13 = arith.truncf %12 : vector<4x34x34xf32> to vector<4x34x34xbf16>
    %14 = vector.extract_strided_slice %13 {offsets = [0, 0, 0], sizes = [4, 32, 32], strides = [1, 1, 1]} : vector<4x34x34xbf16> to vector<4x32x32xbf16>
    %15 = vector.extract_strided_slice %13 {offsets = [0, 0, 1], sizes = [4, 32, 32], strides = [1, 1, 1]} : vector<4x34x34xbf16> to vector<4x32x32xbf16>
    %16 = vector.extract_strided_slice %13 {offsets = [0, 0, 2], sizes = [4, 32, 32], strides = [1, 1, 1]} : vector<4x34x34xbf16> to vector<4x32x32xbf16>
    %17 = vector.extract_strided_slice %13 {offsets = [0, 1, 0], sizes = [4, 32, 32], strides = [1, 1, 1]} : vector<4x34x34xbf16> to vector<4x32x32xbf16>
    %18 = vector.extract_strided_slice %13 {offsets = [0, 1, 1], sizes = [4, 32, 32], strides = [1, 1, 1]} : vector<4x34x34xbf16> to vector<4x32x32xbf16>
    %19 = vector.extract_strided_slice %13 {offsets = [0, 1, 2], sizes = [4, 32, 32], strides = [1, 1, 1]} : vector<4x34x34xbf16> to vector<4x32x32xbf16>
    %20 = vector.extract_strided_slice %13 {offsets = [0, 2, 0], sizes = [4, 32, 32], strides = [1, 1, 1]} : vector<4x34x34xbf16> to vector<4x32x32xbf16>
    %21 = vector.extract_strided_slice %13 {offsets = [0, 2, 1], sizes = [4, 32, 32], strides = [1, 1, 1]} : vector<4x34x34xbf16> to vector<4x32x32xbf16>
    %22 = vector.extract_strided_slice %13 {offsets = [0, 2, 2], sizes = [4, 32, 32], strides = [1, 1, 1]} : vector<4x34x34xbf16> to vector<4x32x32xbf16>
    %23 = tpu.concatenate %14, %15, %16, %17, %18, %19, %20, %21, %22 in 0 : vector<4x32x32xbf16>, vector<4x32x32xbf16>, vector<4x32x32xbf16>, vector<4x32x32xbf16>, vector<4x32x32xbf16>, vector<4x32x32xbf16>, vector<4x32x32xbf16>, vector<4x32x32xbf16>, vector<4x32x32xbf16> -> vector<36x32x32xbf16>
    %24 = vector.shape_cast %23 : vector<36x32x32xbf16> to vector<36x1024xbf16>
    %c0_7 = arith.constant 0 : index
    %c0_8 = arith.constant 0 : index
    %25 = vector.load %arg5[%c0_7, %c0_8] : memref<8x36xbf16, #tpu.memory_space<vmem>>, vector<8x36xbf16>
    %cst_9 = arith.constant dense<0.000000e+00> : vector<8x1024xf32>
    %26 = tpu.matmul %25, %24, %cst_9 {dimension_numbers = #tpu.dot_dimension_numbers<[1], [0], [0], [1], [0, 0, 1, 1], [], []>} : vector<8x36xbf16>, vector<36x1024xbf16>, vector<8x1024xf32> -> vector<8x1024xf32>
    %c0_10 = arith.constant 0 : index
    %c0_11 = arith.constant 0 : index
    %27 = vector.load %arg6[%c0_10, %c0_11] : memref<8x1xf32, #tpu.memory_space<vmem>>, vector<8x1xf32>
    %28 = vector.broadcast %27 : vector<8x1xf32> to vector<8x1024xf32>
    %29 = arith.addf %26, %28 : vector<8x1024xf32>
    %30 = arith.truncf %29 : vector<8x1024xf32> to vector<8x1024xbf16>
    %c0_12 = arith.constant 0 : index
    %c0_13 = arith.constant 0 : index
    %c0_14 = arith.constant 0 : index
    %31 = vector.load %arg7[%c0_12, %c0_13, %c0_14] : memref<1x8x1024xbf16, #tpu.memory_space<vmem>>, vector<1x8x1024xbf16>
    %32 = vector.shape_cast %31 : vector<1x8x1024xbf16> to vector<8x1024xbf16>
    %33 = vector.shape_cast %30 : vector<8x1024xbf16> to vector<1x8x1024xbf16>
    tpu.vector_store %arg7[%c0_12, %c0_13, %c0_14], %33 {strides = array<i32>} : memref<1x8x1024xbf16, #tpu.memory_space<vmem>>, vector<1x8x1024xbf16>,
    %cst_15 = arith.constant dense<0.000000e+00> : vector<8xf32>
    %34 = vector.multi_reduction <add>, %29, %cst_15 [1] : vector<8x1024xf32> to vector<8xf32>
    %35 = vector.shape_cast %34 : vector<8xf32> to vector<8x1xf32>
    %36 = arith.mulf %29, %29 : vector<8x1024xf32>
    %cst_16 = arith.constant dense<0.000000e+00> : vector<8xf32>
    %37 = vector.multi_reduction <add>, %36, %cst_16 [1] : vector<8x1024xf32> to vector<8xf32>
    %38 = vector.shape_cast %37 : vector<8xf32> to vector<8x1xf32>
    %39 = tpu.concatenate %35, %38 in 1 : vector<8x1xf32>, vector<8x1xf32> -> vector<8x2xf32>
    %c0_17 = arith.constant 0 : index
    %c0_18 = arith.constant 0 : index
    %c0_19 = arith.constant 0 : index
    %c0_20 = arith.constant 0 : index
    %40 = vector.load %arg8[%c0_17, %c0_18, %c0_19, %c0_20] : memref<1x1x8x2xf32, #tpu.memory_space<vmem>>, vector<1x1x8x2xf32>
    %41 = vector.shape_cast %40 : vector<1x1x8x2xf32> to vector<8x2xf32>
    %42 = vector.shape_cast %39 : vector<8x2xf32> to vector<1x1x8x2xf32>
    tpu.vector_store %arg8[%c0_17, %c0_18, %c0_19, %c0_20], %42 {strides = array<i32>} : memref<1x1x8x2xf32, #tpu.memory_space<vmem>>, vector<1x1x8x2xf32>,
    return
  }
  func.func @transform_0(%arg0: i32, %arg1: i32) -> (i32, i32) {
    %c0_i32 = arith.constant 0 : i32
    %c0_i32_0 = arith.constant 0 : i32
    %c0_i32_1 = arith.constant 0 : i32
    return %c0_i32, %c0_i32_0 : i32, i32
  }
  func.func @transform_1(%arg0: i32, %arg1: i32) -> (i32, i32) {
    %c0_i32 = arith.constant 0 : i32
    %c0_i32_0 = arith.constant 0 : i32
    %c0_i32_1 = arith.constant 0 : i32
    return %c0_i32, %c0_i32_0 : i32, i32
  }
  func.func @transform_2(%arg0: i32, %arg1: i32) -> (i32, i32, i32, i32) {
    %c0_i32 = arith.constant 0 : i32
    %c0_i32_0 = arith.constant 0 : i32
    %c0_i32_1 = arith.constant 0 : i32
    %c0_i32_2 = arith.constant 0 : i32
    return %arg0, %c0_i32, %c0_i32_0, %c0_i32_1 : i32, i32, i32, i32
  }
  func.func @transform_3(%arg0: i32, %arg1: i32) -> (i32, i32) {
    %c0_i32 = arith.constant 0 : i32
    %c0_i32_0 = arith.constant 0 : i32
    %c0_i32_1 = arith.constant 0 : i32
    return %c0_i32, %c0_i32_0 : i32, i32
  }
  func.func @transform_4(%arg0: i32, %arg1: i32) -> (i32, i32) {
    %c0_i32 = arith.constant 0 : i32
    %c0_i32_0 = arith.constant 0 : i32
    %c0_i32_1 = arith.constant 0 : i32
    return %c0_i32, %c0_i32_0 : i32, i32
  }
  func.func @transform_5(%arg0: i32, %arg1: i32) -> (i32, i32, i32) {
    %c0_i32 = arith.constant 0 : i32
    %c0_i32_0 = arith.constant 0 : i32
    return %arg0, %c0_i32, %arg1 : i32, i32, i32
  }
  func.func @transform_6(%arg0: i32, %arg1: i32) -> (i32, i32, i32, i32) {
    %c0_i32 = arith.constant 0 : i32
    %c0_i32_0 = arith.constant 0 : i32
    %c0_i32_1 = arith.constant 0 : i32
    return %arg0, %arg1, %c0_i32, %c0_i32_0 : i32, i32, i32, i32
  }
}

</mosaic_0001>

<llo_original>
// kernel: upsamping_forward.3
$region0: #{upsamping_forward.3}
  #allocation0 [shape = 'u32[]', space=smem, size = 0x4, offset = 0x4, fixed_abs, tag = 'smem constant byte address 0x4 - core index']
  #allocation1 [shape = 'u32[144,128]{1,0:T(1,128)}', space=vmem, size = 0x12000, scoped, tag = 'internal scratch']
  %s0 = inlined_call_operand.vmem [shape: bf16[2,8,1024], index: 0, kind: input, shape index: {}]
  %s1 = inlined_call_operand.vmem [shape: f32[8,1], index: 1, kind: input, shape index: {}]
  %s2 = inlined_call_operand.vmem [shape: f32[8,1], index: 2, kind: input, shape index: {}]
  %s3 = inlined_call_operand.vmem [shape: f32[2,8,1024], index: 3, kind: output, shape index: {}]
  %s4 = sld [smem:[#allocation0]]
  $region45: #{upsamping_forward.3} parent=0
    _
  %s6 = ssub.s32 1, %s4
  %s7 = scalar_select 0, %s6, %s4
  loop: start=0, step=1, limit=4
  $region2: #{upsamping_forward.3} parent=0 // loop_pre_header
    _
  $region3: #{upsamping_forward.3} parent=0 // loop_header
    %s9 = sphi 0, %s13
    %p10 = scmp.ge.s32.totalorder %s9, 4
    %s16 = sphi 0, %s28
    %s17 = sphi 0, %s24
    %s18 = sphi 0, %s16
    %s19 = sphi 0, %s17
    %s20 = sphi 0, %s18
    %s21 = sphi 0, %s19
    %s33 = sphi 0, %s35
    %s36 = sphi 0, %s33
    %s37 = sphi 0, %s36
    %s53 = sphi 0, %s37
    %s57 = sphi 0, %s57
    %s59 = sphi 0, %s57
    %s60 = sphi 0, %s59
    %s74 = sphi 0, %s60
    %s78 = sphi 0, %s78
    %s80 = sphi 0, %s78
    %s81 = sphi 0, %s80
    %s95 = sphi 0, %s81
    %s103 = sphi 0, %s105
    %s106 = sphi 0, %s103
    %s107 = sphi 0, %s106
    %s123 = sphi 0, %s107
  $region4: #{upsamping_forward.3} parent=0 // loop_header_branch
    %12 = sbr.rel (%p10) target = $region8
  $region5: #{upsamping_forward.3} parent=0 // loop_body
    %s14 = ssub.s32 %s9, 1
    %s15 = ssub.s32 %s9, 2
    %s22 = sadd.s32 1, %s17
    %p23 = scmp.ge.s32.totalorder %s22, 1
    %s24 = scalar_select %p23, 0, %s22
    %s25 = sadd.s32 1, %s16
    %s26 = scalar_select %p23, %s25, %s16
    %p27 = scmp.ge.s32.totalorder %s26, 2
    %s28 = scalar_select %p27, 0, %s26
    %s29 = ssub.s32 %s16, %s28
    %s30 = ssub.s32 %s17, %s24
    %s31 = sor.u32 %s29, %s30
    %p32 = scmp.eq.s32.totalorder %s31, 0
    %s34 = sadd.s32 %s33, 1
    %s35 = scalar_select %p32, %s33, %s34
    %p38 = pneg %p32
    %p39 = scmp.eq.s32.totalorder %s9, 1
    %p40 = por %p38, %p39
    %p41 = scmp.ne.s32.totalorder %s33, %s36
    %p42 = scmp.eq.s32.totalorder %s9, 0
    %p43 = por %p41, %p42
    %p44 = scmp.ne.s32.totalorder %s33, %s36
    %p45 = scmp.eq.s32.totalorder %s14, 1
    %p46 = por %p44, %p45
    %p47 = scmp.ne.s32.totalorder %s36, %s37
    %p48 = scmp.eq.s32.totalorder %s14, 0
    %p49 = por %p47, %p48
    %p50 = scmp.ne.s32.totalorder %s36, %s37
    %p51 = scmp.eq.s32.totalorder %s15, 1
    %p52 = por %p50, %p51
    %p54 = scmp.ne.s32.totalorder %s37, %s53
    %p55 = scmp.eq.s32.totalorder %s15, 0
    %p56 = por %p54, %p55
    %s58 = sadd.s32 %s57, 1
    %p61 = scmp.eq.s32.totalorder %s9, 1
    %p62 = scmp.ne.s32.totalorder %s57, %s59
    %p63 = scmp.eq.s32.totalorder %s9, 0
    %p64 = por %p62, %p63
    %p65 = scmp.ne.s32.totalorder %s57, %s59
    %p66 = scmp.eq.s32.totalorder %s14, 1
    %p67 = por %p65, %p66
    %p68 = scmp.ne.s32.totalorder %s59, %s60
    %p69 = scmp.eq.s32.totalorder %s14, 0
    %p70 = por %p68, %p69
    %p71 = scmp.ne.s32.totalorder %s59, %s60
    %p72 = scmp.eq.s32.totalorder %s15, 1
    %p73 = por %p71, %p72
    %p75 = scmp.ne.s32.totalorder %s60, %s74
    %p76 = scmp.eq.s32.totalorder %s15, 0
    %p77 = por %p75, %p76
    %s79 = sadd.s32 %s78, 1
    %p82 = scmp.eq.s32.totalorder %s9, 1
    %p83 = scmp.ne.s32.totalorder %s78, %s80
    %p84 = scmp.eq.s32.totalorder %s9, 0
    %p85 = por %p83, %p84
    %p86 = scmp.ne.s32.totalorder %s78, %s80
    %p87 = scmp.eq.s32.totalorder %s14, 1
    %p88 = por %p86, %p87
    %p89 = scmp.ne.s32.totalorder %s80, %s81
    %p90 = scmp.eq.s32.totalorder %s14, 0
    %p91 = por %p89, %p90
    %p92 = scmp.ne.s32.totalorder %s80, %s81
    %p93 = scmp.eq.s32.totalorder %s15, 1
    %p94 = por %p92, %p93
    %p96 = scmp.ne.s32.totalorder %s81, %s95
    %p97 = scmp.eq.s32.totalorder %s15, 0
    %p98 = por %p96, %p97
    %s99 = ssub.s32 %s16, %s28
    %s100 = ssub.s32 %s17, %s24
    %s101 = sor.u32 %s99, %s100
    %p102 = scmp.eq.s32.totalorder %s101, 0
    %s104 = sadd.s32 %s103, 1
    %s105 = scalar_select %p102, %s103, %s104
    %p108 = pneg %p102
    %p109 = scmp.eq.s32.totalorder %s9, 1
    %p110 = por %p108, %p109
    %p111 = scmp.ne.s32.totalorder %s103, %s106
    %p112 = scmp.eq.s32.totalorder %s9, 0
    %p113 = por %p111, %p112
    %p114 = scmp.ne.s32.totalorder %s103, %s106
    %p115 = scmp.eq.s32.totalorder %s14, 1
    %p116 = por %p114, %p115
    %p117 = scmp.ne.s32.totalorder %s106, %s107
    %p118 = scmp.eq.s32.totalorder %s14, 0
    %p119 = por %p117, %p118
    %p120 = scmp.ne.s32.totalorder %s106, %s107
    %p121 = scmp.eq.s32.totalorder %s15, 1
    %p122 = por %p120, %p121
    %p124 = scmp.ne.s32.totalorder %s107, %s123
    %p125 = scmp.eq.s32.totalorder %s15, 0
    %p126 = por %p124, %p125
    %p127 = scmp.le.s32.totalorder 1, %s9
    %p128 = scmp.lt.s32.totalorder %s9, 3
    %p129 = pnand %p127, %p128
    %p130 = pneg %p129
    // Predicated region
    $region9: #{upsamping_forward.3} parent=5 // pred_check
      _
    $region10: #{upsamping_forward.3} parent=5 // pred_check_branch
      %132 = sbr.rel (%p129) target = $region12
    $region11: #{upsamping_forward.3} parent=5 // pred_region
      %s133 = ssub.s32 %s9, 1
      // Predicated region
      $region13: #{upsamping_forward.3} parent=11 // pred_check
        %p134 = pneg %p70
      $region14: #{upsamping_forward.3} parent=11 // pred_check_branch
        %136 = sbr.rel (%p134) target = $region16
      $region15: #{upsamping_forward.3} parent=11 // pred_region
        _
      $region16: #{upsamping_forward.3} parent=11 // pred_fallthru
        _
      // Predicated region
      $region17: #{upsamping_forward.3} parent=11 // pred_check
        %p137 = pneg %p91
      $region18: #{upsamping_forward.3} parent=11 // pred_check_branch
        %139 = sbr.rel (%p137) target = $region20
      $region19: #{upsamping_forward.3} parent=11 // pred_region
        _
      $region20: #{upsamping_forward.3} parent=11 // pred_fallthru
        _
    $region12: #{upsamping_forward.3} parent=5 // pred_fallthru
      _
    %p140 = scmp.lt.s32.totalorder %s9, 2
    // Predicated region
    $region21: #{upsamping_forward.3} parent=5 // pred_check
      %p141 = pneg %p140
    $region22: #{upsamping_forward.3} parent=5 // pred_check_branch
      %143 = sbr.rel (%p141) target = $region24
    $region23: #{upsamping_forward.3} parent=5 // pred_region
      // Predicated region
      $region25: #{upsamping_forward.3} parent=23 // pred_check
        %p144 = pneg %p43
      $region26: #{upsamping_forward.3} parent=23 // pred_check_branch
        %146 = sbr.rel (%p144) target = $region28
      $region27: #{upsamping_forward.3} parent=23 // pred_region
        %s147 = smul.u32 8, %s17
        %p148 = scmp.lt.s32.totalorder %s16, 1
        %s149 = scalar_select %p148, %s16, 1
        %p150 = scmp.lt.s32.totalorder %s147, 7
        %s151 = scalar_select %p150, %s147, 7
        %s152 = smul.addr %s149, 8
        %s153 = sadd.s32 %s151, %s152
        %s154 = smul.addr %s153, 4
        %s155 = scalar_lea.vmem %s0, %s154
        %s156 = smul.u32 8, %s17
      $region28: #{upsamping_forward.3} parent=23 // pred_fallthru
        _
    $region24: #{upsamping_forward.3} parent=5 // pred_fallthru
      _
    %p157 = scmp.le.s32.totalorder 1, %s9
    %p158 = scmp.lt.s32.totalorder %s9, 3
    %p159 = pnand %p157, %p158
    %p160 = pneg %p159
    // Predicated region
    $region29: #{upsamping_forward.3} parent=5 // pred_check
      _
    $region30: #{upsamping_forward.3} parent=5 // pred_check_branch
      %162 = sbr.rel (%p159) target = $region32
    $region31: #{upsamping_forward.3} parent=5 // pred_region
      %s163 = ssub.s32 %s9, 1
      %s164 = smul.u32 8, %s19
      %p165 = scmp.lt.s32.totalorder %s18, 1
      %s166 = scalar_select %p165, %s18, 1
      %p167 = scmp.lt.s32.totalorder %s164, 7
      %s168 = scalar_select %p167, %s164, 7
      %s169 = smul.addr %s166, 8
      %s170 = sadd.s32 %s168, %s169
      %s171 = smul.addr %s170, 4
      %s172 = scalar_lea.vmem %s0, %s171
      %p173 = pneg %p49
      %p174 = pneg %p46
      %p175 = pneg %p70
      %p176 = pneg %p67
      %p177 = pneg %p91
      %p178 = pneg %p88
      %p179 = pneg %p119
      %p180 = pneg %p116
      %s181 = smul.u32 8, %s19
      %p182 = scmp.lt.s32.totalorder %s18, 1
      %s183 = scalar_select %p182, %s18, 1
      %p184 = scmp.lt.s32.totalorder %s181, 7
      %s185 = scalar_select %p184, %s181, 7
      %s186 = smul.addr %s183, 8
      %s187 = sadd.s32 %s185, %s186
      %s188 = smul.addr %s187, 8
      %s189 = scalar_lea.vmem %s3, %s188
      %s190 = smul.u32 8, %s19
      %p191 = scmp.lt.s32.totalorder %s18, 1
      %s192 = scalar_select %p191, %s18, 1
      %p193 = scmp.lt.s32.totalorder %s190, 7
      %s194 = scalar_select %p193, %s190, 7
      %s195 = smul.addr %s192, 8
      %s196 = sadd.s32 %s194, %s195
      %s197 = smul.addr %s196, 4
      %s198 = scalar_lea.vmem %s0, %s197
      %s199 = smul.u32 8, %s19
      %s200 = smul.u32 8, %s19
      %p201 = scmp.lt.s32.totalorder %s18, 1
      %s202 = scalar_select %p201, %s18, 1
      %p203 = scmp.lt.s32.totalorder %s200, 7
      %s204 = scalar_select %p203, %s200, 7
      %s205 = smul.addr %s202, 8
      %s206 = sadd.s32 %s204, %s205
      %s207 = smul.addr %s206, 8
      %s208 = scalar_lea.vmem %s3, %s207
      %s209 = smul.u32 8, %s19
      %v210 = vld [vmem:[%s198] sm:$0xff]
      %v211 = vld [vmem:[%s198 + $0x8] sm:$0xff]
      %v212 = vld [vmem:[%s198 + $0x10] sm:$0xff]
      %v213 = vld [vmem:[%s198 + $0x18] sm:$0xff]
      %v214 = vunpack.c.l.bf16 %v210
      %v215 = vunpack.c.h.bf16 %v210
      %v216 = vunpack.c.l.bf16 %v211
      %v217 = vunpack.c.h.bf16 %v211
      %v218 = vunpack.c.l.bf16 %v212
      %v219 = vunpack.c.h.bf16 %v212
      %v220 = vunpack.c.l.bf16 %v213
      %v221 = vunpack.c.h.bf16 %v213
      %v222 = vld [vmem:[%s1] sm:$0xff]
      %224 = vset.pattern.permute.xlu0 0
      %225 = vperm.xlu0 %224, %v222
      %v226 = vpop.permute.xlu0 %225
      %v228 = vmul.f32 %v214, %v226
      %v229 = vmul.f32 %v215, %v226
      %v230 = vmul.f32 %v216, %v226
      %v231 = vmul.f32 %v217, %v226
      %v232 = vmul.f32 %v218, %v226
      %v233 = vmul.f32 %v219, %v226
      %v234 = vmul.f32 %v220, %v226
      %v235 = vmul.f32 %v221, %v226
      %v236 = vld [vmem:[%s2] sm:$0xff]
      %238 = vset.pattern.permute.xlu0 0
      %239 = vperm.xlu0 %238, %v236
      %v240 = vpop.permute.xlu0 %239
      %v242 = vadd.f32 %v228, %v240
      %v243 = vadd.f32 %v229, %v240
      %v244 = vadd.f32 %v230, %v240
      %v245 = vadd.f32 %v231, %v240
      %v246 = vadd.f32 %v232, %v240
      %v247 = vadd.f32 %v233, %v240
      %v248 = vadd.f32 %v234, %v240
      %v249 = vadd.f32 %v235, %v240
      %v250 = vmax.f32 %v242, 0.0
      %v251 = vmax.f32 %v243, 0.0
      %v252 = vmax.f32 %v244, 0.0
      %v253 = vmax.f32 %v245, 0.0
      %v254 = vmax.f32 %v246, 0.0
      %v255 = vmax.f32 %v247, 0.0
      %v256 = vmax.f32 %v248, 0.0
      %v257 = vmax.f32 %v249, 0.0
      %258 = vst [vmem:[%s208] sm:$0xff] %v250
      %259 = vst [vmem:[%s208 + $0x8] sm:$0xff] %v251
      %260 = vst [vmem:[%s208 + $0x10] sm:$0xff] %v252
      %261 = vst [vmem:[%s208 + $0x18] sm:$0xff] %v253
      %262 = vst [vmem:[%s208 + $0x20] sm:$0xff] %v254
      %263 = vst [vmem:[%s208 + $0x28] sm:$0xff] %v255
      %264 = vst [vmem:[%s208 + $0x30] sm:$0xff] %v256
      %265 = vst [vmem:[%s208 + $0x38] sm:$0xff] %v257
      %s266 = smul.u32 8, %s19
      %p267 = scmp.lt.s32.totalorder %s18, 1
      %s268 = scalar_select %p267, %s18, 1
      %p269 = scmp.lt.s32.totalorder %s266, 7
      %s270 = scalar_select %p269, %s266, 7
      %s271 = smul.addr %s268, 8
      %s272 = sadd.s32 %s270, %s271
      %s273 = smul.addr %s272, 8
      %s274 = scalar_lea.vmem %s3, %s273
      // Predicated region
      $region33: #{upsamping_forward.3} parent=31 // pred_check
        %p275 = pneg %p116
      $region34: #{upsamping_forward.3} parent=31 // pred_check_branch
        %277 = sbr.rel (%p275) target = $region36
      $region35: #{upsamping_forward.3} parent=31 // pred_region
        %s278 = smul.u32 8, %s19
      $region36: #{upsamping_forward.3} parent=31 // pred_fallthru
        _
    $region32: #{upsamping_forward.3} parent=5 // pred_fallthru
      _
    %p279 = scmp.le.s32.totalorder 2, %s9
    // Predicated region
    $region37: #{upsamping_forward.3} parent=5 // pred_check
      %p280 = pneg %p279
    $region38: #{upsamping_forward.3} parent=5 // pred_check_branch
      %282 = sbr.rel (%p280) target = $region40
    $region39: #{upsamping_forward.3} parent=5 // pred_region
      %s283 = ssub.s32 %s9, 2
      // Predicated region
      $region41: #{upsamping_forward.3} parent=39 // pred_check
        %p284 = pneg %p122
      $region42: #{upsamping_forward.3} parent=39 // pred_check_branch
        %286 = sbr.rel (%p284) target = $region44
      $region43: #{upsamping_forward.3} parent=39 // pred_region
        %s287 = smul.u32 8, %s21
        %p288 = scmp.lt.s32.totalorder %s20, 1
        %s289 = scalar_select %p288, %s20, 1
        %p290 = scmp.lt.s32.totalorder %s287, 7
        %s291 = scalar_select %p290, %s287, 7
        %s292 = smul.addr %s289, 8
        %s293 = sadd.s32 %s291, %s292
        %s294 = smul.addr %s293, 8
        %s295 = scalar_lea.vmem %s3, %s294
      $region44: #{upsamping_forward.3} parent=39 // pred_fallthru
        _
    $region40: #{upsamping_forward.3} parent=5 // pred_fallthru
      _
  $region6: #{upsamping_forward.3} parent=0 // loop_footer
    %s13 = sadd.s32 1, %s9
  $region7: #{upsamping_forward.3} parent=0 // loop_footer_branch
    %8 = sbr.rel target = $region3
  $region8: #{upsamping_forward.3} parent=0 // loop_exit
    _

// kernel: upsamping_forward.2
$region0: #{upsamping_forward.2}
  #allocation0 [shape = 'u32[]', space=smem, size = 0x4, offset = 0x4, fixed_abs, tag = 'smem constant byte address 0x4 - core index']
  #allocation1 [shape = 'u32[144,128]{1,0:T(1,128)}', space=vmem, size = 0x12000, scoped, tag = 'internal scratch']
  %s0 = inlined_call_operand.vmem [shape: f32[34,16], index: 0, kind: input, shape index: {}]
  %s1 = inlined_call_operand.vmem [shape: f32[16,34], index: 1, kind: input, shape index: {}]
  %s2 = inlined_call_operand.vmem [shape: f32[2,4,16,16], index: 2, kind: input, shape index: {}]
  %s3 = inlined_call_operand.vmem [shape: bf16[8,36], index: 3, kind: input, shape index: {}]
  %s4 = inlined_call_operand.vmem [shape: f32[8,1], index: 4, kind: input, shape index: {}]
  %s5 = inlined_call_operand.vmem [shape: bf16[2,8,1024], index: 5, kind: output, shape index: {0}]
  %s6 = inlined_call_operand.vmem [shape: f32[2,1,8,2], index: 6, kind: output, shape index: {1}]
  %7 = xla_tuple %s5, %s6
  %s8 = sld [smem:[#allocation0]]
  $region61: #{upsamping_forward.2} parent=0
    _
  %s10 = ssub.s32 1, %s8
  %s11 = scalar_select 0, %s10, %s8
  loop: start=0, step=1, limit=4
  $region2: #{upsamping_forward.2} parent=0 // loop_pre_header
    _
  $region3: #{upsamping_forward.2} parent=0 // loop_header
    %s13 = sphi 0, %s17
    %p14 = scmp.ge.s32.totalorder %s13, 4
    %s20 = sphi 0, %s32
    %s21 = sphi 0, %s28
    %s22 = sphi 0, %s20
    %s23 = sphi 0, %s21
    %s24 = sphi 0, %s22
    %s25 = sphi 0, %s23
    %s33 = sphi 0, %s33
    %s35 = sphi 0, %s33
    %s36 = sphi 0, %s35
    %s50 = sphi 0, %s36
    %s54 = sphi 0, %s54
    %s56 = sphi 0, %s54
    %s57 = sphi 0, %s56
    %s71 = sphi 0, %s57
    %s77 = sphi 0, %s79
    %s80 = sphi 0, %s77
    %s81 = sphi 0, %s80
    %s97 = sphi 0, %s81
    %s101 = sphi 0, %s101
    %s103 = sphi 0, %s101
    %s104 = sphi 0, %s103
    %s118 = sphi 0, %s104
    %s122 = sphi 0, %s122
    %s124 = sphi 0, %s122
    %s125 = sphi 0, %s124
    %s139 = sphi 0, %s125
    %s147 = sphi 0, %s149
    %s150 = sphi 0, %s147
    %s151 = sphi 0, %s150
    %s167 = sphi 0, %s151
    %s175 = sphi 0, %s177
    %s178 = sphi 0, %s175
    %s179 = sphi 0, %s178
    %s195 = sphi 0, %s179
  $region4: #{upsamping_forward.2} parent=0 // loop_header_branch
    %16 = sbr.rel (%p14) target = $region8
  $region5: #{upsamping_forward.2} parent=0 // loop_body
    %s18 = ssub.s32 %s13, 1
    %s19 = ssub.s32 %s13, 2
    %s26 = sadd.s32 1, %s21
    %p27 = scmp.ge.s32.totalorder %s26, 1
    %s28 = scalar_select %p27, 0, %s26
    %s29 = sadd.s32 1, %s20
    %s30 = scalar_select %p27, %s29, %s20
    %p31 = scmp.ge.s32.totalorder %s30, 2
    %s32 = scalar_select %p31, 0, %s30
    %s34 = sadd.s32 %s33, 1
    %p37 = scmp.eq.s32.totalorder %s13, 1
    %p38 = scmp.ne.s32.totalorder %s33, %s35
    %p39 = scmp.eq.s32.totalorder %s13, 0
    %p40 = por %p38, %p39
    %p41 = scmp.ne.s32.totalorder %s33, %s35
    %p42 = scmp.eq.s32.totalorder %s18, 1
    %p43 = por %p41, %p42
    %p44 = scmp.ne.s32.totalorder %s35, %s36
    %p45 = scmp.eq.s32.totalorder %s18, 0
    %p46 = por %p44, %p45
    %p47 = scmp.ne.s32.totalorder %s35, %s36
    %p48 = scmp.eq.s32.totalorder %s19, 1
    %p49 = por %p47, %p48
    %p51 = scmp.ne.s32.totalorder %s36, %s50
    %p52 = scmp.eq.s32.totalorder %s19, 0
    %p53 = por %p51, %p52
    %s55 = sadd.s32 %s54, 1
    %p58 = scmp.eq.s32.totalorder %s13, 1
    %p59 = scmp.ne.s32.totalorder %s54, %s56
    %p60 = scmp.eq.s32.totalorder %s13, 0
    %p61 = por %p59, %p60
    %p62 = scmp.ne.s32.totalorder %s54, %s56
    %p63 = scmp.eq.s32.totalorder %s18, 1
    %p64 = por %p62, %p63
    %p65 = scmp.ne.s32.totalorder %s56, %s57
    %p66 = scmp.eq.s32.totalorder %s18, 0
    %p67 = por %p65, %p66
    %p68 = scmp.ne.s32.totalorder %s56, %s57
    %p69 = scmp.eq.s32.totalorder %s19, 1
    %p70 = por %p68, %p69
    %p72 = scmp.ne.s32.totalorder %s57, %s71
    %p73 = scmp.eq.s32.totalorder %s19, 0
    %p74 = por %p72, %p73
    %s75 = ssub.s32 %s20, %s32
    %p76 = scmp.eq.s32.totalorder %s75, 0
    %s78 = sadd.s32 %s77, 1
    %s79 = scalar_select %p76, %s77, %s78
    %p82 = pneg %p76
    %p83 = scmp.eq.s32.totalorder %s13, 1
    %p84 = por %p82, %p83
    %p85 = scmp.ne.s32.totalorder %s77, %s80
    %p86 = scmp.eq.s32.totalorder %s13, 0
    %p87 = por %p85, %p86
    %p88 = scmp.ne.s32.totalorder %s77, %s80
    %p89 = scmp.eq.s32.totalorder %s18, 1
    %p90 = por %p88, %p89
    %p91 = scmp.ne.s32.totalorder %s80, %s81
    %p92 = scmp.eq.s32.totalorder %s18, 0
    %p93 = por %p91, %p92
    %p94 = scmp.ne.s32.totalorder %s80, %s81
    %p95 = scmp.eq.s32.totalorder %s19, 1
    %p96 = por %p94, %p95
    %p98 = scmp.ne.s32.totalorder %s81, %s97
    %p99 = scmp.eq.s32.totalorder %s19, 0
    %p100 = por %p98, %p99
    %s102 = sadd.s32 %s101, 1
    %p105 = scmp.eq.s32.totalorder %s13, 1
    %p106 = scmp.ne.s32.totalorder %s101, %s103
    %p107 = scmp.eq.s32.totalorder %s13, 0
    %p108 = por %p106, %p107
    %p109 = scmp.ne.s32.totalorder %s101, %s103
    %p110 = scmp.eq.s32.totalorder %s18, 1
    %p111 = por %p109, %p110
    %p112 = scmp.ne.s32.totalorder %s103, %s104
    %p113 = scmp.eq.s32.totalorder %s18, 0
    %p114 = por %p112, %p113
    %p115 = scmp.ne.s32.totalorder %s103, %s104
    %p116 = scmp.eq.s32.totalorder %s19, 1
    %p117 = por %p115, %p116
    %p119 = scmp.ne.s32.totalorder %s104, %s118
    %p120 = scmp.eq.s32.totalorder %s19, 0
    %p121 = por %p119, %p120
    %s123 = sadd.s32 %s122, 1
    %p126 = scmp.eq.s32.totalorder %s13, 1
    %p127 = scmp.ne.s32.totalorder %s122, %s124
    %p128 = scmp.eq.s32.totalorder %s13, 0
    %p129 = por %p127, %p128
    %p130 = scmp.ne.s32.totalorder %s122, %s124
    %p131 = scmp.eq.s32.totalorder %s18, 1
    %p132 = por %p130, %p131
    %p133 = scmp.ne.s32.totalorder %s124, %s125
    %p134 = scmp.eq.s32.totalorder %s18, 0
    %p135 = por %p133, %p134
    %p136 = scmp.ne.s32.totalorder %s124, %s125
    %p137 = scmp.eq.s32.totalorder %s19, 1
    %p138 = por %p136, %p137
    %p140 = scmp.ne.s32.totalorder %s125, %s139
    %p141 = scmp.eq.s32.totalorder %s19, 0
    %p142 = por %p140, %p141
    %s143 = ssub.s32 %s20, %s32
    %s144 = ssub.s32 %s21, %s28
    %s145 = sor.u32 %s143, %s144
    %p146 = scmp.eq.s32.totalorder %s145, 0
    %s148 = sadd.s32 %s147, 1
    %s149 = scalar_select %p146, %s147, %s148
    %p152 = pneg %p146
    %p153 = scmp.eq.s32.totalorder %s13, 1
    %p154 = por %p152, %p153
    %p155 = scmp.ne.s32.totalorder %s147, %s150
    %p156 = scmp.eq.s32.totalorder %s13, 0
    %p157 = por %p155, %p156
    %p158 = scmp.ne.s32.totalorder %s147, %s150
    %p159 = scmp.eq.s32.totalorder %s18, 1
    %p160 = por %p158, %p159
    %p161 = scmp.ne.s32.totalorder %s150, %s151
    %p162 = scmp.eq.s32.totalorder %s18, 0
    %p163 = por %p161, %p162
    %p164 = scmp.ne.s32.totalorder %s150, %s151
    %p165 = scmp.eq.s32.totalorder %s19, 1
    %p166 = por %p164, %p165
    %p168 = scmp.ne.s32.totalorder %s151, %s167
    %p169 = scmp.eq.s32.totalorder %s19, 0
    %p170 = por %p168, %p169
    %s171 = ssub.s32 %s20, %s32
    %s172 = ssub.s32 %s21, %s28
    %s173 = sor.u32 %s171, %s172
    %p174 = scmp.eq.s32.totalorder %s173, 0
    %s176 = sadd.s32 %s175, 1
    %s177 = scalar_select %p174, %s175, %s176
    %p180 = pneg %p174
    %p181 = scmp.eq.s32.totalorder %s13, 1
    %p182 = por %p180, %p181
    %p183 = scmp.ne.s32.totalorder %s175, %s178
    %p184 = scmp.eq.s32.totalorder %s13, 0
    %p185 = por %p183, %p184
    %p186 = scmp.ne.s32.totalorder %s175, %s178
    %p187 = scmp.eq.s32.totalorder %s18, 1
    %p188 = por %p186, %p187
    %p189 = scmp.ne.s32.totalorder %s178, %s179
    %p190 = scmp.eq.s32.totalorder %s18, 0
    %p191 = por %p189, %p190
    %p192 = scmp.ne.s32.totalorder %s178, %s179
    %p193 = scmp.eq.s32.totalorder %s19, 1
    %p194 = por %p192, %p193
    %p196 = scmp.ne.s32.totalorder %s179, %s195
    %p197 = scmp.eq.s32.totalorder %s19, 0
    %p198 = por %p196, %p197
    %p199 = scmp.le.s32.totalorder 1, %s13
    %p200 = scmp.lt.s32.totalorder %s13, 3
    %p201 = pnand %p199, %p200
    %p202 = pneg %p201
    // Predicated region
    $region9: #{upsamping_forward.2} parent=5 // pred_check
      _
    $region10: #{upsamping_forward.2} parent=5 // pred_check_branch
      %204 = sbr.rel (%p201) target = $region12
    $region11: #{upsamping_forward.2} parent=5 // pred_region
      %s205 = ssub.s32 %s13, 1
      // Predicated region
      $region13: #{upsamping_forward.2} parent=11 // pred_check
        %p206 = pneg %p46
      $region14: #{upsamping_forward.2} parent=11 // pred_check_branch
        %208 = sbr.rel (%p206) target = $region16
      $region15: #{upsamping_forward.2} parent=11 // pred_region
        _
      $region16: #{upsamping_forward.2} parent=11 // pred_fallthru
        _
      // Predicated region
      $region17: #{upsamping_forward.2} parent=11 // pred_check
        %p209 = pneg %p67
      $region18: #{upsamping_forward.2} parent=11 // pred_check_branch
        %211 = sbr.rel (%p209) target = $region20
      $region19: #{upsamping_forward.2} parent=11 // pred_region
        _
      $region20: #{upsamping_forward.2} parent=11 // pred_fallthru
        _
      // Predicated region
      $region21: #{upsamping_forward.2} parent=11 // pred_check
        %p212 = pneg %p114
      $region22: #{upsamping_forward.2} parent=11 // pred_check_branch
        %214 = sbr.rel (%p212) target = $region24
      $region23: #{upsamping_forward.2} parent=11 // pred_region
        _
      $region24: #{upsamping_forward.2} parent=11 // pred_fallthru
        _
      // Predicated region
      $region25: #{upsamping_forward.2} parent=11 // pred_check
        %p215 = pneg %p135
      $region26: #{upsamping_forward.2} parent=11 // pred_check_branch
        %217 = sbr.rel (%p215) target = $region28
      $region27: #{upsamping_forward.2} parent=11 // pred_region
        _
      $region28: #{upsamping_forward.2} parent=11 // pred_fallthru
        _
    $region12: #{upsamping_forward.2} parent=5 // pred_fallthru
      _
    %p218 = scmp.lt.s32.totalorder %s13, 2
    // Predicated region
    $region29: #{upsamping_forward.2} parent=5 // pred_check
      %p219 = pneg %p218
    $region30: #{upsamping_forward.2} parent=5 // pred_check_branch
      %221 = sbr.rel (%p219) target = $region32
    $region31: #{upsamping_forward.2} parent=5 // pred_region
      // Predicated region
      $region33: #{upsamping_forward.2} parent=31 // pred_check
        %p222 = pneg %p87
      $region34: #{upsamping_forward.2} parent=31 // pred_check_branch
        %224 = sbr.rel (%p222) target = $region36
      $region35: #{upsamping_forward.2} parent=31 // pred_region
        %p225 = scmp.lt.s32.totalorder %s20, 1
        %s226 = scalar_select %p225, %s20, 1
        %s227 = smul.addr %s226, 8
        %s228 = smul.addr %s227, 8
        %s229 = scalar_lea.vmem %s2, %s228
      $region36: #{upsamping_forward.2} parent=31 // pred_fallthru
        _
    $region32: #{upsamping_forward.2} parent=5 // pred_fallthru
      _
    %p230 = scmp.le.s32.totalorder 1, %s13
    %p231 = scmp.lt.s32.totalorder %s13, 3
    %p232 = pnand %p230, %p231
    %p233 = pneg %p232
    // Predicated region
    $region37: #{upsamping_forward.2} parent=5 // pred_check
      _
    $region38: #{upsamping_forward.2} parent=5 // pred_check_branch
      %235 = sbr.rel (%p232) target = $region40
    $region39: #{upsamping_forward.2} parent=5 // pred_region
      %s236 = ssub.s32 %s13, 1
      %p237 = pneg %p46
      %p238 = pneg %p43
      %p239 = pneg %p67
      %p240 = pneg %p64
      %p241 = scmp.lt.s32.totalorder %s22, 1
      %s242 = scalar_select %p241, %s22, 1
      %s243 = smul.addr %s242, 8
      %s244 = smul.addr %s243, 8
      %s245 = scalar_lea.vmem %s2, %s244
      %p246 = pneg %p93
      %p247 = pneg %p90
      %p248 = pneg %p114
      %p249 = pneg %p111
      %p250 = pneg %p135
      %p251 = pneg %p132
      %p252 = pneg %p163
      %p253 = pneg %p160
      %s254 = smul.u32 8, %s23
      %p255 = scmp.lt.s32.totalorder %s22, 1
      %s256 = scalar_select %p255, %s22, 1
      %p257 = scmp.lt.s32.totalorder %s254, 7
      %s258 = scalar_select %p257, %s254, 7
      %s259 = smul.addr %s256, 8
      %s260 = sadd.s32 %s258, %s259
      %s261 = smul.addr %s260, 4
      %s262 = scalar_lea.vmem %s5, %s261
      %p263 = pneg %p191
      %p264 = pneg %p188
      %p265 = scmp.lt.s32.totalorder %s22, 1
      %s266 = scalar_select %p265, %s22, 1
      %p267 = scmp.lt.s32.totalorder %s23, 0
      %s268 = scalar_select %p267, %s23, 0
      %s269 = sadd.s32 %s268, %s266
      %s270 = smul.addr %s269, 8
      %s271 = scalar_lea.vmem %s6, %s270
      %p272 = scmp.lt.s32.totalorder %s22, 1
      %s273 = scalar_select %p272, %s22, 1
      %s274 = smul.addr %s273, 8
      %s275 = smul.addr %s274, 8
      %s276 = scalar_lea.vmem %s2, %s275
      %s277 = smul.u32 8, %s23
      %p278 = scmp.lt.s32.totalorder %s22, 1
      %s279 = scalar_select %p278, %s22, 1
      %p280 = scmp.lt.s32.totalorder %s277, 7
      %s281 = scalar_select %p280, %s277, 7
      %s282 = smul.addr %s279, 8
      %s283 = sadd.s32 %s281, %s282
      %s284 = smul.addr %s283, 4
      %s285 = scalar_lea.vmem %s5, %s284
      %s286 = smul.u32 8, %s23
      %p287 = scmp.lt.s32.totalorder %s22, 1
      %s288 = scalar_select %p287, %s22, 1
      %p289 = scmp.lt.s32.totalorder %s23, 0
      %s290 = scalar_select %p289, %s23, 0
      %s291 = sadd.s32 %s290, %s288
      %s292 = smul.addr %s291, 8
      %s293 = scalar_lea.vmem %s6, %s292
      %v295 = vld [vmem:[%s276] sm:$0xff]
      %v296 = vld [vmem:[%s276 + $0x8] sm:$0xff]
      %v297 = vld [vmem:[%s276 + $0x10] sm:$0xff]
      %v298 = vld [vmem:[%s276 + $0x18] sm:$0xff]
      %v299 = vld [vmem:[%s276 + $0x20] sm:$0xff]
      %v300 = vld [vmem:[%s276 + $0x28] sm:$0xff]
      %v301 = vld [vmem:[%s276 + $0x30] sm:$0xff]
      %v302 = vld [vmem:[%s276 + $0x38] sm:$0xff]
      %v303 = vld [vmem:[%s1] sm:$0xff]
      %v304 = vld [vmem:[%s1 + $0x8] sm:$0xff]
      %vm305 = vcmask 130048
      %v307 = vsel %vm305, %v295, 0
      %v310 = vsel %vm305, %v296, 0
      %v313 = vsel %vm305, %v297, 0
      %v316 = vsel %vm305, %v298, 0
      %v319 = vsel %vm305, %v299, 0
      %v322 = vsel %vm305, %v300, 0
      %v325 = vsel %vm305, %v301, 0
      %v328 = vsel %vm305, %v302, 0
      %330 = vmatprep.subr.mxu0 0.0
      %331 = vmatpush1.msra.mxu0 %v303
      %332 = vmatprep.subr.mxu0 0.0
      %333 = vmatpush1.msra.mxu0 %v304
      %334 = vmatprep.subr.mxu0 0.0
      %335 = vmatpush1.msra.mxu0 0.0
      %336 = vmatprep.subr.mxu0 0.0
      %337 = vmatpush1.msra.mxu0 0.0
      %338 = vmatprep.subr.mxu0 0.0
      %339 = vmatpush1.msra.mxu0 0.0
      %340 = vmatprep.subr.mxu0 0.0
      %341 = vmatpush1.msra.mxu0 0.0
      %342 = vmatprep.subr.mxu0 0.0
      %343 = vmatpush1.msra.mxu0 0.0
      %344 = vmatprep.subr.mxu0 0.0
      %345 = vmatpush1.msra.mxu0 0.0
      %346 = vmatprep.subr.mxu0 0.0
      %347 = vmatpush1.msra.mxu0 0.0
      %348 = vmatprep.subr.mxu0 0.0
      %349 = vmatpush1.msra.mxu0 0.0
      %350 = vmatprep.subr.mxu0 0.0
      %351 = vmatpush1.msra.mxu0 0.0
      %352 = vmatprep.subr.mxu0 0.0
      %353 = vmatpush1.msra.mxu0 0.0
      %354 = vmatprep.subr.mxu0 0.0
      %355 = vmatpush1.msra.mxu0 0.0
      %356 = vmatprep.subr.mxu0 0.0
      %357 = vmatpush1.msra.mxu0 0.0
      %358 = vmatprep.subr.mxu0 0.0
      %359 = vmatpush1.msra.mxu0 0.0
      %360 = vmatprep.subr.mxu0 0.0
      %361 = vmatpush1.msra.mxu0 0.0
      %362 = vmatprep.subr.mxu0 0.0
      %363 = vmatpush1.msra.mxu0 0.0
      %364 = vmatprep.subr.mxu0 0.0
      %365 = vmatpush1.msra.mxu0 0.0
      %366 = vmatprep.subr.mxu0 0.0
      %367 = vmatpush1.msra.mxu0 0.0
      %368 = vmatprep.subr.mxu0 0.0
      %369 = vmatpush1.msra.mxu0 0.0
      %370 = vmatprep.subr.mxu0 0.0
      %371 = vmatpush1.msra.mxu0 0.0
      %372 = vmatprep.subr.mxu0 0.0
      %373 = vmatpush1.msra.mxu0 0.0
      %374 = vmatprep.subr.mxu0 0.0
      %375 = vmatpush1.msra.mxu0 0.0
      %376 = vmatprep.subr.mxu0 0.0
      %377 = vmatpush1.msra.mxu0 0.0
      %378 = vmatprep.subr.mxu0 0.0
      %379 = vmatpush1.msra.mxu0 0.0
      %380 = vmatprep.subr.mxu0 0.0
      %381 = vmatpush1.msra.mxu0 0.0
      %382 = vmatprep.subr.mxu0 0.0
      %383 = vmatpush1.msra.mxu0 0.0
      %384 = vmatprep.subr.mxu0 0.0
      %385 = vmatpush1.msra.mxu0 0.0
      %386 = vmatprep.subr.mxu0 0.0
      %387 = vmatpush1.msra.mxu0 0.0
      %388 = vmatprep.subr.mxu0 0.0
      %389 = vmatpush1.msra.mxu0 0.0
      %390 = vmatprep.subr.mxu0 0.0
      %391 = vmatpush1.msra.mxu0 0.0
      %392 = vmatprep.subr.mxu0 0.0
      %393 = vmatpush1.msra.mxu0 0.0
      %394 = vmatprep.mubr.f32.mxu0 0.0
      %395 = vmatmul.mubr.f32.gmra.mrb[0].mxu0 %v307
      %v396 = vpop.f32.mrb[0].mxu0
      %v397 = vadd.f32 0.0, %v396
      %v398 = vpop.f32.mrb[0].mxu0
      %399 = vmatprep.mubr.f32.mxu0 0.0
      %400 = vmatmul.mubr.f32.gmra.mrb[0].mxu0 %v310
      %v401 = vpop.f32.mrb[0].mxu0
      %v402 = vadd.f32 0.0, %v401
      %v403 = vpop.f32.mrb[0].mxu0
      %404 = vmatprep.mubr.f32.mxu0 0.0
      %405 = vmatmul.mubr.f32.gmra.mrb[0].mxu0 %v313
      %v406 = vpop.f32.mrb[0].mxu0
      %v407 = vadd.f32 0.0, %v406
      %v408 = vpop.f32.mrb[0].mxu0
      %409 = vmatprep.mubr.f32.mxu0 0.0
      %410 = vmatmul.mubr.f32.gmra.mrb[0].mxu0 %v316
      %v411 = vpop.f32.mrb[0].mxu0
      %v412 = vadd.f32 0.0, %v411
      %v413 = vpop.f32.mrb[0].mxu0
      %414 = vmatprep.mubr.f32.mxu0 0.0
      %415 = vmatmul.mubr.f32.gmra.mrb[0].mxu0 %v319
      %v416 = vpop.f32.mrb[0].mxu0
      %v417 = vadd.f32 0.0, %v416
      %v418 = vpop.f32.mrb[0].mxu0
      %419 = vmatprep.mubr.f32.mxu0 0.0
      %420 = vmatmul.mubr.f32.gmra.mrb[0].mxu0 %v322
      %v421 = vpop.f32.mrb[0].mxu0
      %v422 = vadd.f32 0.0, %v421
      %v423 = vpop.f32.mrb[0].mxu0
      %424 = vmatprep.mubr.f32.mxu0 0.0
      %425 = vmatmul.mubr.f32.gmra.mrb[0].mxu0 %v325
      %v426 = vpop.f32.mrb[0].mxu0
      %v427 = vadd.f32 0.0, %v426
      %v428 = vpop.f32.mrb[0].mxu0
      %429 = vmatprep.mubr.f32.mxu0 0.0
      %430 = vmatmul.mubr.f32.gmra.mrb[0].mxu0 %v328
      %v431 = vpop.f32.mrb[0].mxu0
      %v432 = vadd.f32 0.0, %v431
      %v433 = vpop.f32.mrb[0].mxu0
      %434 = vdwg.mxu0
      %s435 = smul.u32 %s23, 32
      %s436 = scalar_lea.vmem %s0, %s435
      %v437 = vld [vmem:[%s436] sm:$0xff]
      %v438 = vld [vmem:[%s436 + $0x8] sm:$0xff]
      %v439 = vld [vmem:[%s436 + $0x10] sm:$0xff]
      %v440 = vld [vmem:[%s436 + $0x18] sm:$0xff]
      %v441 = vld [vmem:[%s436 + $0x20] sm:$0x3]
      %v443 = vsel %vm305, %v437, 0
      %v446 = vsel %vm305, %v438, 0
      %v449 = vsel %vm305, %v439, 0
      %v452 = vsel %vm305, %v440, 0
      %v455 = vsel %vm305, %v441, 0
      %457 = vmatprep.subr.mxu0 0.0
      %458 = vmatpush1.msra.mxu0 %v397
      %459 = vmatprep.subr.mxu0 0.0
      %460 = vmatpush1.msra.mxu0 %v402
      %461 = vmatprep.subr.mxu0 0.0
      %462 = vmatpush1.msra.mxu0 0.0
      %463 = vmatprep.subr.mxu0 0.0
      %464 = vmatpush1.msra.mxu0 0.0
      %465 = vmatprep.subr.mxu0 0.0
      %466 = vmatpush1.msra.mxu0 0.0
      %467 = vmatprep.subr.mxu0 0.0
      %468 = vmatpush1.msra.mxu0 0.0
      %469 = vmatprep.subr.mxu0 0.0
      %470 = vmatpush1.msra.mxu0 0.0
      %471 = vmatprep.subr.mxu0 0.0
      %472 = vmatpush1.msra.mxu0 0.0
      %473 = vmatprep.subr.mxu0 0.0
      %474 = vmatpush1.msra.mxu0 0.0
      %475 = vmatprep.subr.mxu0 0.0
      %476 = vmatpush1.msra.mxu0 0.0
      %477 = vmatprep.subr.mxu0 0.0
      %478 = vmatpush1.msra.mxu0 0.0
      %479 = vmatprep.subr.mxu0 0.0
      %480 = vmatpush1.msra.mxu0 0.0
      %481 = vmatprep.subr.mxu0 0.0
      %482 = vmatpush1.msra.mxu0 0.0
      %483 = vmatprep.subr.mxu0 0.0
      %484 = vmatpush1.msra.mxu0 0.0
      %485 = vmatprep.subr.mxu0 0.0
      %486 = vmatpush1.msra.mxu0 0.0
      %487 = vmatprep.subr.mxu0 0.0
      %488 = vmatpush1.msra.mxu0 0.0
      %489 = vmatprep.subr.mxu0 0.0
      %490 = vmatpush1.msra.mxu0 0.0
      %491 = vmatprep.subr.mxu0 0.0
      %492 = vmatpush1.msra.mxu0 0.0
      %493 = vmatprep.subr.mxu0 0.0
      %494 = vmatpush1.msra.mxu0 0.0
      %495 = vmatprep.subr.mxu0 0.0
      %496 = vmatpush1.msra.mxu0 0.0
      %497 = vmatprep.subr.mxu0 0.0
      %498 = vmatpush1.msra.mxu0 0.0
      %499 = vmatprep.subr.mxu0 0.0
      %500 = vmatpush1.msra.mxu0 0.0
      %501 = vmatprep.subr.mxu0 0.0
      %502 = vmatpush1.msra.mxu0 0.0
      %503 = vmatprep.subr.mxu0 0.0
      %504 = vmatpush1.msra.mxu0 0.0
      %505 = vmatprep.subr.mxu0 0.0
      %506 = vmatpush1.msra.mxu0 0.0
      %507 = vmatprep.subr.mxu0 0.0
      %508 = vmatpush1.msra.mxu0 0.0
      %509 = vmatprep.subr.mxu0 0.0
      %510 = vmatpush1.msra.mxu0 0.0
      %511 = vmatprep.subr.mxu0 0.0
      %512 = vmatpush1.msra.mxu0 0.0
      %513 = vmatprep.subr.mxu0 0.0
      %514 = vmatpush1.msra.mxu0 0.0
      %515 = vmatprep.subr.mxu0 0.0
      %516 = vmatpush1.msra.mxu0 0.0
      %517 = vmatprep.subr.mxu0 0.0
      %518 = vmatpush1.msra.mxu0 0.0
      %519 = vmatprep.subr.mxu0 0.0
      %520 = vmatpush1.msra.mxu0 0.0
      %521 = vmatprep.mubr.f32.mxu0 0.0
      %522 = vmatmul.mubr.f32.gmra.mrb[0].mxu0 %v443
      %v523 = vpop.f32.mrb[0].mxu0
      %v524 = vadd.f32 0.0, %v523
      %v525 = vpop.f32.mrb[0].mxu0
      %526 = vmatprep.mubr.f32.mxu0 0.0
      %527 = vmatmul.mubr.f32.gmra.mrb[0].mxu0 %v446
      %v528 = vpop.f32.mrb[0].mxu0
      %v529 = vadd.f32 0.0, %v528
      %v530 = vpop.f32.mrb[0].mxu0
      %531 = vmatprep.mubr.f32.mxu0 0.0
      %532 = vmatmul.mubr.f32.gmra.mrb[0].mxu0 %v449
      %v533 = vpop.f32.mrb[0].mxu0
      %v534 = vadd.f32 0.0, %v533
      %v535 = vpop.f32.mrb[0].mxu0
      %536 = vmatprep.mubr.f32.mxu0 0.0
      %537 = vmatmul.mubr.f32.gmra.mrb[0].mxu0 %v452
      %v538 = vpop.f32.mrb[0].mxu0
      %v539 = vadd.f32 0.0, %v538
      %v540 = vpop.f32.mrb[0].mxu0
      %541 = vmatprep.mubr.f32.mxu0 0.0
      %542 = vmatmul.mubr.f32.gmra.mrb[0].mxu0 %v455
      %v543 = vpop.f32.mrb[0].mxu0
      %v544 = vadd.f32 0.0, %v543
      %v545 = vpop.f32.mrb[0].mxu0
      %546 = vdwg.mxu0
      %547 = vmatprep.subr.mxu0 0.0
      %548 = vmatpush1.msra.mxu0 %v407
      %549 = vmatprep.subr.mxu0 0.0
      %550 = vmatpush1.msra.mxu0 %v412
      %551 = vmatprep.subr.mxu0 0.0
      %552 = vmatpush1.msra.mxu0 0.0
      %553 = vmatprep.subr.mxu0 0.0
      %554 = vmatpush1.msra.mxu0 0.0
      %555 = vmatprep.subr.mxu0 0.0
      %556 = vmatpush1.msra.mxu0 0.0
      %557 = vmatprep.subr.mxu0 0.0
      %558 = vmatpush1.msra.mxu0 0.0
      %559 = vmatprep.subr.mxu0 0.0
      %560 = vmatpush1.msra.mxu0 0.0
      %561 = vmatprep.subr.mxu0 0.0
      %562 = vmatpush1.msra.mxu0 0.0
      %563 = vmatprep.subr.mxu0 0.0
      %564 = vmatpush1.msra.mxu0 0.0
      %565 = vmatprep.subr.mxu0 0.0
      %566 = vmatpush1.msra.mxu0 0.0
      %567 = vmatprep.subr.mxu0 0.0
      %568 = vmatpush1.msra.mxu0 0.0
      %569 = vmatprep.subr.mxu0 0.0
      %570 = vmatpush1.msra.mxu0 0.0
      %571 = vmatprep.subr.mxu0 0.0
      %572 = vmatpush1.msra.mxu0 0.0
      %573 = vmatprep.subr.mxu0 0.0
      %574 = vmatpush1.msra.mxu0 0.0
      %575 = vmatprep.subr.mxu0 0.0
      %576 = vmatpush1.msra.mxu0 0.0
      %577 = vmatprep.subr.mxu0 0.0
      %578 = vmatpush1.msra.mxu0 0.0
      %579 = vmatprep.subr.mxu0 0.0
      %580 = vmatpush1.msra.mxu0 0.0
      %581 = vmatprep.subr.mxu0 0.0
      %582 = vmatpush1.msra.mxu0 0.0
      %583 = vmatprep.subr.mxu0 0.0
      %584 = vmatpush1.msra.mxu0 0.0
      %585 = vmatprep.subr.mxu0 0.0
      %586 = vmatpush1.msra.mxu0 0.0
      %587 = vmatprep.subr.mxu0 0.0
      %588 = vmatpush1.msra.mxu0 0.0
      %589 = vmatprep.subr.mxu0 0.0
      %590 = vmatpush1.msra.mxu0 0.0
      %591 = vmatprep.subr.mxu0 0.0
      %592 = vmatpush1.msra.mxu0 0.0
      %593 = vmatprep.subr.mxu0 0.0
      %594 = vmatpush1.msra.mxu0 0.0
      %595 = vmatprep.subr.mxu0 0.0
      %596 = vmatpush1.msra.mxu0 0.0
      %597 = vmatprep.subr.mxu0 0.0
      %598 = vmatpush1.msra.mxu0 0.0
      %599 = vmatprep.subr.mxu0 0.0
      %600 = vmatpush1.msra.mxu0 0.0
      %601 = vmatprep.subr.mxu0 0.0
      %602 = vmatpush1.msra.mxu0 0.0
      %603 = vmatprep.subr.mxu0 0.0
      %604 = vmatpush1.msra.mxu0 0.0
      %605 = vmatprep.subr.mxu0 0.0
      %606 = vmatpush1.msra.mxu0 0.0
      %607 = vmatprep.subr.mxu0 0.0
      %608 = vmatpush1.msra.mxu0 0.0
      %609 = vmatprep.subr.mxu0 0.0
      %610 = vmatpush1.msra.mxu0 0.0
      %611 = vmatprep.mubr.f32.mxu0 0.0
      %612 = vmatmul.mubr.f32.gmra.mrb[0].mxu0 %v443
      %v613 = vpop.f32.mrb[0].mxu0
      %v614 = vadd.f32 0.0, %v613
      %v615 = vpop.f32.mrb[0].mxu0
      %616 = vmatprep.mubr.f32.mxu0 0.0
      %617 = vmatmul.mubr.f32.gmra.mrb[0].mxu0 %v446
      %v618 = vpop.f32.mrb[0].mxu0
      %v619 = vadd.f32 0.0, %v618
      %v620 = vpop.f32.mrb[0].mxu0
      %621 = vmatprep.mubr.f32.mxu0 0.0
      %622 = vmatmul.mubr.f32.gmra.mrb[0].mxu0 %v449
      %v623 = vpop.f32.mrb[0].mxu0
      %v624 = vadd.f32 0.0, %v623
      %v625 = vpop.f32.mrb[0].mxu0
      %626 = vmatprep.mubr.f32.mxu0 0.0
      %627 = vmatmul.mubr.f32.gmra.mrb[0].mxu0 %v452
      %v628 = vpop.f32.mrb[0].mxu0
      %v629 = vadd.f32 0.0, %v628
      %v630 = vpop.f32.mrb[0].mxu0
      %631 = vmatprep.mubr.f32.mxu0 0.0
      %632 = vmatmul.mubr.f32.gmra.mrb[0].mxu0 %v455
      %v633 = vpop.f32.mrb[0].mxu0
      %v634 = vadd.f32 0.0, %v633
      %v635 = vpop.f32.mrb[0].mxu0
      %636 = vdwg.mxu0
      %637 = vmatprep.subr.mxu0 0.0
      %638 = vmatpush1.msra.mxu0 %v417
      %639 = vmatprep.subr.mxu0 0.0
      %640 = vmatpush1.msra.mxu0 %v422
      %641 = vmatprep.subr.mxu0 0.0
      %642 = vmatpush1.msra.mxu0 0.0
      %643 = vmatprep.subr.mxu0 0.0
      %644 = vmatpush1.msra.mxu0 0.0
      %645 = vmatprep.subr.mxu0 0.0
      %646 = vmatpush1.msra.mxu0 0.0
      %647 = vmatprep.subr.mxu0 0.0
      %648 = vmatpush1.msra.mxu0 0.0
      %649 = vmatprep.subr.mxu0 0.0
      %650 = vmatpush1.msra.mxu0 0.0
      %651 = vmatprep.subr.mxu0 0.0
      %652 = vmatpush1.msra.mxu0 0.0
      %653 = vmatprep.subr.mxu0 0.0
      %654 = vmatpush1.msra.mxu0 0.0
      %655 = vmatprep.subr.mxu0 0.0
      %656 = vmatpush1.msra.mxu0 0.0
      %657 = vmatprep.subr.mxu0 0.0
      %658 = vmatpush1.msra.mxu0 0.0
      %659 = vmatprep.subr.mxu0 0.0
      %660 = vmatpush1.msra.mxu0 0.0
      %661 = vmatprep.subr.mxu0 0.0
      %662 = vmatpush1.msra.mxu0 0.0
      %663 = vmatprep.subr.mxu0 0.0
      %664 = vmatpush1.msra.mxu0 0.0
      %665 = vmatprep.subr.mxu0 0.0
      %666 = vmatpush1.msra.mxu0 0.0
      %667 = vmatprep.subr.mxu0 0.0
      %668 = vmatpush1.msra.mxu0 0.0
      %669 = vmatprep.subr.mxu0 0.0
      %670 = vmatpush1.msra.mxu0 0.0
      %671 = vmatprep.subr.mxu0 0.0
      %672 = vmatpush1.msra.mxu0 0.0
      %673 = vmatprep.subr.mxu0 0.0
      %674 = vmatpush1.msra.mxu0 0.0
      %675 = vmatprep.subr.mxu0 0.0
      %676 = vmatpush1.msra.mxu0 0.0
      %677 = vmatprep.subr.mxu0 0.0
      %678 = vmatpush1.msra.mxu0 0.0
      %679 = vmatprep.subr.mxu0 0.0
      %680 = vmatpush1.msra.mxu0 0.0
      %681 = vmatprep.subr.mxu0 0.0
      %682 = vmatpush1.msra.mxu0 0.0
      %683 = vmatprep.subr.mxu0 0.0
      %684 = vmatpush1.msra.mxu0 0.0
      %685 = vmatprep.subr.mxu0 0.0
      %686 = vmatpush1.msra.mxu0 0.0
      %687 = vmatprep.subr.mxu0 0.0
      %688 = vmatpush1.msra.mxu0 0.0
      %689 = vmatprep.subr.mxu0 0.0
      %690 = vmatpush1.msra.mxu0 0.0
      %691 = vmatprep.subr.mxu0 0.0
      %692 = vmatpush1.msra.mxu0 0.0
      %693 = vmatprep.subr.mxu0 0.0
      %694 = vmatpush1.msra.mxu0 0.0
      %695 = vmatprep.subr.mxu0 0.0
      %696 = vmatpush1.msra.mxu0 0.0
      %697 = vmatprep.subr.mxu0 0.0
      %698 = vmatpush1.msra.mxu0 0.0
      %699 = vmatprep.subr.mxu0 0.0
      %700 = vmatpush1.msra.mxu0 0.0
      %701 = vmatprep.mubr.f32.mxu0 0.0
      %702 = vmatmul.mubr.f32.gmra.mrb[0].mxu0 %v443
      %v703 = vpop.f32.mrb[0].mxu0
      %v704 = vadd.f32 0.0, %v703
      %v705 = vpop.f32.mrb[0].mxu0
      %706 = vmatprep.mubr.f32.mxu0 0.0
      %707 = vmatmul.mubr.f32.gmra.mrb[0].mxu0 %v446
      %v708 = vpop.f32.mrb[0].mxu0
      %v709 = vadd.f32 0.0, %v708
      %v710 = vpop.f32.mrb[0].mxu0
      %711 = vmatprep.mubr.f32.mxu0 0.0
      %712 = vmatmul.mubr.f32.gmra.mrb[0].mxu0 %v449
      %v713 = vpop.f32.mrb[0].mxu0
      %v714 = vadd.f32 0.0, %v713
      %v715 = vpop.f32.mrb[0].mxu0
      %716 = vmatprep.mubr.f32.mxu0 0.0
      %717 = vmatmul.mubr.f32.gmra.mrb[0].mxu0 %v452
      %v718 = vpop.f32.mrb[0].mxu0
      %v719 = vadd.f32 0.0, %v718
      %v720 = vpop.f32.mrb[0].mxu0
      %721 = vmatprep.mubr.f32.mxu0 0.0
      %722 = vmatmul.mubr.f32.gmra.mrb[0].mxu0 %v455
      %v723 = vpop.f32.mrb[0].mxu0
      %v724 = vadd.f32 0.0, %v723
      %v725 = vpop.f32.mrb[0].mxu0
      %726 = vdwg.mxu0
      %727 = vmatprep.subr.mxu0 0.0
      %728 = vmatpush1.msra.mxu0 %v427
      %729 = vmatprep.subr.mxu0 0.0
      %730 = vmatpush1.msra.mxu0 %v432
      %731 = vmatprep.subr.mxu0 0.0
      %732 = vmatpush1.msra.mxu0 0.0
      %733 = vmatprep.subr.mxu0 0.0
      %734 = vmatpush1.msra.mxu0 0.0
      %735 = vmatprep.subr.mxu0 0.0
      %736 = vmatpush1.msra.mxu0 0.0
      %737 = vmatprep.subr.mxu0 0.0
      %738 = vmatpush1.msra.mxu0 0.0
      %739 = vmatprep.subr.mxu0 0.0
      %740 = vmatpush1.msra.mxu0 0.0
      %741 = vmatprep.subr.mxu0 0.0
      %742 = vmatpush1.msra.mxu0 0.0
      %743 = vmatprep.subr.mxu0 0.0
      %744 = vmatpush1.msra.mxu0 0.0
      %745 = vmatprep.subr.mxu0 0.0
      %746 = vmatpush1.msra.mxu0 0.0
      %747 = vmatprep.subr.mxu0 0.0
      %748 = vmatpush1.msra.mxu0 0.0
      %749 = vmatprep.subr.mxu0 0.0
      %750 = vmatpush1.msra.mxu0 0.0
      %751 = vmatprep.subr.mxu0 0.0
      %752 = vmatpush1.msra.mxu0 0.0
      %753 = vmatprep.subr.mxu0 0.0
      %754 = vmatpush1.msra.mxu0 0.0
      %755 = vmatprep.subr.mxu0 0.0
      %756 = vmatpush1.msra.mxu0 0.0
      %757 = vmatprep.subr.mxu0 0.0
      %758 = vmatpush1.msra.mxu0 0.0
      %759 = vmatprep.subr.mxu0 0.0
      %760 = vmatpush1.msra.mxu0 0.0
      %761 = vmatprep.subr.mxu0 0.0
      %762 = vmatpush1.msra.mxu0 0.0
      %763 = vmatprep.subr.mxu0 0.0
      %764 = vmatpush1.msra.mxu0 0.0
      %765 = vmatprep.subr.mxu0 0.0
      %766 = vmatpush1.msra.mxu0 0.0
      %767 = vmatprep.subr.mxu0 0.0
      %768 = vmatpush1.msra.mxu0 0.0
      %769 = vmatprep.subr.mxu0 0.0
      %770 = vmatpush1.msra.mxu0 0.0
      %771 = vmatprep.subr.mxu0 0.0
      %772 = vmatpush1.msra.mxu0 0.0
      %773 = vmatprep.subr.mxu0 0.0
      %774 = vmatpush1.msra.mxu0 0.0
      %775 = vmatprep.subr.mxu0 0.0
      %776 = vmatpush1.msra.mxu0 0.0
      %777 = vmatprep.subr.mxu0 0.0
      %778 = vmatpush1.msra.mxu0 0.0
      %779 = vmatprep.subr.mxu0 0.0
      %780 = vmatpush1.msra.mxu0 0.0
      %781 = vmatprep.subr.mxu0 0.0
      %782 = vmatpush1.msra.mxu0 0.0
      %783 = vmatprep.subr.mxu0 0.0
      %784 = vmatpush1.msra.mxu0 0.0
      %785 = vmatprep.subr.mxu0 0.0
      %786 = vmatpush1.msra.mxu0 0.0
      %787 = vmatprep.subr.mxu0 0.0
      %788 = vmatpush1.msra.mxu0 0.0
      %789 = vmatprep.subr.mxu0 0.0
      %790 = vmatpush1.msra.mxu0 0.0
      %791 = vmatprep.mubr.f32.mxu0 0.0
      %792 = vmatmul.mubr.f32.gmra.mrb[0].mxu0 %v443
      %v793 = vpop.f32.mrb[0].mxu0
      %v794 = vadd.f32 0.0, %v793
      %v795 = vpop.f32.mrb[0].mxu0
      %796 = vmatprep.mubr.f32.mxu0 0.0
      %797 = vmatmul.mubr.f32.gmra.mrb[0].mxu0 %v446
      %v798 = vpop.f32.mrb[0].mxu0
      %v799 = vadd.f32 0.0, %v798
      %v800 = vpop.f32.mrb[0].mxu0
      %801 = vmatprep.mubr.f32.mxu0 0.0
      %802 = vmatmul.mubr.f32.gmra.mrb[0].mxu0 %v449
      %v803 = vpop.f32.mrb[0].mxu0
      %v804 = vadd.f32 0.0, %v803
      %v805 = vpop.f32.mrb[0].mxu0
      %806 = vmatprep.mubr.f32.mxu0 0.0
      %807 = vmatmul.mubr.f32.gmra.mrb[0].mxu0 %v452
      %v808 = vpop.f32.mrb[0].mxu0
      %v809 = vadd.f32 0.0, %v808
      %v810 = vpop.f32.mrb[0].mxu0
      %811 = vmatprep.mubr.f32.mxu0 0.0
      %812 = vmatmul.mubr.f32.gmra.mrb[0].mxu0 %v455
      %v813 = vpop.f32.mrb[0].mxu0
      %v814 = vadd.f32 0.0, %v813
      %v815 = vpop.f32.mrb[0].mxu0
      %816 = vdwg.mxu0
      %v817 = vpack.c.bf16 %v529, %v524
      %v818 = vpack.c.bf16 %v539, %v534
      %v819 = vpack.c.bf16 %v544, %v544
      %v820 = vpack.c.bf16 %v619, %v614
      %v821 = vpack.c.bf16 %v629, %v624
      %v822 = vpack.c.bf16 %v634, %v634
      %v823 = vpack.c.bf16 %v709, %v704
      %v824 = vpack.c.bf16 %v719, %v714
      %v825 = vpack.c.bf16 %v724, %v724
      %v826 = vpack.c.bf16 %v799, %v794
      %v827 = vpack.c.bf16 %v809, %v804
      %v828 = vpack.c.bf16 %v814, %v814
      %837 = vrot.lane.b32.xlu0 %v817, 127
      %v838 = vpop.permute.xlu0 %837
      %839 = vrot.lane.b32.xlu0 %v818, 127
      %v840 = vpop.permute.xlu0 %839
      %841 = vrot.lane.b32.xlu0 %v820, 127
      %v842 = vpop.permute.xlu0 %841
      %843 = vrot.lane.b32.xlu0 %v821, 127
      %v844 = vpop.permute.xlu0 %843
      %845 = vrot.lane.b32.xlu0 %v823, 127
      %v846 = vpop.permute.xlu0 %845
      %847 = vrot.lane.b32.xlu0 %v824, 127
      %v848 = vpop.permute.xlu0 %847
      %849 = vrot.lane.b32.xlu0 %v826, 127
      %v850 = vpop.permute.xlu0 %849
      %851 = vrot.lane.b32.xlu0 %v827, 127
      %v852 = vpop.permute.xlu0 %851
      %853 = vrot.lane.b32.xlu0 %v817, 126
      %v854 = vpop.permute.xlu0 %853
      %855 = vrot.lane.b32.xlu0 %v818, 126
      %v856 = vpop.permute.xlu0 %855
      %857 = vrot.lane.b32.xlu0 %v820, 126
      %v858 = vpop.permute.xlu0 %857
      %859 = vrot.lane.b32.xlu0 %v821, 126
      %v860 = vpop.permute.xlu0 %859
      %861 = vrot.lane.b32.xlu0 %v823, 126
      %v862 = vpop.permute.xlu0 %861
      %863 = vrot.lane.b32.xlu0 %v824, 126
      %v864 = vpop.permute.xlu0 %863
      %865 = vrot.lane.b32.xlu0 %v826, 126
      %v866 = vpop.permute.xlu0 %865
      %867 = vrot.lane.b32.xlu0 %v827, 126
      %v868 = vpop.permute.xlu0 %867
      %vm869 = vsmask.f32 7424
      %v871 = vshrl.u32 %v817, 16
      %v873 = vshll.u32 %v817, 16
      %v875 = vrot.slane %v873, 1
      %v876 = vor.u32 %v871, %v875
      %v878 = vshll.u32 %v818, 16
      %v880 = vrot.slane %v878, 1
      %v881 = vsel %vm869, %v876, %v880
      %v882 = vshrl.u32 %v818, 16
      %v884 = vor.u32 %v882, %v880
      %v886 = vshll.u32 %v819, 16
      %v888 = vrot.slane %v886, 1
      %v889 = vsel %vm869, %v884, %v888
      %v891 = vshrl.u32 %v820, 16
      %v893 = vshll.u32 %v820, 16
      %v895 = vrot.slane %v893, 1
      %v896 = vor.u32 %v891, %v895
      %v898 = vshll.u32 %v821, 16
      %v900 = vrot.slane %v898, 1
      %v901 = vsel %vm869, %v896, %v900
      %v902 = vshrl.u32 %v821, 16
      %v904 = vor.u32 %v902, %v900
      %v906 = vshll.u32 %v822, 16
      %v908 = vrot.slane %v906, 1
      %v909 = vsel %vm869, %v904, %v908
      %v911 = vshrl.u32 %v823, 16
      %v913 = vshll.u32 %v823, 16
      %v915 = vrot.slane %v913, 1
      %v916 = vor.u32 %v911, %v915
      %v918 = vshll.u32 %v824, 16
      %v920 = vrot.slane %v918, 1
      %v921 = vsel %vm869, %v916, %v920
      %v922 = vshrl.u32 %v824, 16
      %v924 = vor.u32 %v922, %v920
      %v926 = vshll.u32 %v825, 16
      %v928 = vrot.slane %v926, 1
      %v929 = vsel %vm869, %v924, %v928
      %v931 = vshrl.u32 %v826, 16
      %v933 = vshll.u32 %v826, 16
      %v935 = vrot.slane %v933, 1
      %v936 = vor.u32 %v931, %v935
      %v938 = vshll.u32 %v827, 16
      %v940 = vrot.slane %v938, 1
      %v941 = vsel %vm869, %v936, %v940
      %v942 = vshrl.u32 %v827, 16
      %v944 = vor.u32 %v942, %v940
      %v946 = vshll.u32 %v828, 16
      %v948 = vrot.slane %v946, 1
      %v949 = vsel %vm869, %v944, %v948
      %950 = vrot.lane.b32.xlu0 %v881, 127
      %v951 = vpop.permute.xlu0 %950
      %952 = vrot.lane.b32.xlu0 %v889, 127
      %v953 = vpop.permute.xlu0 %952
      %954 = vrot.lane.b32.xlu0 %v901, 127
      %v955 = vpop.permute.xlu0 %954
      %956 = vrot.lane.b32.xlu0 %v909, 127
      %v957 = vpop.permute.xlu0 %956
      %958 = vrot.lane.b32.xlu0 %v921, 127
      %v959 = vpop.permute.xlu0 %958
      %960 = vrot.lane.b32.xlu0 %v929, 127
      %v961 = vpop.permute.xlu0 %960
      %962 = vrot.lane.b32.xlu0 %v941, 127
      %v963 = vpop.permute.xlu0 %962
      %964 = vrot.lane.b32.xlu0 %v949, 127
      %v965 = vpop.permute.xlu0 %964
      %966 = vrot.lane.b32.xlu0 %v881, 126
      %v967 = vpop.permute.xlu0 %966
      %968 = vrot.lane.b32.xlu0 %v889, 126
      %v969 = vpop.permute.xlu0 %968
      %970 = vrot.lane.b32.xlu0 %v901, 126
      %v971 = vpop.permute.xlu0 %970
      %972 = vrot.lane.b32.xlu0 %v909, 126
      %v973 = vpop.permute.xlu0 %972
      %974 = vrot.lane.b32.xlu0 %v921, 126
      %v975 = vpop.permute.xlu0 %974
      %976 = vrot.lane.b32.xlu0 %v929, 126
      %v977 = vpop.permute.xlu0 %976
      %978 = vrot.lane.b32.xlu0 %v941, 126
      %v979 = vpop.permute.xlu0 %978
      %980 = vrot.lane.b32.xlu0 %v949, 126
      %v981 = vpop.permute.xlu0 %980
      %vm986 = vcmask 1046528
      %v987 = vrot.slane %v817, 1
      %v988 = vrot.slane %v818, 1
      %v989 = vsel %vm986, %v987, %v988
      %v990 = vrot.slane %v819, 1
      %v991 = vsel %vm986, %v988, %v990
      %v992 = vrot.slane %v820, 1
      %v993 = vrot.slane %v821, 1
      %v994 = vsel %vm986, %v992, %v993
      %v995 = vrot.slane %v822, 1
      %v996 = vsel %vm986, %v993, %v995
      %v997 = vrot.slane %v823, 1
      %v998 = vrot.slane %v824, 1
      %v999 = vsel %vm986, %v997, %v998
      %v1000 = vrot.slane %v825, 1
      %v1001 = vsel %vm986, %v998, %v1000
      %v1002 = vrot.slane %v826, 1
      %v1003 = vrot.slane %v827, 1
      %v1004 = vsel %vm986, %v1002, %v1003
      %v1005 = vrot.slane %v828, 1
      %v1006 = vsel %vm986, %v1003, %v1005
      %1007 = vrot.lane.b32.xlu0 %v989, 127
      %v1008 = vpop.permute.xlu0 %1007
      %1009 = vrot.lane.b32.xlu0 %v991, 127
      %v1010 = vpop.permute.xlu0 %1009
      %1011 = vrot.lane.b32.xlu0 %v994, 127
      %v1012 = vpop.permute.xlu0 %1011
      %1013 = vrot.lane.b32.xlu0 %v996, 127
      %v1014 = vpop.permute.xlu0 %1013
      %1015 = vrot.lane.b32.xlu0 %v999, 127
      %v1016 = vpop.permute.xlu0 %1015
      %1017 = vrot.lane.b32.xlu0 %v1001, 127
      %v1018 = vpop.permute.xlu0 %1017
      %1019 = vrot.lane.b32.xlu0 %v1004, 127
      %v1020 = vpop.permute.xlu0 %1019
      %1021 = vrot.lane.b32.xlu0 %v1006, 127
      %v1022 = vpop.permute.xlu0 %1021
      %1023 = vrot.lane.b32.xlu0 %v989, 126
      %v1024 = vpop.permute.xlu0 %1023
      %1025 = vrot.lane.b32.xlu0 %v991, 126
      %v1026 = vpop.permute.xlu0 %1025
      %1027 = vrot.lane.b32.xlu0 %v994, 126
      %v1028 = vpop.permute.xlu0 %1027
      %1029 = vrot.lane.b32.xlu0 %v996, 126
      %v1030 = vpop.permute.xlu0 %1029
      %1031 = vrot.lane.b32.xlu0 %v999, 126
      %v1032 = vpop.permute.xlu0 %1031
      %1033 = vrot.lane.b32.xlu0 %v1001, 126
      %v1034 = vpop.permute.xlu0 %1033
      %1035 = vrot.lane.b32.xlu0 %v1004, 126
      %v1036 = vpop.permute.xlu0 %1035
      %1037 = vrot.lane.b32.xlu0 %v1006, 126
      %v1038 = vpop.permute.xlu0 %1037
      %v1039 = vpack.i.b16 %v820, %v817
      %v1041 = vpack.i.b16 %v891, %v871
      %v1043 = vpack.i.b16 %v826, %v823
      %v1045 = vpack.i.b16 %v931, %v911
      %v1049 = vpack.i.b16 %v842, %v838
      %v1051 = vshrl.u32 %v838, 16
      %v1052 = vshrl.u32 %v842, 16
      %v1053 = vpack.i.b16 %v1052, %v1051
      %v1057 = vpack.i.b16 %v850, %v846
      %v1059 = vshrl.u32 %v846, 16
      %v1060 = vshrl.u32 %v850, 16
      %v1061 = vpack.i.b16 %v1060, %v1059
      %v1065 = vpack.i.b16 %v858, %v854
      %v1067 = vshrl.u32 %v854, 16
      %v1068 = vshrl.u32 %v858, 16
      %v1069 = vpack.i.b16 %v1068, %v1067
      %v1073 = vpack.i.b16 %v866, %v862
      %v1075 = vshrl.u32 %v862, 16
      %v1076 = vshrl.u32 %v866, 16
      %v1077 = vpack.i.b16 %v1076, %v1075
      %v1081 = vpack.i.b16 %v901, %v881
      %v1083 = vshrl.u32 %v881, 16
      %v1084 = vshrl.u32 %v901, 16
      %v1085 = vpack.i.b16 %v1084, %v1083
      %v1089 = vpack.i.b16 %v941, %v921
      %v1091 = vshrl.u32 %v921, 16
      %v1092 = vshrl.u32 %v941, 16
      %v1093 = vpack.i.b16 %v1092, %v1091
      %v1097 = vpack.i.b16 %v955, %v951
      %v1099 = vshrl.u32 %v951, 16
      %v1100 = vshrl.u32 %v955, 16
      %v1101 = vpack.i.b16 %v1100, %v1099
      %v1105 = vpack.i.b16 %v963, %v959
      %v1107 = vshrl.u32 %v959, 16
      %v1108 = vshrl.u32 %v963, 16
      %v1109 = vpack.i.b16 %v1108, %v1107
      %v1113 = vpack.i.b16 %v971, %v967
      %v1115 = vshrl.u32 %v967, 16
      %v1116 = vshrl.u32 %v971, 16
      %v1117 = vpack.i.b16 %v1116, %v1115
      %v1121 = vpack.i.b16 %v979, %v975
      %v1123 = vshrl.u32 %v975, 16
      %v1124 = vshrl.u32 %v979, 16
      %v1125 = vpack.i.b16 %v1124, %v1123
      %v1129 = vpack.i.b16 %v994, %v989
      %v1131 = vshrl.u32 %v989, 16
      %v1132 = vshrl.u32 %v994, 16
      %v1133 = vpack.i.b16 %v1132, %v1131
      %v1137 = vpack.i.b16 %v1004, %v999
      %v1139 = vshrl.u32 %v999, 16
      %v1140 = vshrl.u32 %v1004, 16
      %v1141 = vpack.i.b16 %v1140, %v1139
      %v1145 = vpack.i.b16 %v1012, %v1008
      %v1147 = vshrl.u32 %v1008, 16
      %v1148 = vshrl.u32 %v1012, 16
      %v1149 = vpack.i.b16 %v1148, %v1147
      %v1153 = vpack.i.b16 %v1020, %v1016
      %v1155 = vshrl.u32 %v1016, 16
      %v1156 = vshrl.u32 %v1020, 16
      %v1157 = vpack.i.b16 %v1156, %v1155
      %v1161 = vpack.i.b16 %v1028, %v1024
      %v1163 = vshrl.u32 %v1024, 16
      %v1164 = vshrl.u32 %v1028, 16
      %v1165 = vpack.i.b16 %v1164, %v1163
      %v1169 = vpack.i.b16 %v1036, %v1032
      %v1171 = vshrl.u32 %v1032, 16
      %v1172 = vshrl.u32 %v1036, 16
      %v1173 = vpack.i.b16 %v1172, %v1171
      %v1176 = vpack.i.b16 0, 0
      %v1178 = vshrl.u32 0, 16
      %v1179 = vpack.i.b16 %v1178, %v1178
      %v1181 = vpack.i.b16 %v821, %v818
      %v1183 = vpack.i.b16 %v902, %v882
      %v1185 = vpack.i.b16 %v827, %v824
      %v1187 = vpack.i.b16 %v942, %v922
      %v1191 = vpack.i.b16 %v844, %v840
      %v1193 = vshrl.u32 %v840, 16
      %v1194 = vshrl.u32 %v844, 16
      %v1195 = vpack.i.b16 %v1194, %v1193
      %v1199 = vpack.i.b16 %v852, %v848
      %v1201 = vshrl.u32 %v848, 16
      %v1202 = vshrl.u32 %v852, 16
      %v1203 = vpack.i.b16 %v1202, %v1201
      %v1207 = vpack.i.b16 %v860, %v856
      %v1209 = vshrl.u32 %v856, 16
      %v1210 = vshrl.u32 %v860, 16
      %v1211 = vpack.i.b16 %v1210, %v1209
      %v1215 = vpack.i.b16 %v868, %v864
      %v1217 = vshrl.u32 %v864, 16
      %v1218 = vshrl.u32 %v868, 16
      %v1219 = vpack.i.b16 %v1218, %v1217
      %v1223 = vpack.i.b16 %v909, %v889
      %v1225 = vshrl.u32 %v889, 16
      %v1226 = vshrl.u32 %v909, 16
      %v1227 = vpack.i.b16 %v1226, %v1225
      %v1231 = vpack.i.b16 %v949, %v929
      %v1233 = vshrl.u32 %v929, 16
      %v1234 = vshrl.u32 %v949, 16
      %v1235 = vpack.i.b16 %v1234, %v1233
      %v1239 = vpack.i.b16 %v957, %v953
      %v1241 = vshrl.u32 %v953, 16
      %v1242 = vshrl.u32 %v957, 16
      %v1243 = vpack.i.b16 %v1242, %v1241
      %v1247 = vpack.i.b16 %v965, %v961
      %v1249 = vshrl.u32 %v961, 16
      %v1250 = vshrl.u32 %v965, 16
      %v1251 = vpack.i.b16 %v1250, %v1249
      %v1255 = vpack.i.b16 %v973, %v969
      %v1257 = vshrl.u32 %v969, 16
      %v1258 = vshrl.u32 %v973, 16
      %v1259 = vpack.i.b16 %v1258, %v1257
      %v1263 = vpack.i.b16 %v981, %v977
      %v1265 = vshrl.u32 %v977, 16
      %v1266 = vshrl.u32 %v981, 16
      %v1267 = vpack.i.b16 %v1266, %v1265
      %v1271 = vpack.i.b16 %v996, %v991
      %v1273 = vshrl.u32 %v991, 16
      %v1274 = vshrl.u32 %v996, 16
      %v1275 = vpack.i.b16 %v1274, %v1273
      %v1279 = vpack.i.b16 %v1006, %v1001
      %v1281 = vshrl.u32 %v1001, 16
      %v1282 = vshrl.u32 %v1006, 16
      %v1283 = vpack.i.b16 %v1282, %v1281
      %v1287 = vpack.i.b16 %v1014, %v1010
      %v1289 = vshrl.u32 %v1010, 16
      %v1290 = vshrl.u32 %v1014, 16
      %v1291 = vpack.i.b16 %v1290, %v1289
      %v1295 = vpack.i.b16 %v1022, %v1018
      %v1297 = vshrl.u32 %v1018, 16
      %v1298 = vshrl.u32 %v1022, 16
      %v1299 = vpack.i.b16 %v1298, %v1297
      %v1303 = vpack.i.b16 %v1030, %v1026
      %v1305 = vshrl.u32 %v1026, 16
      %v1306 = vshrl.u32 %v1030, 16
      %v1307 = vpack.i.b16 %v1306, %v1305
      %v1311 = vpack.i.b16 %v1038, %v1034
      %v1313 = vshrl.u32 %v1034, 16
      %v1314 = vshrl.u32 %v1038, 16
      %v1315 = vpack.i.b16 %v1314, %v1313
      %v1317 = vcombine.low %v1039, %v1049
      %v1318 = vcombine.high %v1039, %v1049
      %v1320 = vunpack.c.l.s4 1983009808
      %v1321 = vunpack.c.0.s8 %v1320
      %v1322 = vlaneseq
      %v1323 = vshrl.u32 %v1322, 7
      %v1324 = vsub.s32 %v1321, %v1323
      %v1325 = vrot.slane %v1317, %v1324
      %v1327 = vunpack.c.l.s4 1983009808
      %v1328 = vunpack.c.0.s8 %v1327
      %v1329 = vlaneseq
      %v1330 = vshrl.u32 %v1329, 7
      %v1331 = vsub.s32 %v1328, %v1330
      %v1332 = vrot.slane %v1318, %v1331
      %v1333 = vcombine.low %v1043, %v1057
      %v1334 = vcombine.high %v1043, %v1057
      %v1336 = vunpack.c.l.s4 1983009808
      %v1337 = vunpack.c.0.s8 %v1336
      %v1338 = vlaneseq
      %v1339 = vshrl.u32 %v1338, 7
      %v1340 = vsub.s32 %v1337, %v1339
      %v1341 = vrot.slane %v1333, %v1340
      %v1343 = vunpack.c.l.s4 1983009808
      %v1344 = vunpack.c.0.s8 %v1343
      %v1345 = vlaneseq
      %v1346 = vshrl.u32 %v1345, 7
      %v1347 = vsub.s32 %v1344, %v1346
      %v1348 = vrot.slane %v1334, %v1347
      %v1349 = vcombine.low %v1065, %v1081
      %v1350 = vcombine.high %v1065, %v1081
      %v1352 = vunpack.c.l.s4 1983009808
      %v1353 = vunpack.c.0.s8 %v1352
      %v1354 = vlaneseq
      %v1355 = vshrl.u32 %v1354, 7
      %v1356 = vsub.s32 %v1353, %v1355
      %v1357 = vrot.slane %v1349, %v1356
      %v1359 = vunpack.c.l.s4 1983009808
      %v1360 = vunpack.c.0.s8 %v1359
      %v1361 = vlaneseq
      %v1362 = vshrl.u32 %v1361, 7
      %v1363 = vsub.s32 %v1360, %v1362
      %v1364 = vrot.slane %v1350, %v1363
      %v1365 = vcombine.low %v1073, %v1089
      %v1366 = vcombine.high %v1073, %v1089
      %v1368 = vunpack.c.l.s4 1983009808
      %v1369 = vunpack.c.0.s8 %v1368
      %v1370 = vlaneseq
      %v1371 = vshrl.u32 %v1370, 7
      %v1372 = vsub.s32 %v1369, %v1371
      %v1373 = vrot.slane %v1365, %v1372
      %v1375 = vunpack.c.l.s4 1983009808
      %v1376 = vunpack.c.0.s8 %v1375
      %v1377 = vlaneseq
      %v1378 = vshrl.u32 %v1377, 7
      %v1379 = vsub.s32 %v1376, %v1378
      %v1380 = vrot.slane %v1366, %v1379
      %v1381 = vcombine.low %v1325, %v1341
      %v1382 = vcombine.high %v1325, %v1341
      %v1384 = vunpack.c.l.s4 1934713408
      %v1385 = vunpack.c.0.s8 %v1384
      %v1386 = vlaneseq
      %v1387 = vshrl.u32 %v1386, 7
      %v1388 = vsub.s32 %v1385, %v1387
      %v1389 = vrot.slane %v1381, %v1388
      %v1391 = vunpack.c.l.s4 1934713408
      %v1392 = vunpack.c.0.s8 %v1391
      %v1393 = vlaneseq
      %v1394 = vshrl.u32 %v1393, 7
      %v1395 = vsub.s32 %v1392, %v1394
      %v1396 = vrot.slane %v1382, %v1395
      %v1397 = vcombine.low %v1332, %v1348
      %v1398 = vcombine.high %v1332, %v1348
      %v1400 = vunpack.c.l.s4 1934713408
      %v1401 = vunpack.c.0.s8 %v1400
      %v1402 = vlaneseq
      %v1403 = vshrl.u32 %v1402, 7
      %v1404 = vsub.s32 %v1401, %v1403
      %v1405 = vrot.slane %v1397, %v1404
      %v1407 = vunpack.c.l.s4 1934713408
      %v1408 = vunpack.c.0.s8 %v1407
      %v1409 = vlaneseq
      %v1410 = vshrl.u32 %v1409, 7
      %v1411 = vsub.s32 %v1408, %v1410
      %v1412 = vrot.slane %v1398, %v1411
      %v1413 = vcombine.low %v1357, %v1373
      %v1414 = vcombine.high %v1357, %v1373
      %v1416 = vunpack.c.l.s4 1934713408
      %v1417 = vunpack.c.0.s8 %v1416
      %v1418 = vlaneseq
      %v1419 = vshrl.u32 %v1418, 7
      %v1420 = vsub.s32 %v1417, %v1419
      %v1421 = vrot.slane %v1413, %v1420
      %v1423 = vunpack.c.l.s4 1934713408
      %v1424 = vunpack.c.0.s8 %v1423
      %v1425 = vlaneseq
      %v1426 = vshrl.u32 %v1425, 7
      %v1427 = vsub.s32 %v1424, %v1426
      %v1428 = vrot.slane %v1414, %v1427
      %v1429 = vcombine.low %v1364, %v1380
      %v1430 = vcombine.high %v1364, %v1380
      %v1432 = vunpack.c.l.s4 1934713408
      %v1433 = vunpack.c.0.s8 %v1432
      %v1434 = vlaneseq
      %v1435 = vshrl.u32 %v1434, 7
      %v1436 = vsub.s32 %v1433, %v1435
      %v1437 = vrot.slane %v1429, %v1436
      %v1439 = vunpack.c.l.s4 1934713408
      %v1440 = vunpack.c.0.s8 %v1439
      %v1441 = vlaneseq
      %v1442 = vshrl.u32 %v1441, 7
      %v1443 = vsub.s32 %v1440, %v1442
      %v1444 = vrot.slane %v1430, %v1443
      %v1445 = vcombine.low %v1389, %v1421
      %v1446 = vcombine.high %v1389, %v1421
      %v1447 = vcombine.low %v1396, %v1428
      %v1448 = vcombine.high %v1396, %v1428
      %v1449 = vcombine.low %v1405, %v1437
      %v1450 = vcombine.high %v1405, %v1437
      %v1451 = vcombine.low %v1412, %v1444
      %v1452 = vcombine.high %v1412, %v1444
      %v1453 = vcombine.low %v1041, %v1053
      %v1454 = vcombine.high %v1041, %v1053
      %v1456 = vunpack.c.l.s4 1983009808
      %v1457 = vunpack.c.0.s8 %v1456
      %v1458 = vlaneseq
      %v1459 = vshrl.u32 %v1458, 7
      %v1460 = vsub.s32 %v1457, %v1459
      %v1461 = vrot.slane %v1453, %v1460
      %v1463 = vunpack.c.l.s4 1983009808
      %v1464 = vunpack.c.0.s8 %v1463
      %v1465 = vlaneseq
      %v1466 = vshrl.u32 %v1465, 7
      %v1467 = vsub.s32 %v1464, %v1466
      %v1468 = vrot.slane %v1454, %v1467
      %v1469 = vcombine.low %v1045, %v1061
      %v1470 = vcombine.high %v1045, %v1061
      %v1472 = vunpack.c.l.s4 1983009808
      %v1473 = vunpack.c.0.s8 %v1472
      %v1474 = vlaneseq
      %v1475 = vshrl.u32 %v1474, 7
      %v1476 = vsub.s32 %v1473, %v1475
      %v1477 = vrot.slane %v1469, %v1476
      %v1479 = vunpack.c.l.s4 1983009808
      %v1480 = vunpack.c.0.s8 %v1479
      %v1481 = vlaneseq
      %v1482 = vshrl.u32 %v1481, 7
      %v1483 = vsub.s32 %v1480, %v1482
      %v1484 = vrot.slane %v1470, %v1483
      %v1485 = vcombine.low %v1069, %v1085
      %v1486 = vcombine.high %v1069, %v1085
      %v1488 = vunpack.c.l.s4 1983009808
      %v1489 = vunpack.c.0.s8 %v1488
      %v1490 = vlaneseq
      %v1491 = vshrl.u32 %v1490, 7
      %v1492 = vsub.s32 %v1489, %v1491
      %v1493 = vrot.slane %v1485, %v1492
      %v1495 = vunpack.c.l.s4 1983009808
      %v1496 = vunpack.c.0.s8 %v1495
      %v1497 = vlaneseq
      %v1498 = vshrl.u32 %v1497, 7
      %v1499 = vsub.s32 %v1496, %v1498
      %v1500 = vrot.slane %v1486, %v1499
      %v1501 = vcombine.low %v1077, %v1093
      %v1502 = vcombine.high %v1077, %v1093
      %v1504 = vunpack.c.l.s4 1983009808
      %v1505 = vunpack.c.0.s8 %v1504
      %v1506 = vlaneseq
      %v1507 = vshrl.u32 %v1506, 7
      %v1508 = vsub.s32 %v1505, %v1507
      %v1509 = vrot.slane %v1501, %v1508
      %v1511 = vunpack.c.l.s4 1983009808
      %v1512 = vunpack.c.0.s8 %v1511
      %v1513 = vlaneseq
      %v1514 = vshrl.u32 %v1513, 7
      %v1515 = vsub.s32 %v1512, %v1514
      %v1516 = vrot.slane %v1502, %v1515
      %v1517 = vcombine.low %v1461, %v1477
      %v1518 = vcombine.high %v1461, %v1477
      %v1520 = vunpack.c.l.s4 1934713408
      %v1521 = vunpack.c.0.s8 %v1520
      %v1522 = vlaneseq
      %v1523 = vshrl.u32 %v1522, 7
      %v1524 = vsub.s32 %v1521, %v1523
      %v1525 = vrot.slane %v1517, %v1524
      %v1527 = vunpack.c.l.s4 1934713408
      %v1528 = vunpack.c.0.s8 %v1527
      %v1529 = vlaneseq
      %v1530 = vshrl.u32 %v1529, 7
      %v1531 = vsub.s32 %v1528, %v1530
      %v1532 = vrot.slane %v1518, %v1531
      %v1533 = vcombine.low %v1468, %v1484
      %v1534 = vcombine.high %v1468, %v1484
      %v1536 = vunpack.c.l.s4 1934713408
      %v1537 = vunpack.c.0.s8 %v1536
      %v1538 = vlaneseq
      %v1539 = vshrl.u32 %v1538, 7
      %v1540 = vsub.s32 %v1537, %v1539
      %v1541 = vrot.slane %v1533, %v1540
      %v1543 = vunpack.c.l.s4 1934713408
      %v1544 = vunpack.c.0.s8 %v1543
      %v1545 = vlaneseq
      %v1546 = vshrl.u32 %v1545, 7
      %v1547 = vsub.s32 %v1544, %v1546
      %v1548 = vrot.slane %v1534, %v1547
      %v1549 = vcombine.low %v1493, %v1509
      %v1550 = vcombine.high %v1493, %v1509
      %v1552 = vunpack.c.l.s4 1934713408
      %v1553 = vunpack.c.0.s8 %v1552
      %v1554 = vlaneseq
      %v1555 = vshrl.u32 %v1554, 7
      %v1556 = vsub.s32 %v1553, %v1555
      %v1557 = vrot.slane %v1549, %v1556
      %v1559 = vunpack.c.l.s4 1934713408
      %v1560 = vunpack.c.0.s8 %v1559
      %v1561 = vlaneseq
      %v1562 = vshrl.u32 %v1561, 7
      %v1563 = vsub.s32 %v1560, %v1562
      %v1564 = vrot.slane %v1550, %v1563
      %v1565 = vcombine.low %v1500, %v1516
      %v1566 = vcombine.high %v1500, %v1516
      %v1568 = vunpack.c.l.s4 1934713408
      %v1569 = vunpack.c.0.s8 %v1568
      %v1570 = vlaneseq
      %v1571 = vshrl.u32 %v1570, 7
      %v1572 = vsub.s32 %v1569, %v1571
      %v1573 = vrot.slane %v1565, %v1572
      %v1575 = vunpack.c.l.s4 1934713408
      %v1576 = vunpack.c.0.s8 %v1575
      %v1577 = vlaneseq
      %v1578 = vshrl.u32 %v1577, 7
      %v1579 = vsub.s32 %v1576, %v1578
      %v1580 = vrot.slane %v1566, %v1579
      %v1581 = vcombine.low %v1525, %v1557
      %v1582 = vcombine.high %v1525, %v1557
      %v1583 = vcombine.low %v1532, %v1564
      %v1584 = vcombine.high %v1532, %v1564
      %v1585 = vcombine.low %v1541, %v1573
      %v1586 = vcombine.high %v1541, %v1573
      %v1587 = vcombine.low %v1548, %v1580
      %v1588 = vcombine.high %v1548, %v1580
      %v1589 = vcombine.low %v1097, %v1113
      %v1590 = vcombine.high %v1097, %v1113
      %v1592 = vunpack.c.l.s4 1983009808
      %v1593 = vunpack.c.0.s8 %v1592
      %v1594 = vlaneseq
      %v1595 = vshrl.u32 %v1594, 7
      %v1596 = vsub.s32 %v1593, %v1595
      %v1597 = vrot.slane %v1589, %v1596
      %v1599 = vunpack.c.l.s4 1983009808
      %v1600 = vunpack.c.0.s8 %v1599
      %v1601 = vlaneseq
      %v1602 = vshrl.u32 %v1601, 7
      %v1603 = vsub.s32 %v1600, %v1602
      %v1604 = vrot.slane %v1590, %v1603
      %v1605 = vcombine.low %v1105, %v1121
      %v1606 = vcombine.high %v1105, %v1121
      %v1608 = vunpack.c.l.s4 1983009808
      %v1609 = vunpack.c.0.s8 %v1608
      %v1610 = vlaneseq
      %v1611 = vshrl.u32 %v1610, 7
      %v1612 = vsub.s32 %v1609, %v1611
      %v1613 = vrot.slane %v1605, %v1612
      %v1615 = vunpack.c.l.s4 1983009808
      %v1616 = vunpack.c.0.s8 %v1615
      %v1617 = vlaneseq
      %v1618 = vshrl.u32 %v1617, 7
      %v1619 = vsub.s32 %v1616, %v1618
      %v1620 = vrot.slane %v1606, %v1619
      %v1621 = vcombine.low %v1129, %v1145
      %v1622 = vcombine.high %v1129, %v1145
      %v1624 = vunpack.c.l.s4 1983009808
      %v1625 = vunpack.c.0.s8 %v1624
      %v1626 = vlaneseq
      %v1627 = vshrl.u32 %v1626, 7
      %v1628 = vsub.s32 %v1625, %v1627
      %v1629 = vrot.slane %v1621, %v1628
      %v1631 = vunpack.c.l.s4 1983009808
      %v1632 = vunpack.c.0.s8 %v1631
      %v1633 = vlaneseq
      %v1634 = vshrl.u32 %v1633, 7
      %v1635 = vsub.s32 %v1632, %v1634
      %v1636 = vrot.slane %v1622, %v1635
      %v1637 = vcombine.low %v1137, %v1153
      %v1638 = vcombine.high %v1137, %v1153
      %v1640 = vunpack.c.l.s4 1983009808
      %v1641 = vunpack.c.0.s8 %v1640
      %v1642 = vlaneseq
      %v1643 = vshrl.u32 %v1642, 7
      %v1644 = vsub.s32 %v1641, %v1643
      %v1645 = vrot.slane %v1637, %v1644
      %v1647 = vunpack.c.l.s4 1983009808
      %v1648 = vunpack.c.0.s8 %v1647
      %v1649 = vlaneseq
      %v1650 = vshrl.u32 %v1649, 7
      %v1651 = vsub.s32 %v1648, %v1650
      %v1652 = vrot.slane %v1638, %v1651
      %v1653 = vcombine.low %v1597, %v1613
      %v1654 = vcombine.high %v1597, %v1613
      %v1656 = vunpack.c.l.s4 1934713408
      %v1657 = vunpack.c.0.s8 %v1656
      %v1658 = vlaneseq
      %v1659 = vshrl.u32 %v1658, 7
      %v1660 = vsub.s32 %v1657, %v1659
      %v1661 = vrot.slane %v1653, %v1660
      %v1663 = vunpack.c.l.s4 1934713408
      %v1664 = vunpack.c.0.s8 %v1663
      %v1665 = vlaneseq
      %v1666 = vshrl.u32 %v1665, 7
      %v1667 = vsub.s32 %v1664, %v1666
      %v1668 = vrot.slane %v1654, %v1667
      %v1669 = vcombine.low %v1604, %v1620
      %v1670 = vcombine.high %v1604, %v1620
      %v1672 = vunpack.c.l.s4 1934713408
      %v1673 = vunpack.c.0.s8 %v1672
      %v1674 = vlaneseq
      %v1675 = vshrl.u32 %v1674, 7
      %v1676 = vsub.s32 %v1673, %v1675
      %v1677 = vrot.slane %v1669, %v1676
      %v1679 = vunpack.c.l.s4 1934713408
      %v1680 = vunpack.c.0.s8 %v1679
      %v1681 = vlaneseq
      %v1682 = vshrl.u32 %v1681, 7
      %v1683 = vsub.s32 %v1680, %v1682
      %v1684 = vrot.slane %v1670, %v1683
      %v1685 = vcombine.low %v1629, %v1645
      %v1686 = vcombine.high %v1629, %v1645
      %v1688 = vunpack.c.l.s4 1934713408
      %v1689 = vunpack.c.0.s8 %v1688
      %v1690 = vlaneseq
      %v1691 = vshrl.u32 %v1690, 7
      %v1692 = vsub.s32 %v1689, %v1691
      %v1693 = vrot.slane %v1685, %v1692
      %v1695 = vunpack.c.l.s4 1934713408
      %v1696 = vunpack.c.0.s8 %v1695
      %v1697 = vlaneseq
      %v1698 = vshrl.u32 %v1697, 7
      %v1699 = vsub.s32 %v1696, %v1698
      %v1700 = vrot.slane %v1686, %v1699
      %v1701 = vcombine.low %v1636, %v1652
      %v1702 = vcombine.high %v1636, %v1652
      %v1704 = vunpack.c.l.s4 1934713408
      %v1705 = vunpack.c.0.s8 %v1704
      %v1706 = vlaneseq
      %v1707 = vshrl.u32 %v1706, 7
      %v1708 = vsub.s32 %v1705, %v1707
      %v1709 = vrot.slane %v1701, %v1708
      %v1711 = vunpack.c.l.s4 1934713408
      %v1712 = vunpack.c.0.s8 %v1711
      %v1713 = vlaneseq
      %v1714 = vshrl.u32 %v1713, 7
      %v1715 = vsub.s32 %v1712, %v1714
      %v1716 = vrot.slane %v1702, %v1715
      %v1717 = vcombine.low %v1661, %v1693
      %v1718 = vcombine.high %v1661, %v1693
      %v1719 = vcombine.low %v1668, %v1700
      %v1720 = vcombine.high %v1668, %v1700
      %v1721 = vcombine.low %v1677, %v1709
      %v1722 = vcombine.high %v1677, %v1709
      %v1723 = vcombine.low %v1684, %v1716
      %v1724 = vcombine.high %v1684, %v1716
      %v1725 = vcombine.low %v1101, %v1117
      %v1726 = vcombine.high %v1101, %v1117
      %v1728 = vunpack.c.l.s4 1983009808
      %v1729 = vunpack.c.0.s8 %v1728
      %v1730 = vlaneseq
      %v1731 = vshrl.u32 %v1730, 7
      %v1732 = vsub.s32 %v1729, %v1731
      %v1733 = vrot.slane %v1725, %v1732
      %v1735 = vunpack.c.l.s4 1983009808
      %v1736 = vunpack.c.0.s8 %v1735
      %v1737 = vlaneseq
      %v1738 = vshrl.u32 %v1737, 7
      %v1739 = vsub.s32 %v1736, %v1738
      %v1740 = vrot.slane %v1726, %v1739
      %v1741 = vcombine.low %v1109, %v1125
      %v1742 = vcombine.high %v1109, %v1125
      %v1744 = vunpack.c.l.s4 1983009808
      %v1745 = vunpack.c.0.s8 %v1744
      %v1746 = vlaneseq
      %v1747 = vshrl.u32 %v1746, 7
      %v1748 = vsub.s32 %v1745, %v1747
      %v1749 = vrot.slane %v1741, %v1748
      %v1751 = vunpack.c.l.s4 1983009808
      %v1752 = vunpack.c.0.s8 %v1751
      %v1753 = vlaneseq
      %v1754 = vshrl.u32 %v1753, 7
      %v1755 = vsub.s32 %v1752, %v1754
      %v1756 = vrot.slane %v1742, %v1755
      %v1757 = vcombine.low %v1133, %v1149
      %v1758 = vcombine.high %v1133, %v1149
      %v1760 = vunpack.c.l.s4 1983009808
      %v1761 = vunpack.c.0.s8 %v1760
      %v1762 = vlaneseq
      %v1763 = vshrl.u32 %v1762, 7
      %v1764 = vsub.s32 %v1761, %v1763
      %v1765 = vrot.slane %v1757, %v1764
      %v1767 = vunpack.c.l.s4 1983009808
      %v1768 = vunpack.c.0.s8 %v1767
      %v1769 = vlaneseq
      %v1770 = vshrl.u32 %v1769, 7
      %v1771 = vsub.s32 %v1768, %v1770
      %v1772 = vrot.slane %v1758, %v1771
      %v1773 = vcombine.low %v1141, %v1157
      %v1774 = vcombine.high %v1141, %v1157
      %v1776 = vunpack.c.l.s4 1983009808
      %v1777 = vunpack.c.0.s8 %v1776
      %v1778 = vlaneseq
      %v1779 = vshrl.u32 %v1778, 7
      %v1780 = vsub.s32 %v1777, %v1779
      %v1781 = vrot.slane %v1773, %v1780
      %v1783 = vunpack.c.l.s4 1983009808
      %v1784 = vunpack.c.0.s8 %v1783
      %v1785 = vlaneseq
      %v1786 = vshrl.u32 %v1785, 7
      %v1787 = vsub.s32 %v1784, %v1786
      %v1788 = vrot.slane %v1774, %v1787
      %v1789 = vcombine.low %v1733, %v1749
      %v1790 = vcombine.high %v1733, %v1749
      %v1792 = vunpack.c.l.s4 1934713408
      %v1793 = vunpack.c.0.s8 %v1792
      %v1794 = vlaneseq
      %v1795 = vshrl.u32 %v1794, 7
      %v1796 = vsub.s32 %v1793, %v1795
      %v1797 = vrot.slane %v1789, %v1796
      %v1799 = vunpack.c.l.s4 1934713408
      %v1800 = vunpack.c.0.s8 %v1799
      %v1801 = vlaneseq
      %v1802 = vshrl.u32 %v1801, 7
      %v1803 = vsub.s32 %v1800, %v1802
      %v1804 = vrot.slane %v1790, %v1803
      %v1805 = vcombine.low %v1740, %v1756
      %v1806 = vcombine.high %v1740, %v1756
      %v1808 = vunpack.c.l.s4 1934713408
      %v1809 = vunpack.c.0.s8 %v1808
      %v1810 = vlaneseq
      %v1811 = vshrl.u32 %v1810, 7
      %v1812 = vsub.s32 %v1809, %v1811
      %v1813 = vrot.slane %v1805, %v1812
      %v1815 = vunpack.c.l.s4 1934713408
      %v1816 = vunpack.c.0.s8 %v1815
      %v1817 = vlaneseq
      %v1818 = vshrl.u32 %v1817, 7
      %v1819 = vsub.s32 %v1816, %v1818
      %v1820 = vrot.slane %v1806, %v1819
      %v1821 = vcombine.low %v1765, %v1781
      %v1822 = vcombine.high %v1765, %v1781
      %v1824 = vunpack.c.l.s4 1934713408
      %v1825 = vunpack.c.0.s8 %v1824
      %v1826 = vlaneseq
      %v1827 = vshrl.u32 %v1826, 7
      %v1828 = vsub.s32 %v1825, %v1827
      %v1829 = vrot.slane %v1821, %v1828
      %v1831 = vunpack.c.l.s4 1934713408
      %v1832 = vunpack.c.0.s8 %v1831
      %v1833 = vlaneseq
      %v1834 = vshrl.u32 %v1833, 7
      %v1835 = vsub.s32 %v1832, %v1834
      %v1836 = vrot.slane %v1822, %v1835
      %v1837 = vcombine.low %v1772, %v1788
      %v1838 = vcombine.high %v1772, %v1788
      %v1840 = vunpack.c.l.s4 1934713408
      %v1841 = vunpack.c.0.s8 %v1840
      %v1842 = vlaneseq
      %v1843 = vshrl.u32 %v1842, 7
      %v1844 = vsub.s32 %v1841, %v1843
      %v1845 = vrot.slane %v1837, %v1844
      %v1847 = vunpack.c.l.s4 1934713408
      %v1848 = vunpack.c.0.s8 %v1847
      %v1849 = vlaneseq
      %v1850 = vshrl.u32 %v1849, 7
      %v1851 = vsub.s32 %v1848, %v1850
      %v1852 = vrot.slane %v1838, %v1851
      %v1853 = vcombine.low %v1797, %v1829
      %v1854 = vcombine.high %v1797, %v1829
      %v1855 = vcombine.low %v1804, %v1836
      %v1856 = vcombine.high %v1804, %v1836
      %v1857 = vcombine.low %v1813, %v1845
      %v1858 = vcombine.high %v1813, %v1845
      %v1859 = vcombine.low %v1820, %v1852
      %v1860 = vcombine.high %v1820, %v1852
      %v1861 = vcombine.high %v1161, %v1176
      %v1863 = vunpack.c.l.s4 1983009808
      %v1864 = vunpack.c.0.s8 %v1863
      %v1865 = vlaneseq
      %v1866 = vshrl.u32 %v1865, 7
      %v1867 = vsub.s32 %v1864, %v1866
      %v1868 = vrot.slane %v1161, %v1867
      %v1870 = vunpack.c.l.s4 1983009808
      %v1871 = vunpack.c.0.s8 %v1870
      %v1872 = vlaneseq
      %v1873 = vshrl.u32 %v1872, 7
      %v1874 = vsub.s32 %v1871, %v1873
      %v1875 = vrot.slane %v1861, %v1874
      %v1876 = vcombine.high %v1169, %v1176
      %v1878 = vunpack.c.l.s4 1983009808
      %v1879 = vunpack.c.0.s8 %v1878
      %v1880 = vlaneseq
      %v1881 = vshrl.u32 %v1880, 7
      %v1882 = vsub.s32 %v1879, %v1881
      %v1883 = vrot.slane %v1169, %v1882
      %v1885 = vunpack.c.l.s4 1983009808
      %v1886 = vunpack.c.0.s8 %v1885
      %v1887 = vlaneseq
      %v1888 = vshrl.u32 %v1887, 7
      %v1889 = vsub.s32 %v1886, %v1888
      %v1890 = vrot.slane %v1876, %v1889
      %v1891 = vcombine.low %v1868, %v1883
      %v1892 = vcombine.high %v1868, %v1883
      %v1894 = vunpack.c.l.s4 1934713408
      %v1895 = vunpack.c.0.s8 %v1894
      %v1896 = vlaneseq
      %v1897 = vshrl.u32 %v1896, 7
      %v1898 = vsub.s32 %v1895, %v1897
      %v1899 = vrot.slane %v1891, %v1898
      %v1901 = vunpack.c.l.s4 1934713408
      %v1902 = vunpack.c.0.s8 %v1901
      %v1903 = vlaneseq
      %v1904 = vshrl.u32 %v1903, 7
      %v1905 = vsub.s32 %v1902, %v1904
      %v1906 = vrot.slane %v1892, %v1905
      %v1907 = vcombine.low %v1875, %v1890
      %v1908 = vcombine.high %v1875, %v1890
      %v1910 = vunpack.c.l.s4 1934713408
      %v1911 = vunpack.c.0.s8 %v1910
      %v1912 = vlaneseq
      %v1913 = vshrl.u32 %v1912, 7
      %v1914 = vsub.s32 %v1911, %v1913
      %v1915 = vrot.slane %v1907, %v1914
      %v1917 = vunpack.c.l.s4 1934713408
      %v1918 = vunpack.c.0.s8 %v1917
      %v1919 = vlaneseq
      %v1920 = vshrl.u32 %v1919, 7
      %v1921 = vsub.s32 %v1918, %v1920
      %v1922 = vrot.slane %v1908, %v1921
      %v1923 = vcombine.high %v1899, 0
      %v1924 = vcombine.high %v1906, 0
      %v1925 = vcombine.high %v1915, 0
      %v1926 = vcombine.high %v1922, 0
      %v1927 = vcombine.high %v1165, %v1179
      %v1929 = vunpack.c.l.s4 1983009808
      %v1930 = vunpack.c.0.s8 %v1929
      %v1931 = vlaneseq
      %v1932 = vshrl.u32 %v1931, 7
      %v1933 = vsub.s32 %v1930, %v1932
      %v1934 = vrot.slane %v1165, %v1933
      %v1936 = vunpack.c.l.s4 1983009808
      %v1937 = vunpack.c.0.s8 %v1936
      %v1938 = vlaneseq
      %v1939 = vshrl.u32 %v1938, 7
      %v1940 = vsub.s32 %v1937, %v1939
      %v1941 = vrot.slane %v1927, %v1940
      %v1942 = vcombine.high %v1173, %v1179
      %v1944 = vunpack.c.l.s4 1983009808
      %v1945 = vunpack.c.0.s8 %v1944
      %v1946 = vlaneseq
      %v1947 = vshrl.u32 %v1946, 7
      %v1948 = vsub.s32 %v1945, %v1947
      %v1949 = vrot.slane %v1173, %v1948
      %v1951 = vunpack.c.l.s4 1983009808
      %v1952 = vunpack.c.0.s8 %v1951
      %v1953 = vlaneseq
      %v1954 = vshrl.u32 %v1953, 7
      %v1955 = vsub.s32 %v1952, %v1954
      %v1956 = vrot.slane %v1942, %v1955
      %v1957 = vcombine.low %v1934, %v1949
      %v1958 = vcombine.high %v1934, %v1949
      %v1960 = vunpack.c.l.s4 1934713408
      %v1961 = vunpack.c.0.s8 %v1960
      %v1962 = vlaneseq
      %v1963 = vshrl.u32 %v1962, 7
      %v1964 = vsub.s32 %v1961, %v1963
      %v1965 = vrot.slane %v1957, %v1964
      %v1967 = vunpack.c.l.s4 1934713408
      %v1968 = vunpack.c.0.s8 %v1967
      %v1969 = vlaneseq
      %v1970 = vshrl.u32 %v1969, 7
      %v1971 = vsub.s32 %v1968, %v1970
      %v1972 = vrot.slane %v1958, %v1971
      %v1973 = vcombine.low %v1941, %v1956
      %v1974 = vcombine.high %v1941, %v1956
      %v1976 = vunpack.c.l.s4 1934713408
      %v1977 = vunpack.c.0.s8 %v1976
      %v1978 = vlaneseq
      %v1979 = vshrl.u32 %v1978, 7
      %v1980 = vsub.s32 %v1977, %v1979
      %v1981 = vrot.slane %v1973, %v1980
      %v1983 = vunpack.c.l.s4 1934713408
      %v1984 = vunpack.c.0.s8 %v1983
      %v1985 = vlaneseq
      %v1986 = vshrl.u32 %v1985, 7
      %v1987 = vsub.s32 %v1984, %v1986
      %v1988 = vrot.slane %v1974, %v1987
      %v1989 = vcombine.high %v1965, 0
      %v1990 = vcombine.high %v1972, 0
      %v1991 = vcombine.high %v1981, 0
      %v1992 = vcombine.high %v1988, 0
      %v1993 = vcombine.low %v1181, %v1191
      %v1994 = vcombine.high %v1181, %v1191
      %v1996 = vunpack.c.l.s4 1983009808
      %v1997 = vunpack.c.0.s8 %v1996
      %v1998 = vlaneseq
      %v1999 = vshrl.u32 %v1998, 7
      %v2000 = vsub.s32 %v1997, %v1999
      %v2001 = vrot.slane %v1993, %v2000
      %v2003 = vunpack.c.l.s4 1983009808
      %v2004 = vunpack.c.0.s8 %v2003
      %v2005 = vlaneseq
      %v2006 = vshrl.u32 %v2005, 7
      %v2007 = vsub.s32 %v2004, %v2006
      %v2008 = vrot.slane %v1994, %v2007
      %v2009 = vcombine.low %v1185, %v1199
      %v2010 = vcombine.high %v1185, %v1199
      %v2012 = vunpack.c.l.s4 1983009808
      %v2013 = vunpack.c.0.s8 %v2012
      %v2014 = vlaneseq
      %v2015 = vshrl.u32 %v2014, 7
      %v2016 = vsub.s32 %v2013, %v2015
      %v2017 = vrot.slane %v2009, %v2016
      %v2019 = vunpack.c.l.s4 1983009808
      %v2020 = vunpack.c.0.s8 %v2019
      %v2021 = vlaneseq
      %v2022 = vshrl.u32 %v2021, 7
      %v2023 = vsub.s32 %v2020, %v2022
      %v2024 = vrot.slane %v2010, %v2023
      %v2025 = vcombine.low %v1207, %v1223
      %v2026 = vcombine.high %v1207, %v1223
      %v2028 = vunpack.c.l.s4 1983009808
      %v2029 = vunpack.c.0.s8 %v2028
      %v2030 = vlaneseq
      %v2031 = vshrl.u32 %v2030, 7
      %v2032 = vsub.s32 %v2029, %v2031
      %v2033 = vrot.slane %v2025, %v2032
      %v2035 = vunpack.c.l.s4 1983009808
      %v2036 = vunpack.c.0.s8 %v2035
      %v2037 = vlaneseq
      %v2038 = vshrl.u32 %v2037, 7
      %v2039 = vsub.s32 %v2036, %v2038
      %v2040 = vrot.slane %v2026, %v2039
      %v2041 = vcombine.low %v1215, %v1231
      %v2042 = vcombine.high %v1215, %v1231
      %v2044 = vunpack.c.l.s4 1983009808
      %v2045 = vunpack.c.0.s8 %v2044
      %v2046 = vlaneseq
      %v2047 = vshrl.u32 %v2046, 7
      %v2048 = vsub.s32 %v2045, %v2047
      %v2049 = vrot.slane %v2041, %v2048
      %v2051 = vunpack.c.l.s4 1983009808
      %v2052 = vunpack.c.0.s8 %v2051
      %v2053 = vlaneseq
      %v2054 = vshrl.u32 %v2053, 7
      %v2055 = vsub.s32 %v2052, %v2054
      %v2056 = vrot.slane %v2042, %v2055
      %v2057 = vcombine.low %v2001, %v2017
      %v2058 = vcombine.high %v2001, %v2017
      %v2060 = vunpack.c.l.s4 1934713408
      %v2061 = vunpack.c.0.s8 %v2060
      %v2062 = vlaneseq
      %v2063 = vshrl.u32 %v2062, 7
      %v2064 = vsub.s32 %v2061, %v2063
      %v2065 = vrot.slane %v2057, %v2064
      %v2067 = vunpack.c.l.s4 1934713408
      %v2068 = vunpack.c.0.s8 %v2067
      %v2069 = vlaneseq
      %v2070 = vshrl.u32 %v2069, 7
      %v2071 = vsub.s32 %v2068, %v2070
      %v2072 = vrot.slane %v2058, %v2071
      %v2073 = vcombine.low %v2008, %v2024
      %v2074 = vcombine.high %v2008, %v2024
      %v2076 = vunpack.c.l.s4 1934713408
      %v2077 = vunpack.c.0.s8 %v2076
      %v2078 = vlaneseq
      %v2079 = vshrl.u32 %v2078, 7
      %v2080 = vsub.s32 %v2077, %v2079
      %v2081 = vrot.slane %v2073, %v2080
      %v2083 = vunpack.c.l.s4 1934713408
      %v2084 = vunpack.c.0.s8 %v2083
      %v2085 = vlaneseq
      %v2086 = vshrl.u32 %v2085, 7
      %v2087 = vsub.s32 %v2084, %v2086
      %v2088 = vrot.slane %v2074, %v2087
      %v2089 = vcombine.low %v2033, %v2049
      %v2090 = vcombine.high %v2033, %v2049
      %v2092 = vunpack.c.l.s4 1934713408
      %v2093 = vunpack.c.0.s8 %v2092
      %v2094 = vlaneseq
      %v2095 = vshrl.u32 %v2094, 7
      %v2096 = vsub.s32 %v2093, %v2095
      %v2097 = vrot.slane %v2089, %v2096
      %v2099 = vunpack.c.l.s4 1934713408
      %v2100 = vunpack.c.0.s8 %v2099
      %v2101 = vlaneseq
      %v2102 = vshrl.u32 %v2101, 7
      %v2103 = vsub.s32 %v2100, %v2102
      %v2104 = vrot.slane %v2090, %v2103
      %v2105 = vcombine.low %v2040, %v2056
      %v2106 = vcombine.high %v2040, %v2056
      %v2108 = vunpack.c.l.s4 1934713408
      %v2109 = vunpack.c.0.s8 %v2108
      %v2110 = vlaneseq
      %v2111 = vshrl.u32 %v2110, 7
      %v2112 = vsub.s32 %v2109, %v2111
      %v2113 = vrot.slane %v2105, %v2112
      %v2115 = vunpack.c.l.s4 1934713408
      %v2116 = vunpack.c.0.s8 %v2115
      %v2117 = vlaneseq
      %v2118 = vshrl.u32 %v2117, 7
      %v2119 = vsub.s32 %v2116, %v2118
      %v2120 = vrot.slane %v2106, %v2119
      %v2121 = vcombine.low %v2065, %v2097
      %v2122 = vcombine.high %v2065, %v2097
      %v2123 = vcombine.low %v2072, %v2104
      %v2124 = vcombine.high %v2072, %v2104
      %v2125 = vcombine.low %v2081, %v2113
      %v2126 = vcombine.high %v2081, %v2113
      %v2127 = vcombine.low %v2088, %v2120
      %v2128 = vcombine.high %v2088, %v2120
      %v2129 = vcombine.low %v1183, %v1195
      %v2130 = vcombine.high %v1183, %v1195
      %v2132 = vunpack.c.l.s4 1983009808
      %v2133 = vunpack.c.0.s8 %v2132
      %v2134 = vlaneseq
      %v2135 = vshrl.u32 %v2134, 7
      %v2136 = vsub.s32 %v2133, %v2135
      %v2137 = vrot.slane %v2129, %v2136
      %v2139 = vunpack.c.l.s4 1983009808
      %v2140 = vunpack.c.0.s8 %v2139
      %v2141 = vlaneseq
      %v2142 = vshrl.u32 %v2141, 7
      %v2143 = vsub.s32 %v2140, %v2142
      %v2144 = vrot.slane %v2130, %v2143
      %v2145 = vcombine.low %v1187, %v1203
      %v2146 = vcombine.high %v1187, %v1203
      %v2148 = vunpack.c.l.s4 1983009808
      %v2149 = vunpack.c.0.s8 %v2148
      %v2150 = vlaneseq
      %v2151 = vshrl.u32 %v2150, 7
      %v2152 = vsub.s32 %v2149, %v2151
      %v2153 = vrot.slane %v2145, %v2152
      %v2155 = vunpack.c.l.s4 1983009808
      %v2156 = vunpack.c.0.s8 %v2155
      %v2157 = vlaneseq
      %v2158 = vshrl.u32 %v2157, 7
      %v2159 = vsub.s32 %v2156, %v2158
      %v2160 = vrot.slane %v2146, %v2159
      %v2161 = vcombine.low %v1211, %v1227
      %v2162 = vcombine.high %v1211, %v1227
      %v2164 = vunpack.c.l.s4 1983009808
      %v2165 = vunpack.c.0.s8 %v2164
      %v2166 = vlaneseq
      %v2167 = vshrl.u32 %v2166, 7
      %v2168 = vsub.s32 %v2165, %v2167
      %v2169 = vrot.slane %v2161, %v2168
      %v2171 = vunpack.c.l.s4 1983009808
      %v2172 = vunpack.c.0.s8 %v2171
      %v2173 = vlaneseq
      %v2174 = vshrl.u32 %v2173, 7
      %v2175 = vsub.s32 %v2172, %v2174
      %v2176 = vrot.slane %v2162, %v2175
      %v2177 = vcombine.low %v1219, %v1235
      %v2178 = vcombine.high %v1219, %v1235
      %v2180 = vunpack.c.l.s4 1983009808
      %v2181 = vunpack.c.0.s8 %v2180
      %v2182 = vlaneseq
      %v2183 = vshrl.u32 %v2182, 7
      %v2184 = vsub.s32 %v2181, %v2183
      %v2185 = vrot.slane %v2177, %v2184
      %v2187 = vunpack.c.l.s4 1983009808
      %v2188 = vunpack.c.0.s8 %v2187
      %v2189 = vlaneseq
      %v2190 = vshrl.u32 %v2189, 7
      %v2191 = vsub.s32 %v2188, %v2190
      %v2192 = vrot.slane %v2178, %v2191
      %v2193 = vcombine.low %v2137, %v2153
      %v2194 = vcombine.high %v2137, %v2153
      %v2196 = vunpack.c.l.s4 1934713408
      %v2197 = vunpack.c.0.s8 %v2196
      %v2198 = vlaneseq
      %v2199 = vshrl.u32 %v2198, 7
      %v2200 = vsub.s32 %v2197, %v2199
      %v2201 = vrot.slane %v2193, %v2200
      %v2203 = vunpack.c.l.s4 1934713408
      %v2204 = vunpack.c.0.s8 %v2203
      %v2205 = vlaneseq
      %v2206 = vshrl.u32 %v2205, 7
      %v2207 = vsub.s32 %v2204, %v2206
      %v2208 = vrot.slane %v2194, %v2207
      %v2209 = vcombine.low %v2144, %v2160
      %v2210 = vcombine.high %v2144, %v2160
      %v2212 = vunpack.c.l.s4 1934713408
      %v2213 = vunpack.c.0.s8 %v2212
      %v2214 = vlaneseq
      %v2215 = vshrl.u32 %v2214, 7
      %v2216 = vsub.s32 %v2213, %v2215
      %v2217 = vrot.slane %v2209, %v2216
      %v2219 = vunpack.c.l.s4 1934713408
      %v2220 = vunpack.c.0.s8 %v2219
      %v2221 = vlaneseq
      %v2222 = vshrl.u32 %v2221, 7
      %v2223 = vsub.s32 %v2220, %v2222
      %v2224 = vrot.slane %v2210, %v2223
      %v2225 = vcombine.low %v2169, %v2185
      %v2226 = vcombine.high %v2169, %v2185
      %v2228 = vunpack.c.l.s4 1934713408
      %v2229 = vunpack.c.0.s8 %v2228
      %v2230 = vlaneseq
      %v2231 = vshrl.u32 %v2230, 7
      %v2232 = vsub.s32 %v2229, %v2231
      %v2233 = vrot.slane %v2225, %v2232
      %v2235 = vunpack.c.l.s4 1934713408
      %v2236 = vunpack.c.0.s8 %v2235
      %v2237 = vlaneseq
      %v2238 = vshrl.u32 %v2237, 7
      %v2239 = vsub.s32 %v2236, %v2238
      %v2240 = vrot.slane %v2226, %v2239
      %v2241 = vcombine.low %v2176, %v2192
      %v2242 = vcombine.high %v2176, %v2192
      %v2244 = vunpack.c.l.s4 1934713408
      %v2245 = vunpack.c.0.s8 %v2244
      %v2246 = vlaneseq
      %v2247 = vshrl.u32 %v2246, 7
      %v2248 = vsub.s32 %v2245, %v2247
      %v2249 = vrot.slane %v2241, %v2248
      %v2251 = vunpack.c.l.s4 1934713408
      %v2252 = vunpack.c.0.s8 %v2251
      %v2253 = vlaneseq
      %v2254 = vshrl.u32 %v2253, 7
      %v2255 = vsub.s32 %v2252, %v2254
      %v2256 = vrot.slane %v2242, %v2255
      %v2257 = vcombine.low %v2201, %v2233
      %v2258 = vcombine.high %v2201, %v2233
      %v2259 = vcombine.low %v2208, %v2240
      %v2260 = vcombine.high %v2208, %v2240
      %v2261 = vcombine.low %v2217, %v2249
      %v2262 = vcombine.high %v2217, %v2249
      %v2263 = vcombine.low %v2224, %v2256
      %v2264 = vcombine.high %v2224, %v2256
      %v2265 = vcombine.low %v1239, %v1255
      %v2266 = vcombine.high %v1239, %v1255
      %v2268 = vunpack.c.l.s4 1983009808
      %v2269 = vunpack.c.0.s8 %v2268
      %v2270 = vlaneseq
      %v2271 = vshrl.u32 %v2270, 7
      %v2272 = vsub.s32 %v2269, %v2271
      %v2273 = vrot.slane %v2265, %v2272
      %v2275 = vunpack.c.l.s4 1983009808
      %v2276 = vunpack.c.0.s8 %v2275
      %v2277 = vlaneseq
      %v2278 = vshrl.u32 %v2277, 7
      %v2279 = vsub.s32 %v2276, %v2278
      %v2280 = vrot.slane %v2266, %v2279
      %v2281 = vcombine.low %v1247, %v1263
      %v2282 = vcombine.high %v1247, %v1263
      %v2284 = vunpack.c.l.s4 1983009808
      %v2285 = vunpack.c.0.s8 %v2284
      %v2286 = vlaneseq
      %v2287 = vshrl.u32 %v2286, 7
      %v2288 = vsub.s32 %v2285, %v2287
      %v2289 = vrot.slane %v2281, %v2288
      %v2291 = vunpack.c.l.s4 1983009808
      %v2292 = vunpack.c.0.s8 %v2291
      %v2293 = vlaneseq
      %v2294 = vshrl.u32 %v2293, 7
      %v2295 = vsub.s32 %v2292, %v2294
      %v2296 = vrot.slane %v2282, %v2295
      %v2297 = vcombine.low %v1271, %v1287
      %v2298 = vcombine.high %v1271, %v1287
      %v2300 = vunpack.c.l.s4 1983009808
      %v2301 = vunpack.c.0.s8 %v2300
      %v2302 = vlaneseq
      %v2303 = vshrl.u32 %v2302, 7
      %v2304 = vsub.s32 %v2301, %v2303
      %v2305 = vrot.slane %v2297, %v2304
      %v2307 = vunpack.c.l.s4 1983009808
      %v2308 = vunpack.c.0.s8 %v2307
      %v2309 = vlaneseq
      %v2310 = vshrl.u32 %v2309, 7
      %v2311 = vsub.s32 %v2308, %v2310
      %v2312 = vrot.slane %v2298, %v2311
      %v2313 = vcombine.low %v1279, %v1295
      %v2314 = vcombine.high %v1279, %v1295
      %v2316 = vunpack.c.l.s4 1983009808
      %v2317 = vunpack.c.0.s8 %v2316
      %v2318 = vlaneseq
      %v2319 = vshrl.u32 %v2318, 7
      %v2320 = vsub.s32 %v2317, %v2319
      %v2321 = vrot.slane %v2313, %v2320
      %v2323 = vunpack.c.l.s4 1983009808
      %v2324 = vunpack.c.0.s8 %v2323
      %v2325 = vlaneseq
      %v2326 = vshrl.u32 %v2325, 7
      %v2327 = vsub.s32 %v2324, %v2326
      %v2328 = vrot.slane %v2314, %v2327
      %v2329 = vcombine.low %v2273, %v2289
      %v2330 = vcombine.high %v2273, %v2289
      %v2332 = vunpack.c.l.s4 1934713408
      %v2333 = vunpack.c.0.s8 %v2332
      %v2334 = vlaneseq
      %v2335 = vshrl.u32 %v2334, 7
      %v2336 = vsub.s32 %v2333, %v2335
      %v2337 = vrot.slane %v2329, %v2336
      %v2339 = vunpack.c.l.s4 1934713408
      %v2340 = vunpack.c.0.s8 %v2339
      %v2341 = vlaneseq
      %v2342 = vshrl.u32 %v2341, 7
      %v2343 = vsub.s32 %v2340, %v2342
      %v2344 = vrot.slane %v2330, %v2343
      %v2345 = vcombine.low %v2280, %v2296
      %v2346 = vcombine.high %v2280, %v2296
      %v2348 = vunpack.c.l.s4 1934713408
      %v2349 = vunpack.c.0.s8 %v2348
      %v2350 = vlaneseq
      %v2351 = vshrl.u32 %v2350, 7
      %v2352 = vsub.s32 %v2349, %v2351
      %v2353 = vrot.slane %v2345, %v2352
      %v2355 = vunpack.c.l.s4 1934713408
      %v2356 = vunpack.c.0.s8 %v2355
      %v2357 = vlaneseq
      %v2358 = vshrl.u32 %v2357, 7
      %v2359 = vsub.s32 %v2356, %v2358
      %v2360 = vrot.slane %v2346, %v2359
      %v2361 = vcombine.low %v2305, %v2321
      %v2362 = vcombine.high %v2305, %v2321
      %v2364 = vunpack.c.l.s4 1934713408
      %v2365 = vunpack.c.0.s8 %v2364
      %v2366 = vlaneseq
      %v2367 = vshrl.u32 %v2366, 7
      %v2368 = vsub.s32 %v2365, %v2367
      %v2369 = vrot.slane %v2361, %v2368
      %v2371 = vunpack.c.l.s4 1934713408
      %v2372 = vunpack.c.0.s8 %v2371
      %v2373 = vlaneseq
      %v2374 = vshrl.u32 %v2373, 7
      %v2375 = vsub.s32 %v2372, %v2374
      %v2376 = vrot.slane %v2362, %v2375
      %v2377 = vcombine.low %v2312, %v2328
      %v2378 = vcombine.high %v2312, %v2328
      %v2380 = vunpack.c.l.s4 1934713408
      %v2381 = vunpack.c.0.s8 %v2380
      %v2382 = vlaneseq
      %v2383 = vshrl.u32 %v2382, 7
      %v2384 = vsub.s32 %v2381, %v2383
      %v2385 = vrot.slane %v2377, %v2384
      %v2387 = vunpack.c.l.s4 1934713408
      %v2388 = vunpack.c.0.s8 %v2387
      %v2389 = vlaneseq
      %v2390 = vshrl.u32 %v2389, 7
      %v2391 = vsub.s32 %v2388, %v2390
      %v2392 = vrot.slane %v2378, %v2391
      %v2393 = vcombine.low %v2337, %v2369
      %v2394 = vcombine.high %v2337, %v2369
      %v2395 = vcombine.low %v2344, %v2376
      %v2396 = vcombine.high %v2344, %v2376
      %v2397 = vcombine.low %v2353, %v2385
      %v2398 = vcombine.high %v2353, %v2385
      %v2399 = vcombine.low %v2360, %v2392
      %v2400 = vcombine.high %v2360, %v2392
      %v2401 = vcombine.low %v1243, %v1259
      %v2402 = vcombine.high %v1243, %v1259
      %v2404 = vunpack.c.l.s4 1983009808
      %v2405 = vunpack.c.0.s8 %v2404
      %v2406 = vlaneseq
      %v2407 = vshrl.u32 %v2406, 7
      %v2408 = vsub.s32 %v2405, %v2407
      %v2409 = vrot.slane %v2401, %v2408
      %v2411 = vunpack.c.l.s4 1983009808
      %v2412 = vunpack.c.0.s8 %v2411
      %v2413 = vlaneseq
      %v2414 = vshrl.u32 %v2413, 7
      %v2415 = vsub.s32 %v2412, %v2414
      %v2416 = vrot.slane %v2402, %v2415
      %v2417 = vcombine.low %v1251, %v1267
      %v2418 = vcombine.high %v1251, %v1267
      %v2420 = vunpack.c.l.s4 1983009808
      %v2421 = vunpack.c.0.s8 %v2420
      %v2422 = vlaneseq
      %v2423 = vshrl.u32 %v2422, 7
      %v2424 = vsub.s32 %v2421, %v2423
      %v2425 = vrot.slane %v2417, %v2424
      %v2427 = vunpack.c.l.s4 1983009808
      %v2428 = vunpack.c.0.s8 %v2427
      %v2429 = vlaneseq
      %v2430 = vshrl.u32 %v2429, 7
      %v2431 = vsub.s32 %v2428, %v2430
      %v2432 = vrot.slane %v2418, %v2431
      %v2433 = vcombine.low %v1275, %v1291
      %v2434 = vcombine.high %v1275, %v1291
      %v2436 = vunpack.c.l.s4 1983009808
      %v2437 = vunpack.c.0.s8 %v2436
      %v2438 = vlaneseq
      %v2439 = vshrl.u32 %v2438, 7
      %v2440 = vsub.s32 %v2437, %v2439
      %v2441 = vrot.slane %v2433, %v2440
      %v2443 = vunpack.c.l.s4 1983009808
      %v2444 = vunpack.c.0.s8 %v2443
      %v2445 = vlaneseq
      %v2446 = vshrl.u32 %v2445, 7
      %v2447 = vsub.s32 %v2444, %v2446
      %v2448 = vrot.slane %v2434, %v2447
      %v2449 = vcombine.low %v1283, %v1299
      %v2450 = vcombine.high %v1283, %v1299
      %v2452 = vunpack.c.l.s4 1983009808
      %v2453 = vunpack.c.0.s8 %v2452
      %v2454 = vlaneseq
      %v2455 = vshrl.u32 %v2454, 7
      %v2456 = vsub.s32 %v2453, %v2455
      %v2457 = vrot.slane %v2449, %v2456
      %v2459 = vunpack.c.l.s4 1983009808
      %v2460 = vunpack.c.0.s8 %v2459
      %v2461 = vlaneseq
      %v2462 = vshrl.u32 %v2461, 7
      %v2463 = vsub.s32 %v2460, %v2462
      %v2464 = vrot.slane %v2450, %v2463
      %v2465 = vcombine.low %v2409, %v2425
      %v2466 = vcombine.high %v2409, %v2425
      %v2468 = vunpack.c.l.s4 1934713408
      %v2469 = vunpack.c.0.s8 %v2468
      %v2470 = vlaneseq
      %v2471 = vshrl.u32 %v2470, 7
      %v2472 = vsub.s32 %v2469, %v2471
      %v2473 = vrot.slane %v2465, %v2472
      %v2475 = vunpack.c.l.s4 1934713408
      %v2476 = vunpack.c.0.s8 %v2475
      %v2477 = vlaneseq
      %v2478 = vshrl.u32 %v2477, 7
      %v2479 = vsub.s32 %v2476, %v2478
      %v2480 = vrot.slane %v2466, %v2479
      %v2481 = vcombine.low %v2416, %v2432
      %v2482 = vcombine.high %v2416, %v2432
      %v2484 = vunpack.c.l.s4 1934713408
      %v2485 = vunpack.c.0.s8 %v2484
      %v2486 = vlaneseq
      %v2487 = vshrl.u32 %v2486, 7
      %v2488 = vsub.s32 %v2485, %v2487
      %v2489 = vrot.slane %v2481, %v2488
      %v2491 = vunpack.c.l.s4 1934713408
      %v2492 = vunpack.c.0.s8 %v2491
      %v2493 = vlaneseq
      %v2494 = vshrl.u32 %v2493, 7
      %v2495 = vsub.s32 %v2492, %v2494
      %v2496 = vrot.slane %v2482, %v2495
      %v2497 = vcombine.low %v2441, %v2457
      %v2498 = vcombine.high %v2441, %v2457
      %v2500 = vunpack.c.l.s4 1934713408
      %v2501 = vunpack.c.0.s8 %v2500
      %v2502 = vlaneseq
      %v2503 = vshrl.u32 %v2502, 7
      %v2504 = vsub.s32 %v2501, %v2503
      %v2505 = vrot.slane %v2497, %v2504
      %v2507 = vunpack.c.l.s4 1934713408
      %v2508 = vunpack.c.0.s8 %v2507
      %v2509 = vlaneseq
      %v2510 = vshrl.u32 %v2509, 7
      %v2511 = vsub.s32 %v2508, %v2510
      %v2512 = vrot.slane %v2498, %v2511
      %v2513 = vcombine.low %v2448, %v2464
      %v2514 = vcombine.high %v2448, %v2464
      %v2516 = vunpack.c.l.s4 1934713408
      %v2517 = vunpack.c.0.s8 %v2516
      %v2518 = vlaneseq
      %v2519 = vshrl.u32 %v2518, 7
      %v2520 = vsub.s32 %v2517, %v2519
      %v2521 = vrot.slane %v2513, %v2520
      %v2523 = vunpack.c.l.s4 1934713408
      %v2524 = vunpack.c.0.s8 %v2523
      %v2525 = vlaneseq
      %v2526 = vshrl.u32 %v2525, 7
      %v2527 = vsub.s32 %v2524, %v2526
      %v2528 = vrot.slane %v2514, %v2527
      %v2529 = vcombine.low %v2473, %v2505
      %v2530 = vcombine.high %v2473, %v2505
      %v2531 = vcombine.low %v2480, %v2512
      %v2532 = vcombine.high %v2480, %v2512
      %v2533 = vcombine.low %v2489, %v2521
      %v2534 = vcombine.high %v2489, %v2521
      %v2535 = vcombine.low %v2496, %v2528
      %v2536 = vcombine.high %v2496, %v2528
      %v2537 = vcombine.high %v1303, %v1176
      %v2539 = vunpack.c.l.s4 1983009808
      %v2540 = vunpack.c.0.s8 %v2539
      %v2541 = vlaneseq
      %v2542 = vshrl.u32 %v2541, 7
      %v2543 = vsub.s32 %v2540, %v2542
      %v2544 = vrot.slane %v1303, %v2543
      %v2546 = vunpack.c.l.s4 1983009808
      %v2547 = vunpack.c.0.s8 %v2546
      %v2548 = vlaneseq
      %v2549 = vshrl.u32 %v2548, 7
      %v2550 = vsub.s32 %v2547, %v2549
      %v2551 = vrot.slane %v2537, %v2550
      %v2552 = vcombine.high %v1311, %v1176
      %v2554 = vunpack.c.l.s4 1983009808
      %v2555 = vunpack.c.0.s8 %v2554
      %v2556 = vlaneseq
      %v2557 = vshrl.u32 %v2556, 7
      %v2558 = vsub.s32 %v2555, %v2557
      %v2559 = vrot.slane %v1311, %v2558
      %v2561 = vunpack.c.l.s4 1983009808
      %v2562 = vunpack.c.0.s8 %v2561
      %v2563 = vlaneseq
      %v2564 = vshrl.u32 %v2563, 7
      %v2565 = vsub.s32 %v2562, %v2564
      %v2566 = vrot.slane %v2552, %v2565
      %v2567 = vcombine.low %v2544, %v2559
      %v2568 = vcombine.high %v2544, %v2559
      %v2570 = vunpack.c.l.s4 1934713408
      %v2571 = vunpack.c.0.s8 %v2570
      %v2572 = vlaneseq
      %v2573 = vshrl.u32 %v2572, 7
      %v2574 = vsub.s32 %v2571, %v2573
      %v2575 = vrot.slane %v2567, %v2574
      %v2577 = vunpack.c.l.s4 1934713408
      %v2578 = vunpack.c.0.s8 %v2577
      %v2579 = vlaneseq
      %v2580 = vshrl.u32 %v2579, 7
      %v2581 = vsub.s32 %v2578, %v2580
      %v2582 = vrot.slane %v2568, %v2581
      %v2583 = vcombine.low %v2551, %v2566
      %v2584 = vcombine.high %v2551, %v2566
      %v2586 = vunpack.c.l.s4 1934713408
      %v2587 = vunpack.c.0.s8 %v2586
      %v2588 = vlaneseq
      %v2589 = vshrl.u32 %v2588, 7
      %v2590 = vsub.s32 %v2587, %v2589
      %v2591 = vrot.slane %v2583, %v2590
      %v2593 = vunpack.c.l.s4 1934713408
      %v2594 = vunpack.c.0.s8 %v2593
      %v2595 = vlaneseq
      %v2596 = vshrl.u32 %v2595, 7
      %v2597 = vsub.s32 %v2594, %v2596
      %v2598 = vrot.slane %v2584, %v2597
      %v2599 = vcombine.high %v2575, 0
      %v2600 = vcombine.high %v2582, 0
      %v2601 = vcombine.high %v2591, 0
      %v2602 = vcombine.high %v2598, 0
      %v2603 = vcombine.high %v1307, %v1179
      %v2605 = vunpack.c.l.s4 1983009808
      %v2606 = vunpack.c.0.s8 %v2605
      %v2607 = vlaneseq
      %v2608 = vshrl.u32 %v2607, 7
      %v2609 = vsub.s32 %v2606, %v2608
      %v2610 = vrot.slane %v1307, %v2609
      %v2612 = vunpack.c.l.s4 1983009808
      %v2613 = vunpack.c.0.s8 %v2612
      %v2614 = vlaneseq
      %v2615 = vshrl.u32 %v2614, 7
      %v2616 = vsub.s32 %v2613, %v2615
      %v2617 = vrot.slane %v2603, %v2616
      %v2618 = vcombine.high %v1315, %v1179
      %v2620 = vunpack.c.l.s4 1983009808
      %v2621 = vunpack.c.0.s8 %v2620
      %v2622 = vlaneseq
      %v2623 = vshrl.u32 %v2622, 7
      %v2624 = vsub.s32 %v2621, %v2623
      %v2625 = vrot.slane %v1315, %v2624
      %v2627 = vunpack.c.l.s4 1983009808
      %v2628 = vunpack.c.0.s8 %v2627
      %v2629 = vlaneseq
      %v2630 = vshrl.u32 %v2629, 7
      %v2631 = vsub.s32 %v2628, %v2630
      %v2632 = vrot.slane %v2618, %v2631
      %v2633 = vcombine.low %v2610, %v2625
      %v2634 = vcombine.high %v2610, %v2625
      %v2636 = vunpack.c.l.s4 1934713408
      %v2637 = vunpack.c.0.s8 %v2636
      %v2638 = vlaneseq
      %v2639 = vshrl.u32 %v2638, 7
      %v2640 = vsub.s32 %v2637, %v2639
      %v2641 = vrot.slane %v2633, %v2640
      %v2643 = vunpack.c.l.s4 1934713408
      %v2644 = vunpack.c.0.s8 %v2643
      %v2645 = vlaneseq
      %v2646 = vshrl.u32 %v2645, 7
      %v2647 = vsub.s32 %v2644, %v2646
      %v2648 = vrot.slane %v2634, %v2647
      %v2649 = vcombine.low %v2617, %v2632
      %v2650 = vcombine.high %v2617, %v2632
      %v2652 = vunpack.c.l.s4 1934713408
      %v2653 = vunpack.c.0.s8 %v2652
      %v2654 = vlaneseq
      %v2655 = vshrl.u32 %v2654, 7
      %v2656 = vsub.s32 %v2653, %v2655
      %v2657 = vrot.slane %v2649, %v2656
      %v2659 = vunpack.c.l.s4 1934713408
      %v2660 = vunpack.c.0.s8 %v2659
      %v2661 = vlaneseq
      %v2662 = vshrl.u32 %v2661, 7
      %v2663 = vsub.s32 %v2660, %v2662
      %v2664 = vrot.slane %v2650, %v2663
      %v2665 = vcombine.high %v2641, 0
      %v2666 = vcombine.high %v2648, 0
      %v2667 = vcombine.high %v2657, 0
      %v2668 = vcombine.high %v2664, 0
      %2672 = vrot.lane.b32.xlu0 %v1581, 32
      %v2673 = vpop.permute.xlu0 %2672
      %2674 = vrot.lane.b32.xlu0 %v1853, 32
      %v2675 = vpop.permute.xlu0 %2674
      %2676 = vrot.lane.b32.xlu0 %v1965, 32
      %v2677 = vpop.permute.xlu0 %2676
      %2681 = vrot.lane.b32.xlu0 %v1446, 64
      %v2682 = vpop.permute.xlu0 %2681
      %2683 = vrot.lane.b32.xlu0 %v1718, 64
      %v2684 = vpop.permute.xlu0 %2683
      %2685 = vrot.lane.b32.xlu0 %v1923, 64
      %v2686 = vpop.permute.xlu0 %2685
      %2690 = vrot.lane.b32.xlu0 %v1582, 96
      %v2691 = vpop.permute.xlu0 %2690
      %2692 = vrot.lane.b32.xlu0 %v1854, 96
      %v2693 = vpop.permute.xlu0 %2692
      %2694 = vrot.lane.b32.xlu0 %v1989, 96
      %v2695 = vpop.permute.xlu0 %2694
      %2699 = vrot.lane.b32.xlu0 %v1583, 32
      %v2700 = vpop.permute.xlu0 %2699
      %2701 = vrot.lane.b32.xlu0 %v1855, 32
      %v2702 = vpop.permute.xlu0 %2701
      %2703 = vrot.lane.b32.xlu0 %v1972, 32
      %v2704 = vpop.permute.xlu0 %2703
      %2708 = vrot.lane.b32.xlu0 %v1448, 64
      %v2709 = vpop.permute.xlu0 %2708
      %2710 = vrot.lane.b32.xlu0 %v1720, 64
      %v2711 = vpop.permute.xlu0 %2710
      %2712 = vrot.lane.b32.xlu0 %v1924, 64
      %v2713 = vpop.permute.xlu0 %2712
      %2717 = vrot.lane.b32.xlu0 %v1584, 96
      %v2718 = vpop.permute.xlu0 %2717
      %2719 = vrot.lane.b32.xlu0 %v1856, 96
      %v2720 = vpop.permute.xlu0 %2719
      %2721 = vrot.lane.b32.xlu0 %v1990, 96
      %v2722 = vpop.permute.xlu0 %2721
      %2726 = vrot.lane.b32.xlu0 %v1585, 32
      %v2727 = vpop.permute.xlu0 %2726
      %2728 = vrot.lane.b32.xlu0 %v1857, 32
      %v2729 = vpop.permute.xlu0 %2728
      %2730 = vrot.lane.b32.xlu0 %v1981, 32
      %v2731 = vpop.permute.xlu0 %2730
      %2735 = vrot.lane.b32.xlu0 %v1450, 64
      %v2736 = vpop.permute.xlu0 %2735
      %2737 = vrot.lane.b32.xlu0 %v1722, 64
      %v2738 = vpop.permute.xlu0 %2737
      %2739 = vrot.lane.b32.xlu0 %v1925, 64
      %v2740 = vpop.permute.xlu0 %2739
      %2744 = vrot.lane.b32.xlu0 %v1586, 96
      %v2745 = vpop.permute.xlu0 %2744
      %2746 = vrot.lane.b32.xlu0 %v1858, 96
      %v2747 = vpop.permute.xlu0 %2746
      %2748 = vrot.lane.b32.xlu0 %v1991, 96
      %v2749 = vpop.permute.xlu0 %2748
      %2753 = vrot.lane.b32.xlu0 %v1587, 32
      %v2754 = vpop.permute.xlu0 %2753
      %2755 = vrot.lane.b32.xlu0 %v1859, 32
      %v2756 = vpop.permute.xlu0 %2755
      %2757 = vrot.lane.b32.xlu0 %v1988, 32
      %v2758 = vpop.permute.xlu0 %2757
      %2762 = vrot.lane.b32.xlu0 %v1452, 64
      %v2763 = vpop.permute.xlu0 %2762
      %2764 = vrot.lane.b32.xlu0 %v1724, 64
      %v2765 = vpop.permute.xlu0 %2764
      %2766 = vrot.lane.b32.xlu0 %v1926, 64
      %v2767 = vpop.permute.xlu0 %2766
      %2771 = vrot.lane.b32.xlu0 %v1588, 96
      %v2772 = vpop.permute.xlu0 %2771
      %2773 = vrot.lane.b32.xlu0 %v1860, 96
      %v2774 = vpop.permute.xlu0 %2773
      %2775 = vrot.lane.b32.xlu0 %v1992, 96
      %v2776 = vpop.permute.xlu0 %2775
      %2780 = vrot.lane.b32.xlu0 %v2257, 32
      %v2781 = vpop.permute.xlu0 %2780
      %2782 = vrot.lane.b32.xlu0 %v2529, 32
      %v2783 = vpop.permute.xlu0 %2782
      %2784 = vrot.lane.b32.xlu0 %v2641, 32
      %v2785 = vpop.permute.xlu0 %2784
      %2789 = vrot.lane.b32.xlu0 %v2122, 64
      %v2790 = vpop.permute.xlu0 %2789
      %2791 = vrot.lane.b32.xlu0 %v2394, 64
      %v2792 = vpop.permute.xlu0 %2791
      %2793 = vrot.lane.b32.xlu0 %v2599, 64
      %v2794 = vpop.permute.xlu0 %2793
      %2798 = vrot.lane.b32.xlu0 %v2258, 96
      %v2799 = vpop.permute.xlu0 %2798
      %2800 = vrot.lane.b32.xlu0 %v2530, 96
      %v2801 = vpop.permute.xlu0 %2800
      %2802 = vrot.lane.b32.xlu0 %v2665, 96
      %v2803 = vpop.permute.xlu0 %2802
      %2807 = vrot.lane.b32.xlu0 %v2259, 32
      %v2808 = vpop.permute.xlu0 %2807
      %2809 = vrot.lane.b32.xlu0 %v2531, 32
      %v2810 = vpop.permute.xlu0 %2809
      %2811 = vrot.lane.b32.xlu0 %v2648, 32
      %v2812 = vpop.permute.xlu0 %2811
      %2816 = vrot.lane.b32.xlu0 %v2124, 64
      %v2817 = vpop.permute.xlu0 %2816
      %2818 = vrot.lane.b32.xlu0 %v2396, 64
      %v2819 = vpop.permute.xlu0 %2818
      %2820 = vrot.lane.b32.xlu0 %v2600, 64
      %v2821 = vpop.permute.xlu0 %2820
      %2825 = vrot.lane.b32.xlu0 %v2260, 96
      %v2826 = vpop.permute.xlu0 %2825
      %2827 = vrot.lane.b32.xlu0 %v2532, 96
      %v2828 = vpop.permute.xlu0 %2827
      %2829 = vrot.lane.b32.xlu0 %v2666, 96
      %v2830 = vpop.permute.xlu0 %2829
      %2834 = vrot.lane.b32.xlu0 %v2261, 32
      %v2835 = vpop.permute.xlu0 %2834
      %2836 = vrot.lane.b32.xlu0 %v2533, 32
      %v2837 = vpop.permute.xlu0 %2836
      %2838 = vrot.lane.b32.xlu0 %v2657, 32
      %v2839 = vpop.permute.xlu0 %2838
      %2843 = vrot.lane.b32.xlu0 %v2126, 64
      %v2844 = vpop.permute.xlu0 %2843
      %2845 = vrot.lane.b32.xlu0 %v2398, 64
      %v2846 = vpop.permute.xlu0 %2845
      %2847 = vrot.lane.b32.xlu0 %v2601, 64
      %v2848 = vpop.permute.xlu0 %2847
      %2852 = vrot.lane.b32.xlu0 %v2262, 96
      %v2853 = vpop.permute.xlu0 %2852
      %2854 = vrot.lane.b32.xlu0 %v2534, 96
      %v2855 = vpop.permute.xlu0 %2854
      %2856 = vrot.lane.b32.xlu0 %v2667, 96
      %v2857 = vpop.permute.xlu0 %2856
      %2861 = vrot.lane.b32.xlu0 %v2263, 32
      %v2862 = vpop.permute.xlu0 %2861
      %2863 = vrot.lane.b32.xlu0 %v2535, 32
      %v2864 = vpop.permute.xlu0 %2863
      %2865 = vrot.lane.b32.xlu0 %v2664, 32
      %v2866 = vpop.permute.xlu0 %2865
      %2870 = vrot.lane.b32.xlu0 %v2128, 64
      %v2871 = vpop.permute.xlu0 %2870
      %2872 = vrot.lane.b32.xlu0 %v2400, 64
      %v2873 = vpop.permute.xlu0 %2872
      %2874 = vrot.lane.b32.xlu0 %v2602, 64
      %v2875 = vpop.permute.xlu0 %2874
      %2879 = vrot.lane.b32.xlu0 %v2264, 96
      %v2880 = vpop.permute.xlu0 %2879
      %2881 = vrot.lane.b32.xlu0 %v2536, 96
      %v2882 = vpop.permute.xlu0 %2881
      %2883 = vrot.lane.b32.xlu0 %v2668, 96
      %v2884 = vpop.permute.xlu0 %2883
      %vm2885 = vcmask 261120
      %v2888 = vsel %vm2885, %v1445, %v2673
      %v2891 = vsel %vm2885, %v1717, %v2675
      %v2894 = vsel %vm2885, %v1899, %v2677
      %vm2895 = vcmask 523264
      %v2897 = vsel %vm2895, %v2888, %v2682
      %v2899 = vsel %vm2895, %v2891, %v2684
      %v2901 = vsel %vm2895, %v2894, %v2686
      %vm2902 = vcmask 785408
      %v2904 = vsel %vm2902, %v2897, %v2691
      %v2907 = vsel %vm2902, %v2899, %v2693
      %v2910 = vsel %vm2902, %v2901, %v2695
      %v2913 = vsel %vm2885, %v1447, %v2700
      %v2916 = vsel %vm2885, %v1719, %v2702
      %v2919 = vsel %vm2885, %v1906, %v2704
      %v2921 = vsel %vm2895, %v2913, %v2709
      %v2923 = vsel %vm2895, %v2916, %v2711
      %v2925 = vsel %vm2895, %v2919, %v2713
      %v2927 = vsel %vm2902, %v2921, %v2718
      %v2930 = vsel %vm2902, %v2923, %v2720
      %v2933 = vsel %vm2902, %v2925, %v2722
      %v2936 = vsel %vm2885, %v1449, %v2727
      %v2939 = vsel %vm2885, %v1721, %v2729
      %v2942 = vsel %vm2885, %v1915, %v2731
      %v2944 = vsel %vm2895, %v2936, %v2736
      %v2946 = vsel %vm2895, %v2939, %v2738
      %v2948 = vsel %vm2895, %v2942, %v2740
      %v2950 = vsel %vm2902, %v2944, %v2745
      %v2953 = vsel %vm2902, %v2946, %v2747
      %v2956 = vsel %vm2902, %v2948, %v2749
      %v2959 = vsel %vm2885, %v1451, %v2754
      %v2962 = vsel %vm2885, %v1723, %v2756
      %v2965 = vsel %vm2885, %v1922, %v2758
      %v2967 = vsel %vm2895, %v2959, %v2763
      %v2969 = vsel %vm2895, %v2962, %v2765
      %v2971 = vsel %vm2895, %v2965, %v2767
      %v2973 = vsel %vm2902, %v2967, %v2772
      %v2976 = vsel %vm2902, %v2969, %v2774
      %v2979 = vsel %vm2902, %v2971, %v2776
      %v2982 = vsel %vm2885, %v2121, %v2781
      %v2985 = vsel %vm2885, %v2393, %v2783
      %v2988 = vsel %vm2885, %v2575, %v2785
      %v2990 = vsel %vm2895, %v2982, %v2790
      %v2992 = vsel %vm2895, %v2985, %v2792
      %v2994 = vsel %vm2895, %v2988, %v2794
      %v2996 = vsel %vm2902, %v2990, %v2799
      %v2999 = vsel %vm2902, %v2992, %v2801
      %v3002 = vsel %vm2902, %v2994, %v2803
      %v3005 = vsel %vm2885, %v2123, %v2808
      %v3008 = vsel %vm2885, %v2395, %v2810
      %v3011 = vsel %vm2885, %v2582, %v2812
      %v3013 = vsel %vm2895, %v3005, %v2817
      %v3015 = vsel %vm2895, %v3008, %v2819
      %v3017 = vsel %vm2895, %v3011, %v2821
      %v3019 = vsel %vm2902, %v3013, %v2826
      %v3022 = vsel %vm2902, %v3015, %v2828
      %v3025 = vsel %vm2902, %v3017, %v2830
      %v3028 = vsel %vm2885, %v2125, %v2835
      %v3031 = vsel %vm2885, %v2397, %v2837
      %v3034 = vsel %vm2885, %v2591, %v2839
      %v3036 = vsel %vm2895, %v3028, %v2844
      %v3038 = vsel %vm2895, %v3031, %v2846
      %v3040 = vsel %vm2895, %v3034, %v2848
      %v3042 = vsel %vm2902, %v3036, %v2853
      %v3045 = vsel %vm2902, %v3038, %v2855
      %v3048 = vsel %vm2902, %v3040, %v2857
      %v3051 = vsel %vm2885, %v2127, %v2862
      %v3054 = vsel %vm2885, %v2399, %v2864
      %v3057 = vsel %vm2885, %v2598, %v2866
      %v3059 = vsel %vm2895, %v3051, %v2871
      %v3061 = vsel %vm2895, %v3054, %v2873
      %v3063 = vsel %vm2895, %v3057, %v2875
      %v3065 = vsel %vm2902, %v3059, %v2880
      %v3068 = vsel %vm2902, %v3061, %v2882
      %v3071 = vsel %vm2902, %v3063, %v2884
      %v3072 = vld [vmem:[%s3] sm:$0xf]
      %v3073 = vld [vmem:[%s4] sm:$0xff]
      %3075 = vset.pattern.permute.xlu0 0
      %3076 = vperm.xlu0 %3075, %v3073
      %v3077 = vpop.permute.xlu0 %3076
      %vm3079 = vcmask 293888
      %v3081 = vsel %vm3079, %v3072, 0
      %vm3083 = vcmask 1041408
      %v3084 = vsel %vm3083, %v2910, 0
      %v3086 = vsel %vm3083, %v2933, 0
      %v3088 = vsel %vm3083, %v2956, 0
      %v3090 = vsel %vm3083, %v2979, 0
      %v3092 = vsel %vm3083, %v3002, 0
      %v3094 = vsel %vm3083, %v3025, 0
      %v3096 = vsel %vm3083, %v3048, 0
      %v3098 = vsel %vm3083, %v3071, 0
      %3100 = vmatprep.subr.bf16.mxu0 %v2927
      %3101 = vmatpush1.bf16.msra.mxu0 %v2904
      %3102 = vmatprep.subr.bf16.mxu0 %v2930
      %3103 = vmatpush1.bf16.msra.mxu0 %v2907
      %3104 = vmatprep.subr.bf16.mxu0 %v3086
      %3105 = vmatpush1.bf16.msra.mxu0 %v3084
      %3106 = vmatprep.subr.bf16.mxu0 0
      %3107 = vmatpush1.bf16.msra.mxu0 0
      %3108 = vmatprep.subr.bf16.mxu0 0
      %3109 = vmatpush1.bf16.msra.mxu0 0
      %3110 = vmatprep.subr.bf16.mxu0 0
      %3111 = vmatpush1.bf16.msra.mxu0 0
      %3112 = vmatprep.subr.bf16.mxu0 0
      %3113 = vmatpush1.bf16.msra.mxu0 0
      %3114 = vmatprep.subr.bf16.mxu0 0
      %3115 = vmatpush1.bf16.msra.mxu0 0
      %3116 = vmatprep.subr.bf16.mxu0 0
      %3117 = vmatpush1.bf16.msra.mxu0 0
      %3118 = vmatprep.subr.bf16.mxu0 0
      %3119 = vmatpush1.bf16.msra.mxu0 0
      %3120 = vmatprep.subr.bf16.mxu0 0
      %3121 = vmatpush1.bf16.msra.mxu0 0
      %3122 = vmatprep.subr.bf16.mxu0 0
      %3123 = vmatpush1.bf16.msra.mxu0 0
      %3124 = vmatprep.subr.bf16.mxu0 0
      %3125 = vmatpush1.bf16.msra.mxu0 0
      %3126 = vmatprep.subr.bf16.mxu0 0
      %3127 = vmatpush1.bf16.msra.mxu0 0
      %3128 = vmatprep.subr.bf16.mxu0 0
      %3129 = vmatpush1.bf16.msra.mxu0 0
      %3130 = vmatprep.subr.bf16.mxu0 0
      %3131 = vmatpush1.bf16.msra.mxu0 0
      %3132 = vmatprep.mubr.bf16.mxu0 0
      %3133 = vmatmul.mubr.bf16.gmra.mrb[0].mxu0 %v3081
      %v3134 = vpop.f32.mrb[0].mxu0
      %v3135 = vadd.f32 %v3077, %v3134
      %v3136 = vpop.f32.mrb[0].mxu0
      %v3137 = vadd.f32 %v3077, %v3136
      %v3138 = vpop.f32.mrb[0].mxu0
      %v3139 = vpop.f32.mrb[0].mxu0
      %3140 = vdwg.mxu0
      %3141 = vmatprep.subr.bf16.mxu0 %v2973
      %3142 = vmatpush1.bf16.msra.mxu0 %v2950
      %3143 = vmatprep.subr.bf16.mxu0 %v2976
      %3144 = vmatpush1.bf16.msra.mxu0 %v2953
      %3145 = vmatprep.subr.bf16.mxu0 %v3090
      %3146 = vmatpush1.bf16.msra.mxu0 %v3088
      %3147 = vmatprep.subr.bf16.mxu0 0
      %3148 = vmatpush1.bf16.msra.mxu0 0
      %3149 = vmatprep.subr.bf16.mxu0 0
      %3150 = vmatpush1.bf16.msra.mxu0 0
      %3151 = vmatprep.subr.bf16.mxu0 0
      %3152 = vmatpush1.bf16.msra.mxu0 0
      %3153 = vmatprep.subr.bf16.mxu0 0
      %3154 = vmatpush1.bf16.msra.mxu0 0
      %3155 = vmatprep.subr.bf16.mxu0 0
      %3156 = vmatpush1.bf16.msra.mxu0 0
      %3157 = vmatprep.subr.bf16.mxu0 0
      %3158 = vmatpush1.bf16.msra.mxu0 0
      %3159 = vmatprep.subr.bf16.mxu0 0
      %3160 = vmatpush1.bf16.msra.mxu0 0
      %3161 = vmatprep.subr.bf16.mxu0 0
      %3162 = vmatpush1.bf16.msra.mxu0 0
      %3163 = vmatprep.subr.bf16.mxu0 0
      %3164 = vmatpush1.bf16.msra.mxu0 0
      %3165 = vmatprep.subr.bf16.mxu0 0
      %3166 = vmatpush1.bf16.msra.mxu0 0
      %3167 = vmatprep.subr.bf16.mxu0 0
      %3168 = vmatpush1.bf16.msra.mxu0 0
      %3169 = vmatprep.subr.bf16.mxu0 0
      %3170 = vmatpush1.bf16.msra.mxu0 0
      %3171 = vmatprep.subr.bf16.mxu0 0
      %3172 = vmatpush1.bf16.msra.mxu0 0
      %3173 = vmatprep.mubr.bf16.mxu0 0
      %3174 = vmatmul.mubr.bf16.gmra.mrb[0].mxu0 %v3081
      %v3175 = vpop.f32.mrb[0].mxu0
      %v3176 = vadd.f32 %v3077, %v3175
      %v3177 = vpop.f32.mrb[0].mxu0
      %v3178 = vadd.f32 %v3077, %v3177
      %v3179 = vpop.f32.mrb[0].mxu0
      %v3180 = vpop.f32.mrb[0].mxu0
      %3181 = vdwg.mxu0
      %3182 = vmatprep.subr.bf16.mxu0 %v3019
      %3183 = vmatpush1.bf16.msra.mxu0 %v2996
      %3184 = vmatprep.subr.bf16.mxu0 %v3022
      %3185 = vmatpush1.bf16.msra.mxu0 %v2999
      %3186 = vmatprep.subr.bf16.mxu0 %v3094
      %3187 = vmatpush1.bf16.msra.mxu0 %v3092
      %3188 = vmatprep.subr.bf16.mxu0 0
      %3189 = vmatpush1.bf16.msra.mxu0 0
      %3190 = vmatprep.subr.bf16.mxu0 0
      %3191 = vmatpush1.bf16.msra.mxu0 0
      %3192 = vmatprep.subr.bf16.mxu0 0
      %3193 = vmatpush1.bf16.msra.mxu0 0
      %3194 = vmatprep.subr.bf16.mxu0 0
      %3195 = vmatpush1.bf16.msra.mxu0 0
      %3196 = vmatprep.subr.bf16.mxu0 0
      %3197 = vmatpush1.bf16.msra.mxu0 0
      %3198 = vmatprep.subr.bf16.mxu0 0
      %3199 = vmatpush1.bf16.msra.mxu0 0
      %3200 = vmatprep.subr.bf16.mxu0 0
      %3201 = vmatpush1.bf16.msra.mxu0 0
      %3202 = vmatprep.subr.bf16.mxu0 0
      %3203 = vmatpush1.bf16.msra.mxu0 0
      %3204 = vmatprep.subr.bf16.mxu0 0
      %3205 = vmatpush1.bf16.msra.mxu0 0
      %3206 = vmatprep.subr.bf16.mxu0 0
      %3207 = vmatpush1.bf16.msra.mxu0 0
      %3208 = vmatprep.subr.bf16.mxu0 0
      %3209 = vmatpush1.bf16.msra.mxu0 0
      %3210 = vmatprep.subr.bf16.mxu0 0
      %3211 = vmatpush1.bf16.msra.mxu0 0
      %3212 = vmatprep.subr.bf16.mxu0 0
      %3213 = vmatpush1.bf16.msra.mxu0 0
      %3214 = vmatprep.mubr.bf16.mxu0 0
      %3215 = vmatmul.mubr.bf16.gmra.mrb[0].mxu0 %v3081
      %v3216 = vpop.f32.mrb[0].mxu0
      %v3217 = vadd.f32 %v3077, %v3216
      %v3218 = vpop.f32.mrb[0].mxu0
      %v3219 = vadd.f32 %v3077, %v3218
      %v3220 = vpop.f32.mrb[0].mxu0
      %v3221 = vpop.f32.mrb[0].mxu0
      %3222 = vdwg.mxu0
      %3223 = vmatprep.subr.bf16.mxu0 %v3065
      %3224 = vmatpush1.bf16.msra.mxu0 %v3042
      %3225 = vmatprep.subr.bf16.mxu0 %v3068
      %3226 = vmatpush1.bf16.msra.mxu0 %v3045
      %3227 = vmatprep.subr.bf16.mxu0 %v3098
      %3228 = vmatpush1.bf16.msra.mxu0 %v3096
      %3229 = vmatprep.subr.bf16.mxu0 0
      %3230 = vmatpush1.bf16.msra.mxu0 0
      %3231 = vmatprep.subr.bf16.mxu0 0
      %3232 = vmatpush1.bf16.msra.mxu0 0
      %3233 = vmatprep.subr.bf16.mxu0 0
      %3234 = vmatpush1.bf16.msra.mxu0 0
      %3235 = vmatprep.subr.bf16.mxu0 0
      %3236 = vmatpush1.bf16.msra.mxu0 0
      %3237 = vmatprep.subr.bf16.mxu0 0
      %3238 = vmatpush1.bf16.msra.mxu0 0
      %3239 = vmatprep.subr.bf16.mxu0 0
      %3240 = vmatpush1.bf16.msra.mxu0 0
      %3241 = vmatprep.subr.bf16.mxu0 0
      %3242 = vmatpush1.bf16.msra.mxu0 0
      %3243 = vmatprep.subr.bf16.mxu0 0
      %3244 = vmatpush1.bf16.msra.mxu0 0
      %3245 = vmatprep.subr.bf16.mxu0 0
      %3246 = vmatpush1.bf16.msra.mxu0 0
      %3247 = vmatprep.subr.bf16.mxu0 0
      %3248 = vmatpush1.bf16.msra.mxu0 0
      %3249 = vmatprep.subr.bf16.mxu0 0
      %3250 = vmatpush1.bf16.msra.mxu0 0
      %3251 = vmatprep.subr.bf16.mxu0 0
      %3252 = vmatpush1.bf16.msra.mxu0 0
      %3253 = vmatprep.subr.bf16.mxu0 0
      %3254 = vmatpush1.bf16.msra.mxu0 0
      %3255 = vmatprep.mubr.bf16.mxu0 0
      %3256 = vmatmul.mubr.bf16.gmra.mrb[0].mxu0 %v3081
      %v3257 = vpop.f32.mrb[0].mxu0
      %v3258 = vadd.f32 %v3077, %v3257
      %v3259 = vpop.f32.mrb[0].mxu0
      %v3260 = vadd.f32 %v3077, %v3259
      %v3261 = vpop.f32.mrb[0].mxu0
      %v3262 = vpop.f32.mrb[0].mxu0
      %3263 = vdwg.mxu0
      %v3264 = vpack.c.bf16 %v3135, %v3135
      %v3265 = vpack.c.bf16 %v3137, %v3137
      %v3266 = vpack.c.bf16 %v3176, %v3176
      %v3267 = vpack.c.bf16 %v3178, %v3178
      %v3268 = vpack.c.bf16 %v3217, %v3217
      %v3269 = vpack.c.bf16 %v3219, %v3219
      %v3270 = vpack.c.bf16 %v3258, %v3258
      %v3271 = vpack.c.bf16 %v3260, %v3260
      %v3280 = vunpack.c.l.b16 %v3264
      %v3281 = vunpack.c.l.b16 %v3265
      %v3282 = vunpack.c.l.b16 %v3266
      %v3283 = vunpack.c.l.b16 %v3267
      %v3284 = vunpack.c.l.b16 %v3268
      %v3285 = vunpack.c.l.b16 %v3269
      %v3286 = vunpack.c.l.b16 %v3270
      %v3287 = vunpack.c.l.b16 %v3271
      %v3288 = vpack.c.b16 %v3281, %v3280
      %v3289 = vpack.c.b16 %v3283, %v3282
      %v3290 = vpack.c.b16 %v3285, %v3284
      %v3291 = vpack.c.b16 %v3287, %v3286
      %3296 = vst [vmem:[%s285] sm:$0xff] %v3288
      %3297 = vst [vmem:[%s285 + $0x8] sm:$0xff] %v3289
      %3298 = vst [vmem:[%s285 + $0x10] sm:$0xff] %v3290
      %3299 = vst [vmem:[%s285 + $0x18] sm:$0xff] %v3291
      %v3300 = vadd.f32 %v3135, %v3137
      %v3301 = vadd.f32 %v3300, %v3176
      %v3302 = vadd.f32 %v3301, %v3178
      %v3303 = vadd.f32 %v3302, %v3217
      %v3304 = vadd.f32 %v3303, %v3219
      %v3305 = vadd.f32 %v3304, %v3258
      %v3306 = vadd.f32 %v3305, %v3260
      %3307 = vadd.xlane.f32.xlu0 %v3306
      %v3308 = vpop.xlane.xlu0 %3307
      %v3309 = vmul.f32 %v3135, %v3135
      %v3310 = vmul.f32 %v3137, %v3137
      %v3311 = vmul.f32 %v3176, %v3176
      %v3312 = vmul.f32 %v3178, %v3178
      %v3313 = vmul.f32 %v3217, %v3217
      %v3314 = vmul.f32 %v3219, %v3219
      %v3315 = vmul.f32 %v3258, %v3258
      %v3316 = vmul.f32 %v3260, %v3260
      %v3317 = vadd.f32 %v3309, %v3310
      %v3318 = vadd.f32 %v3317, %v3311
      %v3319 = vadd.f32 %v3318, %v3312
      %v3320 = vadd.f32 %v3319, %v3313
      %v3321 = vadd.f32 %v3320, %v3314
      %v3322 = vadd.f32 %v3321, %v3315
      %v3323 = vadd.f32 %v3322, %v3316
      %3324 = vadd.xlane.f32.xlu0 %v3323
      %v3325 = vpop.xlane.xlu0 %3324
      %vm3326 = vcmask 7168
      %v3327 = vsel %vm3326, %v3308, %v3325
      %vm3328 = vcmask 15360
      %3329 = vst.msk [vmem:[%s293] sm:$0xff] %vm3328, %v3327
      %s3330 = smul.u32 8, %s23
      %p3331 = scmp.lt.s32.totalorder %s22, 1
      %s3332 = scalar_select %p3331, %s22, 1
      %p3333 = scmp.lt.s32.totalorder %s3330, 7
      %s3334 = scalar_select %p3333, %s3330, 7
      %s3335 = smul.addr %s3332, 8
      %s3336 = sadd.s32 %s3334, %s3335
      %s3337 = smul.addr %s3336, 4
      %s3338 = scalar_lea.vmem %s5, %s3337
      %p3339 = scmp.lt.s32.totalorder %s22, 1
      %s3340 = scalar_select %p3339, %s22, 1
      %p3341 = scmp.lt.s32.totalorder %s23, 0
      %s3342 = scalar_select %p3341, %s23, 0
      %s3343 = sadd.s32 %s3342, %s3340
      %s3344 = smul.addr %s3343, 8
      %s3345 = scalar_lea.vmem %s6, %s3344
      // Predicated region
      $region41: #{upsamping_forward.2} parent=39 // pred_check
        %p3346 = pneg %p160
      $region42: #{upsamping_forward.2} parent=39 // pred_check_branch
        %3348 = sbr.rel (%p3346) target = $region44
      $region43: #{upsamping_forward.2} parent=39 // pred_region
        %s3349 = smul.u32 8, %s23
      $region44: #{upsamping_forward.2} parent=39 // pred_fallthru
        _
      // Predicated region
      $region45: #{upsamping_forward.2} parent=39 // pred_check
        %p3350 = pneg %p188
      $region46: #{upsamping_forward.2} parent=39 // pred_check_branch
        %3352 = sbr.rel (%p3350) target = $region48
      $region47: #{upsamping_forward.2} parent=39 // pred_region
        _
      $region48: #{upsamping_forward.2} parent=39 // pred_fallthru
        _
    $region40: #{upsamping_forward.2} parent=5 // pred_fallthru
      _
    %p3353 = scmp.le.s32.totalorder 2, %s13
    // Predicated region
    $region49: #{upsamping_forward.2} parent=5 // pred_check
      %p3354 = pneg %p3353
    $region50: #{upsamping_forward.2} parent=5 // pred_check_branch
      %3356 = sbr.rel (%p3354) target = $region52
    $region51: #{upsamping_forward.2} parent=5 // pred_region
      %s3357 = ssub.s32 %s13, 2
      // Predicated region
      $region53: #{upsamping_forward.2} parent=51 // pred_check
        %p3358 = pneg %p166
      $region54: #{upsamping_forward.2} parent=51 // pred_check_branch
        %3360 = sbr.rel (%p3358) target = $region56
      $region55: #{upsamping_forward.2} parent=51 // pred_region
        %s3361 = smul.u32 8, %s25
        %p3362 = scmp.lt.s32.totalorder %s24, 1
        %s3363 = scalar_select %p3362, %s24, 1
        %p3364 = scmp.lt.s32.totalorder %s3361, 7
        %s3365 = scalar_select %p3364, %s3361, 7
        %s3366 = smul.addr %s3363, 8
        %s3367 = sadd.s32 %s3365, %s3366
        %s3368 = smul.addr %s3367, 4
        %s3369 = scalar_lea.vmem %s5, %s3368
      $region56: #{upsamping_forward.2} parent=51 // pred_fallthru
        _
      // Predicated region
      $region57: #{upsamping_forward.2} parent=51 // pred_check
        %p3370 = pneg %p194
      $region58: #{upsamping_forward.2} parent=51 // pred_check_branch
        %3372 = sbr.rel (%p3370) target = $region60
      $region59: #{upsamping_forward.2} parent=51 // pred_region
        %p3373 = scmp.lt.s32.totalorder %s24, 1
        %s3374 = scalar_select %p3373, %s24, 1
        %p3375 = scmp.lt.s32.totalorder %s25, 0
        %s3376 = scalar_select %p3375, %s25, 0
        %s3377 = sadd.s32 %s3376, %s3374
        %s3378 = smul.addr %s3377, 8
        %s3379 = scalar_lea.vmem %s6, %s3378
      $region60: #{upsamping_forward.2} parent=51 // pred_fallthru
        _
    $region52: #{upsamping_forward.2} parent=5 // pred_fallthru
      _
  $region6: #{upsamping_forward.2} parent=0 // loop_footer
    %s17 = sadd.s32 1, %s13
  $region7: #{upsamping_forward.2} parent=0 // loop_footer_branch
    %12 = sbr.rel target = $region3
  $region8: #{upsamping_forward.2} parent=0 // loop_exit
    _

</llo_original>
